<compile_context>
chip_gen: v5e
topology: v5e:2x2
jax: 0.10.0
libtpu: 0.0.40
codegen_flags: <defaults>
</compile_context>

<pallas_src>
import functools
import numpy as np
import jax
import jax.numpy as jnp
from jax.experimental import pallas as pl
from jax.experimental.pallas import tpu as pltpu

LANE = 128
EPS = 1e-5          # PyTorch BatchNorm2d default
NEG_SLOPE = 0.01    # PyTorch LeakyReLU default


def _round_up(n, m):
    return ((n + m - 1) // m) * m


# ----------------------------------------------------------------------------
# Pallas kernel 1: Conv2d(k=3, pad=1), channels-last, 9-tap in-kernel accumulation
# ----------------------------------------------------------------------------
def _conv3x3_kernel(x_ref, w_ref, b_ref, o_ref, *, H, W):
    # x_ref : (1, 3*(H+2)*W, Cp) f32   kx-pre-shifted, spatially padded image, row-flattened
    # w_ref : (9, Cp, Cp)        bf16  tap (ky,kx) -> w_ref[ky*3+kx], laid out (cin, cout)
    # b_ref : (1, Cp)            f32   bias (zeros when the conv has no bias)
    # o_ref : (1, H*W, Cp)       f32
    HW = H * W
    Cp = o_ref.shape[-1]
    acc = jnp.zeros((HW, Cp), jnp.float32)
    for ky in range(3):
        for kx in range(3):
            # contiguous, sublane-aligned slab: rows [off, off+HW) are exactly the
            # (y+ky, x+kx) input pixels in output row-major order.
            off = (kx * (H + 2) + ky) * W
            a = x_ref[0, off:off + HW, :].astype(jnp.bfloat16)
            acc = acc + jnp.dot(a, w_ref[ky * 3 + kx],
                                preferred_element_type=jnp.float32)
    o_ref[0] = acc + b_ref[...]


def conv3x3_rows(x_rows, w9, bias_row, H, W):
    """x_rows: (B, H*W, Cp) channels-last.  Returns raw conv output (B, H*W, Cp), f32."""
    B, HW, Cp = x_rows.shape
    xi = x_rows.reshape(B, H, W, Cp)
    xp = jnp.pad(xi, ((0, 0), (1, 1), (1, 1), (0, 0)))            # spatial halo (zero pad)
    # TODO(synk): the kx pre-shift below is the only remaining XLA-side expansion (3x, not 9x);
    # moving it in-kernel needs unaligned sublane slices / halo DMA.
    xs = jnp.concatenate([xp[:, :, kx:kx + W, :] for kx in range(3)], axis=1)
    L = 3 * (H + 2) * W
    xs = xs.reshape(B, L, Cp)

    kern = functools.partial(_conv3x3_kernel, H=H, W=W)
    return pl.pallas_call(
        kern,
        grid=(B,),
        in_specs=[pl.BlockSpec((1, L, Cp), lambda b: (b, 0, 0)),
                  pl.BlockSpec((9, Cp, Cp), lambda b: (0, 0, 0)),
                  pl.BlockSpec((1, Cp), lambda b: (0, 0))],
        out_specs=pl.BlockSpec((1, HW, Cp), lambda b: (b, 0, 0)),
        out_shape=jax.ShapeDtypeStruct((B, HW, Cp), jnp.float32),
        compiler_params=pltpu.CompilerParams(
            dimension_semantics=("parallel",),
            vmem_limit_bytes=32 * 1024 * 1024),
    )(xs, w9, bias_row)


# ----------------------------------------------------------------------------
# Bicubic-antialias resize matrices (replicates torch _upsample_bicubic2d_aa)
# ----------------------------------------------------------------------------
@functools.lru_cache(maxsize=None)
def _resize_matrix_np(in_size, out_size):
    A = -0.5  # Keys cubic, PyTorch default

    def cubic(t):
        t = abs(t)
        if t < 1.0:
            return ((A + 2.0) * t - (A + 3.0)) * t * t + 1.0
        if t < 2.0:
            return (((t - 5.0) * t + 8.0) * t - 4.0) * A
        return 0.0

    scale = in_size / out_size
    support = 2.0 * scale if scale >= 1.0 else 2.0
    invscale = (1.0 / scale) if scale >= 1.0 else 1.0
    M = np.zeros((out_size, in_size), dtype=np.float64)
    for i in range(out_size):
        center = scale * (i + 0.5)
        xmin = max(int(center - support + 0.5), 0)
        xmax = min(int(center + support + 0.5), in_size)
        w = np.array([cubic((j + xmin - center + 0.5) * invscale)
                      for j in range(xmax - xmin)], dtype=np.float64)
        tw = w.sum()
        if tw != 0.0:
            w = w / tw
        M[i, xmin:xmax] = w
    return M.astype(np.float32)


@functools.lru_cache(maxsize=None)
def _kron_resize_np(h_in, h_out, w_in, w_out):
    # vec_rowmajor(Uh @ X @ Uw^T) = (Uh kron Uw) @ vec_rowmajor(X)  -> one 2D matmul per image,
    # channels stay on the lane axis.
    return np.kron(_resize_matrix_np(h_in, h_out),
                   _resize_matrix_np(w_in, w_out)).astype(np.float32)


# ----------------------------------------------------------------------------
# Pallas kernel 2: fused [BatchNorm affine] -> bicubic-AA up x2 -> LeakyReLU -> bicubic-AA down
# ----------------------------------------------------------------------------
def _cno_act_kernel(y_ref, sc_ref, sh_ref, up_ref, dn_ref, o_ref):
    # y_ref : (1, H*W, Cp) raw conv output;  sc/sh: (1, Cp) per-channel scale/shift
    # up_ref: (4*H*W, H*W) Kronecker up-resize;  dn_ref: (Ho*Wo, 4*H*W) down-resize
    x = y_ref[0] * sc_ref[...] + sh_ref[...]                         # fused BN (or identity)
    u = jnp.dot(up_ref[...], x, preferred_element_type=jnp.float32)  # (4HW, Cp)
    u = jnp.where(u >= 0.0, u, NEG_SLOPE * u)                        # LeakyReLU
    o_ref[0] = jnp.dot(dn_ref[...], u, preferred_element_type=jnp.float32)


def cno_lrelu_rows(y_rows, scale, shift, in_size, out_size):
    B, HW, Cp = y_rows.shape
    H, W = in_size
    Ho, Wo = out_size
    M_up = jnp.asarray(_kron_resize_np(H, 2 * H, W, 2 * W))          # (4HW, HW)
    M_dn = jnp.asarray(_kron_resize_np(2 * H, Ho, 2 * W, Wo))        # (Ho*Wo, 4HW)
    return pl.pallas_call(
        _cno_act_kernel,
        grid=(B,),
        in_specs=[pl.BlockSpec((1, HW, Cp), lambda b: (b, 0, 0)),
                  pl.BlockSpec((1, Cp), lambda b: (0, 0)),
                  pl.BlockSpec((1, Cp), lambda b: (0, 0)),
                  pl.BlockSpec((4 * HW, HW), lambda b: (0, 0)),
                  pl.BlockSpec((Ho * Wo, 4 * HW), lambda b: (0, 0))],
        out_specs=pl.BlockSpec((1, Ho * Wo, Cp), lambda b: (b, 0, 0)),
        out_shape=jax.ShapeDtypeStruct((B, Ho * Wo, Cp), jnp.float32),
        compiler_params=pltpu.CompilerParams(
            dimension_semantics=("parallel",),
            vmem_limit_bytes=32 * 1024 * 1024),
    )(y_rows, scale.reshape(1, Cp), shift.reshape(1, Cp), M_up, M_dn)


# ----------------------------------------------------------------------------
# Plain-JAX glue: train-mode BatchNorm statistics folded into per-channel scale/shift
# ----------------------------------------------------------------------------
def _bn_affine(rows, use_bn):
    # TODO(synk): train-mode BatchNorm batch statistics are a whole-tensor reduction over
    # (batch, H, W); computed in plain JAX between kernels and fused as scale/shift afterwards.
    Cp = rows.shape[-1]
    if not use_bn:
        return jnp.ones((Cp,), jnp.float32), jnp.zeros((Cp,), jnp.float32)
    mean = jnp.mean(rows, axis=(0, 1))
    var = jnp.var(rows, axis=(0, 1))        # biased variance, as PyTorch uses for normalization
    scale = jax.lax.rsqrt(var + EPS)
    return scale, -mean * scale


# ----------------------------------------------------------------------------
# ResidualBlock / ResNet forward (problem_dim = 2)
# ----------------------------------------------------------------------------
def residual_block(x_rows, p, H, W, use_bn):
    raw1 = conv3x3_rows(x_rows, p['w1'], p['b1'], H, W)          # conv1 (+bias if no BN)
    scale1, shift1 = _bn_affine(raw1, use_bn)                    # bn1 stats
    act = cno_lrelu_rows(raw1, scale1, shift1, (H, W), (H, W))   # bn1 + CNO_LReLu, fused
    raw2 = conv3x3_rows(act, p['w2'], p['b2'], H, W)             # conv2 (+bias if no BN)
    if use_bn:
        scale2, shift2 = _bn_affine(raw2, True)                  # bn2 stats
        out = raw2 * scale2 + shift2                             # bn2 (one fused XLA pass)
    else:
        out = raw2
    return x_rows + out                                          # residual


def resnet_forward(params, x, *, H, W, Cp, use_bn):
    B, C = x.shape[0], x.shape[1]
    xr = jnp.transpose(x, (0, 2, 3, 1))                          # NCHW -> NHWC (once)
    xr = jnp.pad(xr, ((0, 0), (0, 0), (0, 0), (0, Cp - C)))      # lane-dense channel pad
    xr = xr.reshape(B, H * W, Cp)
    for p in params:
        xr = residual_block(xr, p, H, W, use_bn)
    y = xr.reshape(B, H, W, Cp)[..., :C]
    return jnp.transpose(y, (0, 3, 1, 2))                        # back to NCHW (once)


# ----------------------------------------------------------------------------
# Deterministic parameter construction (mirrors torch.nn.Conv2d default init)
# ----------------------------------------------------------------------------
def pack_conv_weight(w, Cp):
    """(Cout, Cin, 3, 3) torch layout -> (9, Cp, Cp) bf16 with tap k=ky*3+kx, (cin, cout)."""
    Cout, Cin = w.shape[0], w.shape[1]
    wt = jnp.transpose(w, (2, 3, 1, 0)).reshape(9, Cin, Cout)
    w9 = jnp.zeros((9, Cp, Cp), jnp.float32).at[:, :Cin, :Cout].set(wt)
    return w9.astype(jnp.bfloat16)


def pad_bias(b, Cp):
    return jnp.zeros((1, Cp), jnp.float32).at[0, :b.shape[0]].set(b)


def build_params(key, channels, num_blocks, use_bn, Cp):
    params = []
    bound = 1.0 / np.sqrt(channels * 9)
    for _ in range(num_blocks):
        key, k1, k2, k3, k4 = jax.random.split(key, 5)
        w1 = jax.random.uniform(k1, (channels, channels, 3, 3), jnp.float32, -bound, bound)
        w2 = jax.random.uniform(k2, (channels, channels, 3, 3), jnp.float32, -bound, bound)
        if use_bn:
            b1 = jnp.zeros((channels,), jnp.float32)
            b2 = jnp.zeros((channels,), jnp.float32)
        else:
            b1 = jax.random.uniform(k3, (channels,), jnp.float32, -bound, bound)
            b2 = jax.random.uniform(k4, (channels,), jnp.float32, -bound, bound)
        params.append({'w1': pack_conv_weight(w1, Cp), 'b1': pad_bias(b1, Cp),
                       'w2': pack_conv_weight(w2, Cp), 'b2': pad_bias(b2, Cp)})
    return params


# ----------------------------------------------------------------------------
if __name__ == "__main__":
    key = jax.random.PRNGKey(0)
    B, C, H, W = 2, 32, 16, 16      # batch, channels, spatial size (ResNet: out_size == in_size)
    num_blocks, use_bn = 2, True
    Cp = _round_up(max(C, LANE), LANE)

    pkey, xkey = jax.random.split(key)
    params = build_params(pkey, C, num_blocks, use_bn, Cp)
    x = jax.random.normal(xkey, (B, C, H, W), jnp.float32)

    fwd = jax.jit(functools.partial(resnet_forward, H=H, W=W, Cp=Cp, use_bn=use_bn))
    y = fwd(params, x)
    jax.block_until_ready(y)

    assert y.shape == (B, C, H, W)
    assert bool(jnp.all(jnp.isfinite(y)))
    print("KERNEL_OK")
</pallas_src>

<mosaic_0001>
module attributes {stable_mosaic.version = 11 : i64} {
  func.func @_conv3x3_kernel(%arg0: i32, %arg1: memref<1x864x128xf32, #tpu.memory_space<vmem>>, %arg2: memref<9x128x128xbf16, #tpu.memory_space<vmem>>, %arg3: memref<1x128xf32, #tpu.memory_space<vmem>>, %arg4: memref<1x256x128xf32, #tpu.memory_space<vmem>>) attributes {dimension_semantics = [#tpu.dimension_semantics<parallel>], iteration_bounds = array<i64: 2>, scalar_prefetch = 0 : i64, scratch_operands = 0 : i64, tpu.core_type = #tpu.core_type<tc>, window_params = [{transform_indices = @transform_0, window_bounds = array<i64: 1, 864, 128>}, {pipeline_mode = #tpu.pipeline_mode<synchronous>, transform_indices = @transform_1, window_bounds = array<i64: 9, 128, 128>}, {pipeline_mode = #tpu.pipeline_mode<synchronous>, transform_indices = @transform_2, window_bounds = array<i64: 1, 128>}, {transform_indices = @transform_3, window_bounds = array<i64: 1, 256, 128>}]} {
    %cst = arith.constant 0.000000e+00 : f32
    %0 = vector.broadcast %cst : f32 to vector<256x128xf32>
    %c0 = arith.constant 0 : index
    %c0_0 = arith.constant 0 : index
    %c0_1 = arith.constant 0 : index
    %1 = vector.load %arg1[%c0, %c0_0, %c0_1] : memref<1x864x128xf32, #tpu.memory_space<vmem>>, vector<1x256x128xf32>
    %2 = vector.shape_cast %1 : vector<1x256x128xf32> to vector<256x128xf32>
    %3 = arith.truncf %2 : vector<256x128xf32> to vector<256x128xbf16>
    %c0_2 = arith.constant 0 : index
    %c0_3 = arith.constant 0 : index
    %c0_4 = arith.constant 0 : index
    %4 = vector.load %arg2[%c0_2, %c0_3, %c0_4] : memref<9x128x128xbf16, #tpu.memory_space<vmem>>, vector<1x128x128xbf16>
    %5 = vector.shape_cast %4 : vector<1x128x128xbf16> to vector<128x128xbf16>
    %cst_5 = arith.constant dense<0.000000e+00> : vector<256x128xf32>
    %6 = tpu.matmul %3, %5, %cst_5 {dimension_numbers = #tpu.dot_dimension_numbers<[1], [0], [0], [1], [0, 0, 1, 1], [], []>} : vector<256x128xbf16>, vector<128x128xbf16>, vector<256x128xf32> -> vector<256x128xf32>
    %7 = arith.addf %0, %6 : vector<256x128xf32>
    %c0_6 = arith.constant 0 : index
    %c288 = arith.constant 288 : index
    %c0_7 = arith.constant 0 : index
    %8 = vector.load %arg1[%c0_6, %c288, %c0_7] : memref<1x864x128xf32, #tpu.memory_space<vmem>>, vector<1x256x128xf32>
    %9 = vector.shape_cast %8 : vector<1x256x128xf32> to vector<256x128xf32>
    %10 = arith.truncf %9 : vector<256x128xf32> to vector<256x128xbf16>
    %c1 = arith.constant 1 : index
    %c0_8 = arith.constant 0 : index
    %c0_9 = arith.constant 0 : index
    %11 = vector.load %arg2[%c1, %c0_8, %c0_9] : memref<9x128x128xbf16, #tpu.memory_space<vmem>>, vector<1x128x128xbf16>
    %12 = vector.shape_cast %11 : vector<1x128x128xbf16> to vector<128x128xbf16>
    %cst_10 = arith.constant dense<0.000000e+00> : vector<256x128xf32>
    %13 = tpu.matmul %10, %12, %cst_10 {dimension_numbers = #tpu.dot_dimension_numbers<[1], [0], [0], [1], [0, 0, 1, 1], [], []>} : vector<256x128xbf16>, vector<128x128xbf16>, vector<256x128xf32> -> vector<256x128xf32>
    %14 = arith.addf %7, %13 : vector<256x128xf32>
    %c0_11 = arith.constant 0 : index
    %c576 = arith.constant 576 : index
    %c0_12 = arith.constant 0 : index
    %15 = vector.load %arg1[%c0_11, %c576, %c0_12] : memref<1x864x128xf32, #tpu.memory_space<vmem>>, vector<1x256x128xf32>
    %16 = vector.shape_cast %15 : vector<1x256x128xf32> to vector<256x128xf32>
    %17 = arith.truncf %16 : vector<256x128xf32> to vector<256x128xbf16>
    %c2 = arith.constant 2 : index
    %c0_13 = arith.constant 0 : index
    %c0_14 = arith.constant 0 : index
    %18 = vector.load %arg2[%c2, %c0_13, %c0_14] : memref<9x128x128xbf16, #tpu.memory_space<vmem>>, vector<1x128x128xbf16>
    %19 = vector.shape_cast %18 : vector<1x128x128xbf16> to vector<128x128xbf16>
    %cst_15 = arith.constant dense<0.000000e+00> : vector<256x128xf32>
    %20 = tpu.matmul %17, %19, %cst_15 {dimension_numbers = #tpu.dot_dimension_numbers<[1], [0], [0], [1], [0, 0, 1, 1], [], []>} : vector<256x128xbf16>, vector<128x128xbf16>, vector<256x128xf32> -> vector<256x128xf32>
    %21 = arith.addf %14, %20 : vector<256x128xf32>
    %c0_16 = arith.constant 0 : index
    %c16 = arith.constant 16 : index
    %c0_17 = arith.constant 0 : index
    %22 = vector.load %arg1[%c0_16, %c16, %c0_17] : memref<1x864x128xf32, #tpu.memory_space<vmem>>, vector<1x256x128xf32>
    %23 = vector.shape_cast %22 : vector<1x256x128xf32> to vector<256x128xf32>
    %24 = arith.truncf %23 : vector<256x128xf32> to vector<256x128xbf16>
    %c3 = arith.constant 3 : index
    %c0_18 = arith.constant 0 : index
    %c0_19 = arith.constant 0 : index
    %25 = vector.load %arg2[%c3, %c0_18, %c0_19] : memref<9x128x128xbf16, #tpu.memory_space<vmem>>, vector<1x128x128xbf16>
    %26 = vector.shape_cast %25 : vector<1x128x128xbf16> to vector<128x128xbf16>
    %cst_20 = arith.constant dense<0.000000e+00> : vector<256x128xf32>
    %27 = tpu.matmul %24, %26, %cst_20 {dimension_numbers = #tpu.dot_dimension_numbers<[1], [0], [0], [1], [0, 0, 1, 1], [], []>} : vector<256x128xbf16>, vector<128x128xbf16>, vector<256x128xf32> -> vector<256x128xf32>
    %28 = arith.addf %21, %27 : vector<256x128xf32>
    %c0_21 = arith.constant 0 : index
    %c304 = arith.constant 304 : index
    %c0_22 = arith.constant 0 : index
    %29 = vector.load %arg1[%c0_21, %c304, %c0_22] : memref<1x864x128xf32, #tpu.memory_space<vmem>>, vector<1x256x128xf32>
    %30 = vector.shape_cast %29 : vector<1x256x128xf32> to vector<256x128xf32>
    %31 = arith.truncf %30 : vector<256x128xf32> to vector<256x128xbf16>
    %c4 = arith.constant 4 : index
    %c0_23 = arith.constant 0 : index
    %c0_24 = arith.constant 0 : index
    %32 = vector.load %arg2[%c4, %c0_23, %c0_24] : memref<9x128x128xbf16, #tpu.memory_space<vmem>>, vector<1x128x128xbf16>
    %33 = vector.shape_cast %32 : vector<1x128x128xbf16> to vector<128x128xbf16>
    %cst_25 = arith.constant dense<0.000000e+00> : vector<256x128xf32>
    %34 = tpu.matmul %31, %33, %cst_25 {dimension_numbers = #tpu.dot_dimension_numbers<[1], [0], [0], [1], [0, 0, 1, 1], [], []>} : vector<256x128xbf16>, vector<128x128xbf16>, vector<256x128xf32> -> vector<256x128xf32>
    %35 = arith.addf %28, %34 : vector<256x128xf32>
    %c0_26 = arith.constant 0 : index
    %c592 = arith.constant 592 : index
    %c0_27 = arith.constant 0 : index
    %36 = vector.load %arg1[%c0_26, %c592, %c0_27] : memref<1x864x128xf32, #tpu.memory_space<vmem>>, vector<1x256x128xf32>
    %37 = vector.shape_cast %36 : vector<1x256x128xf32> to vector<256x128xf32>
    %38 = arith.truncf %37 : vector<256x128xf32> to vector<256x128xbf16>
    %c5 = arith.constant 5 : index
    %c0_28 = arith.constant 0 : index
    %c0_29 = arith.constant 0 : index
    %39 = vector.load %arg2[%c5, %c0_28, %c0_29] : memref<9x128x128xbf16, #tpu.memory_space<vmem>>, vector<1x128x128xbf16>
    %40 = vector.shape_cast %39 : vector<1x128x128xbf16> to vector<128x128xbf16>
    %cst_30 = arith.constant dense<0.000000e+00> : vector<256x128xf32>
    %41 = tpu.matmul %38, %40, %cst_30 {dimension_numbers = #tpu.dot_dimension_numbers<[1], [0], [0], [1], [0, 0, 1, 1], [], []>} : vector<256x128xbf16>, vector<128x128xbf16>, vector<256x128xf32> -> vector<256x128xf32>
    %42 = arith.addf %35, %41 : vector<256x128xf32>
    %c0_31 = arith.constant 0 : index
    %c32 = arith.constant 32 : index
    %c0_32 = arith.constant 0 : index
    %43 = vector.load %arg1[%c0_31, %c32, %c0_32] : memref<1x864x128xf32, #tpu.memory_space<vmem>>, vector<1x256x128xf32>
    %44 = vector.shape_cast %43 : vector<1x256x128xf32> to vector<256x128xf32>
    %45 = arith.truncf %44 : vector<256x128xf32> to vector<256x128xbf16>
    %c6 = arith.constant 6 : index
    %c0_33 = arith.constant 0 : index
    %c0_34 = arith.constant 0 : index
    %46 = vector.load %arg2[%c6, %c0_33, %c0_34] : memref<9x128x128xbf16, #tpu.memory_space<vmem>>, vector<1x128x128xbf16>
    %47 = vector.shape_cast %46 : vector<1x128x128xbf16> to vector<128x128xbf16>
    %cst_35 = arith.constant dense<0.000000e+00> : vector<256x128xf32>
    %48 = tpu.matmul %45, %47, %cst_35 {dimension_numbers = #tpu.dot_dimension_numbers<[1], [0], [0], [1], [0, 0, 1, 1], [], []>} : vector<256x128xbf16>, vector<128x128xbf16>, vector<256x128xf32> -> vector<256x128xf32>
    %49 = arith.addf %42, %48 : vector<256x128xf32>
    %c0_36 = arith.constant 0 : index
    %c320 = arith.constant 320 : index
    %c0_37 = arith.constant 0 : index
    %50 = vector.load %arg1[%c0_36, %c320, %c0_37] : memref<1x864x128xf32, #tpu.memory_space<vmem>>, vector<1x256x128xf32>
    %51 = vector.shape_cast %50 : vector<1x256x128xf32> to vector<256x128xf32>
    %52 = arith.truncf %51 : vector<256x128xf32> to vector<256x128xbf16>
    %c7 = arith.constant 7 : index
    %c0_38 = arith.constant 0 : index
    %c0_39 = arith.constant 0 : index
    %53 = vector.load %arg2[%c7, %c0_38, %c0_39] : memref<9x128x128xbf16, #tpu.memory_space<vmem>>, vector<1x128x128xbf16>
    %54 = vector.shape_cast %53 : vector<1x128x128xbf16> to vector<128x128xbf16>
    %cst_40 = arith.constant dense<0.000000e+00> : vector<256x128xf32>
    %55 = tpu.matmul %52, %54, %cst_40 {dimension_numbers = #tpu.dot_dimension_numbers<[1], [0], [0], [1], [0, 0, 1, 1], [], []>} : vector<256x128xbf16>, vector<128x128xbf16>, vector<256x128xf32> -> vector<256x128xf32>
    %56 = arith.addf %49, %55 : vector<256x128xf32>
    %c0_41 = arith.constant 0 : index
    %c608 = arith.constant 608 : index
    %c0_42 = arith.constant 0 : index
    %57 = vector.load %arg1[%c0_41, %c608, %c0_42] : memref<1x864x128xf32, #tpu.memory_space<vmem>>, vector<1x256x128xf32>
    %58 = vector.shape_cast %57 : vector<1x256x128xf32> to vector<256x128xf32>
    %59 = arith.truncf %58 : vector<256x128xf32> to vector<256x128xbf16>
    %c8 = arith.constant 8 : index
    %c0_43 = arith.constant 0 : index
    %c0_44 = arith.constant 0 : index
    %60 = vector.load %arg2[%c8, %c0_43, %c0_44] : memref<9x128x128xbf16, #tpu.memory_space<vmem>>, vector<1x128x128xbf16>
    %61 = vector.shape_cast %60 : vector<1x128x128xbf16> to vector<128x128xbf16>
    %cst_45 = arith.constant dense<0.000000e+00> : vector<256x128xf32>
    %62 = tpu.matmul %59, %61, %cst_45 {dimension_numbers = #tpu.dot_dimension_numbers<[1], [0], [0], [1], [0, 0, 1, 1], [], []>} : vector<256x128xbf16>, vector<128x128xbf16>, vector<256x128xf32> -> vector<256x128xf32>
    %63 = arith.addf %56, %62 : vector<256x128xf32>
    %c0_46 = arith.constant 0 : index
    %c0_47 = arith.constant 0 : index
    %64 = vector.load %arg3[%c0_46, %c0_47] : memref<1x128xf32, #tpu.memory_space<vmem>>, vector<1x128xf32>
    %65 = vector.broadcast %64 : vector<1x128xf32> to vector<256x128xf32>
    %66 = arith.addf %63, %65 : vector<256x128xf32>
    %c0_48 = arith.constant 0 : index
    %c0_49 = arith.constant 0 : index
    %c0_50 = arith.constant 0 : index
    %67 = vector.load %arg4[%c0_48, %c0_49, %c0_50] : memref<1x256x128xf32, #tpu.memory_space<vmem>>, vector<1x256x128xf32>
    %68 = vector.shape_cast %67 : vector<1x256x128xf32> to vector<256x128xf32>
    %69 = vector.shape_cast %66 : vector<256x128xf32> to vector<1x256x128xf32>
    tpu.vector_store %arg4[%c0_48, %c0_49, %c0_50], %69 {strides = array<i32>} : memref<1x256x128xf32, #tpu.memory_space<vmem>>, vector<1x256x128xf32>,
    return
  }
  func.func @transform_0(%arg0: i32) -> (i32, i32, i32) {
    %c0_i32 = arith.constant 0 : i32
    %c0_i32_0 = arith.constant 0 : i32
    %c0_i32_1 = arith.constant 0 : i32
    return %arg0, %c0_i32, %c0_i32_0 : i32, i32, i32
  }
  func.func @transform_1(%arg0: i32) -> (i32, i32, i32) {
    %c0_i32 = arith.constant 0 : i32
    %c0_i32_0 = arith.constant 0 : i32
    %c0_i32_1 = arith.constant 0 : i32
    %c0_i32_2 = arith.constant 0 : i32
    return %c0_i32, %c0_i32_0, %c0_i32_1 : i32, i32, i32
  }
  func.func @transform_2(%arg0: i32) -> (i32, i32) {
    %c0_i32 = arith.constant 0 : i32
    %c0_i32_0 = arith.constant 0 : i32
    %c0_i32_1 = arith.constant 0 : i32
    return %c0_i32, %c0_i32_0 : i32, i32
  }
  func.func @transform_3(%arg0: i32) -> (i32, i32, i32) {
    %c0_i32 = arith.constant 0 : i32
    %c0_i32_0 = arith.constant 0 : i32
    %c0_i32_1 = arith.constant 0 : i32
    return %arg0, %c0_i32, %c0_i32_0 : i32, i32, i32
  }
}

module attributes {stable_mosaic.version = 11 : i64} {
  func.func @_cno_act_kernel(%arg0: i32, %arg1: memref<1x256x128xf32, #tpu.memory_space<vmem>>, %arg2: memref<1x128xf32, #tpu.memory_space<vmem>>, %arg3: memref<1x128xf32, #tpu.memory_space<vmem>>, %arg4: memref<1024x256xf32, #tpu.memory_space<vmem>>, %arg5: memref<256x1024xf32, #tpu.memory_space<vmem>>, %arg6: memref<1x256x128xf32, #tpu.memory_space<vmem>>) attributes {dimension_semantics = [#tpu.dimension_semantics<parallel>], iteration_bounds = array<i64: 2>, scalar_prefetch = 0 : i64, scratch_operands = 0 : i64, tpu.core_type = #tpu.core_type<tc>, window_params = [{transform_indices = @transform_0, window_bounds = array<i64: 1, 256, 128>}, {pipeline_mode = #tpu.pipeline_mode<synchronous>, transform_indices = @transform_1, window_bounds = array<i64: 1, 128>}, {pipeline_mode = #tpu.pipeline_mode<synchronous>, transform_indices = @transform_2, window_bounds = array<i64: 1, 128>}, {pipeline_mode = #tpu.pipeline_mode<synchronous>, transform_indices = @transform_3, window_bounds = array<i64: 1024, 256>}, {pipeline_mode = #tpu.pipeline_mode<synchronous>, transform_indices = @transform_4, window_bounds = array<i64: 256, 1024>}, {transform_indices = @transform_5, window_bounds = array<i64: 1, 256, 128>}]} {
    %c0 = arith.constant 0 : index
    %c0_0 = arith.constant 0 : index
    %c0_1 = arith.constant 0 : index
    %0 = vector.load %arg1[%c0, %c0_0, %c0_1] : memref<1x256x128xf32, #tpu.memory_space<vmem>>, vector<1x256x128xf32>
    %1 = vector.shape_cast %0 : vector<1x256x128xf32> to vector<256x128xf32>
    %c0_2 = arith.constant 0 : index
    %c0_3 = arith.constant 0 : index
    %2 = vector.load %arg2[%c0_2, %c0_3] : memref<1x128xf32, #tpu.memory_space<vmem>>, vector<1x128xf32>
    %3 = vector.broadcast %2 : vector<1x128xf32> to vector<256x128xf32>
    %4 = arith.mulf %1, %3 : vector<256x128xf32>
    %c0_4 = arith.constant 0 : index
    %c0_5 = arith.constant 0 : index
    %5 = vector.load %arg3[%c0_4, %c0_5] : memref<1x128xf32, #tpu.memory_space<vmem>>, vector<1x128xf32>
    %6 = vector.broadcast %5 : vector<1x128xf32> to vector<256x128xf32>
    %7 = arith.addf %4, %6 : vector<256x128xf32>
    %c0_6 = arith.constant 0 : index
    %c0_7 = arith.constant 0 : index
    %8 = vector.load %arg4[%c0_6, %c0_7] : memref<1024x256xf32, #tpu.memory_space<vmem>>, vector<1024x256xf32>
    %cst = arith.constant dense<0.000000e+00> : vector<1024x128xf32>
    %9 = tpu.matmul %8, %7, %cst {dimension_numbers = #tpu.dot_dimension_numbers<[1], [0], [0], [1], [0, 0, 1, 1], [], []>} : vector<1024x256xf32>, vector<256x128xf32>, vector<1024x128xf32> -> vector<1024x128xf32>
    %cst_8 = arith.constant 0.000000e+00 : f32
    %10 = vector.broadcast %cst_8 : f32 to vector<1024x128xf32>
    %11 = arith.cmpf oge, %9, %10 : vector<1024x128xf32>
    %cst_9 = arith.constant 0.00999999977 : f32
    %12 = vector.broadcast %cst_9 : f32 to vector<1024x128xf32>
    %13 = arith.mulf %12, %9 : vector<1024x128xf32>
    %14 = arith.select %11, %9, %13 : vector<1024x128xi1>, vector<1024x128xf32>
    %c0_10 = arith.constant 0 : index
    %c0_11 = arith.constant 0 : index
    %15 = vector.load %arg5[%c0_10, %c0_11] : memref<256x1024xf32, #tpu.memory_space<vmem>>, vector<256x1024xf32>
    %cst_12 = arith.constant dense<0.000000e+00> : vector<256x128xf32>
    %16 = tpu.matmul %15, %14, %cst_12 {dimension_numbers = #tpu.dot_dimension_numbers<[1], [0], [0], [1], [0, 0, 1, 1], [], []>} : vector<256x1024xf32>, vector<1024x128xf32>, vector<256x128xf32> -> vector<256x128xf32>
    %c0_13 = arith.constant 0 : index
    %c0_14 = arith.constant 0 : index
    %c0_15 = arith.constant 0 : index
    %17 = vector.load %arg6[%c0_13, %c0_14, %c0_15] : memref<1x256x128xf32, #tpu.memory_space<vmem>>, vector<1x256x128xf32>
    %18 = vector.shape_cast %17 : vector<1x256x128xf32> to vector<256x128xf32>
    %19 = vector.shape_cast %16 : vector<256x128xf32> to vector<1x256x128xf32>
    tpu.vector_store %arg6[%c0_13, %c0_14, %c0_15], %19 {strides = array<i32>} : memref<1x256x128xf32, #tpu.memory_space<vmem>>, vector<1x256x128xf32>,
    return
  }
  func.func @transform_0(%arg0: i32) -> (i32, i32, i32) {
    %c0_i32 = arith.constant 0 : i32
    %c0_i32_0 = arith.constant 0 : i32
    %c0_i32_1 = arith.constant 0 : i32
    return %arg0, %c0_i32, %c0_i32_0 : i32, i32, i32
  }
  func.func @transform_1(%arg0: i32) -> (i32, i32) {
    %c0_i32 = arith.constant 0 : i32
    %c0_i32_0 = arith.constant 0 : i32
    %c0_i32_1 = arith.constant 0 : i32
    return %c0_i32, %c0_i32_0 : i32, i32
  }
  func.func @transform_2(%arg0: i32) -> (i32, i32) {
    %c0_i32 = arith.constant 0 : i32
    %c0_i32_0 = arith.constant 0 : i32
    %c0_i32_1 = arith.constant 0 : i32
    return %c0_i32, %c0_i32_0 : i32, i32
  }
  func.func @transform_3(%arg0: i32) -> (i32, i32) {
    %c0_i32 = arith.constant 0 : i32
    %c0_i32_0 = arith.constant 0 : i32
    %c0_i32_1 = arith.constant 0 : i32
    return %c0_i32, %c0_i32_0 : i32, i32
  }
  func.func @transform_4(%arg0: i32) -> (i32, i32) {
    %c0_i32 = arith.constant 0 : i32
    %c0_i32_0 = arith.constant 0 : i32
    %c0_i32_1 = arith.constant 0 : i32
    return %c0_i32, %c0_i32_0 : i32, i32
  }
  func.func @transform_5(%arg0: i32) -> (i32, i32, i32) {
    %c0_i32 = arith.constant 0 : i32
    %c0_i32_0 = arith.constant 0 : i32
    %c0_i32_1 = arith.constant 0 : i32
    return %arg0, %c0_i32, %c0_i32_0 : i32, i32, i32
  }
}

</mosaic_0001>

<llo_original>
// kernel: resnet_forward.6
$region0: #{resnet_forward.6}
  #allocation0 [shape = 'u32[]', space=smem, size = 0x4, offset = 0x4, fixed_abs, tag = 'smem constant byte address 0x4 - core index']
  #allocation1 [shape = 'u32[72,128]{1,0:T(1,128)}', space=vmem, size = 0x9000, scoped, tag = 'internal scratch']
  %s0 = inlined_call_operand.vmem [shape: f32[2,864,128], index: 0, kind: input, shape index: {}]
  %s1 = inlined_call_operand.vmem [shape: bf16[9,128,128], index: 1, kind: input, shape index: {}]
  %s2 = inlined_call_operand.vmem [shape: f32[1,128], index: 2, kind: input, shape index: {}]
  %s3 = inlined_call_operand.vmem [shape: f32[2,256,128], index: 3, kind: output, shape index: {}]
  %s4 = sld [smem:[#allocation0]]
  $region45: #{resnet_forward.6} parent=0
    _
  %s6 = ssub.s32 1, %s4
  %s7 = scalar_select 0, %s6, %s4
  loop: start=0, step=1, limit=4
  $region2: #{resnet_forward.6} parent=0 // loop_pre_header
    _
  $region3: #{resnet_forward.6} parent=0 // loop_header
    %s9 = sphi 0, %s13
    %p10 = scmp.ge.s32.totalorder %s9, 4
    %s19 = sphi 0, %s21
    %s22 = sphi 0, %s19
    %s23 = sphi 0, %s22
    %s39 = sphi 0, %s23
    %s43 = sphi 0, %s43
    %s45 = sphi 0, %s43
    %s46 = sphi 0, %s45
    %s60 = sphi 0, %s46
    %s64 = sphi 0, %s64
    %s66 = sphi 0, %s64
    %s67 = sphi 0, %s66
    %s81 = sphi 0, %s67
    %s87 = sphi 0, %s89
    %s90 = sphi 0, %s87
    %s91 = sphi 0, %s90
    %s107 = sphi 0, %s91
  $region4: #{resnet_forward.6} parent=0 // loop_header_branch
    %12 = sbr.rel (%p10) target = $region8
  $region5: #{resnet_forward.6} parent=0 // loop_body
    %s14 = ssub.s32 %s9, 1
    %s15 = ssub.s32 %s9, 2
    %s16 = sadd.s32 %s9, 1
    %s17 = ssub.s32 %s9, %s16
    %p18 = scmp.eq.s32.totalorder %s17, 0
    %s20 = sadd.s32 %s19, 1
    %s21 = scalar_select %p18, %s19, %s20
    %p24 = pneg %p18
    %p25 = scmp.eq.s32.totalorder %s9, 1
    %p26 = por %p24, %p25
    %p27 = scmp.ne.s32.totalorder %s19, %s22
    %p28 = scmp.eq.s32.totalorder %s9, 0
    %p29 = por %p27, %p28
    %p30 = scmp.ne.s32.totalorder %s19, %s22
    %p31 = scmp.eq.s32.totalorder %s14, 1
    %p32 = por %p30, %p31
    %p33 = scmp.ne.s32.totalorder %s22, %s23
    %p34 = scmp.eq.s32.totalorder %s14, 0
    %p35 = por %p33, %p34
    %p36 = scmp.ne.s32.totalorder %s22, %s23
    %p37 = scmp.eq.s32.totalorder %s15, 1
    %p38 = por %p36, %p37
    %p40 = scmp.ne.s32.totalorder %s23, %s39
    %p41 = scmp.eq.s32.totalorder %s15, 0
    %p42 = por %p40, %p41
    %s44 = sadd.s32 %s43, 1
    %p47 = scmp.eq.s32.totalorder %s9, 1
    %p48 = scmp.ne.s32.totalorder %s43, %s45
    %p49 = scmp.eq.s32.totalorder %s9, 0
    %p50 = por %p48, %p49
    %p51 = scmp.ne.s32.totalorder %s43, %s45
    %p52 = scmp.eq.s32.totalorder %s14, 1
    %p53 = por %p51, %p52
    %p54 = scmp.ne.s32.totalorder %s45, %s46
    %p55 = scmp.eq.s32.totalorder %s14, 0
    %p56 = por %p54, %p55
    %p57 = scmp.ne.s32.totalorder %s45, %s46
    %p58 = scmp.eq.s32.totalorder %s15, 1
    %p59 = por %p57, %p58
    %p61 = scmp.ne.s32.totalorder %s46, %s60
    %p62 = scmp.eq.s32.totalorder %s15, 0
    %p63 = por %p61, %p62
    %s65 = sadd.s32 %s64, 1
    %p68 = scmp.eq.s32.totalorder %s9, 1
    %p69 = scmp.ne.s32.totalorder %s64, %s66
    %p70 = scmp.eq.s32.totalorder %s9, 0
    %p71 = por %p69, %p70
    %p72 = scmp.ne.s32.totalorder %s64, %s66
    %p73 = scmp.eq.s32.totalorder %s14, 1
    %p74 = por %p72, %p73
    %p75 = scmp.ne.s32.totalorder %s66, %s67
    %p76 = scmp.eq.s32.totalorder %s14, 0
    %p77 = por %p75, %p76
    %p78 = scmp.ne.s32.totalorder %s66, %s67
    %p79 = scmp.eq.s32.totalorder %s15, 1
    %p80 = por %p78, %p79
    %p82 = scmp.ne.s32.totalorder %s67, %s81
    %p83 = scmp.eq.s32.totalorder %s15, 0
    %p84 = por %p82, %p83
    %s85 = ssub.s32 %s9, %s16
    %p86 = scmp.eq.s32.totalorder %s85, 0
    %s88 = sadd.s32 %s87, 1
    %s89 = scalar_select %p86, %s87, %s88
    %p92 = pneg %p86
    %p93 = scmp.eq.s32.totalorder %s9, 1
    %p94 = por %p92, %p93
    %p95 = scmp.ne.s32.totalorder %s87, %s90
    %p96 = scmp.eq.s32.totalorder %s9, 0
    %p97 = por %p95, %p96
    %p98 = scmp.ne.s32.totalorder %s87, %s90
    %p99 = scmp.eq.s32.totalorder %s14, 1
    %p100 = por %p98, %p99
    %p101 = scmp.ne.s32.totalorder %s90, %s91
    %p102 = scmp.eq.s32.totalorder %s14, 0
    %p103 = por %p101, %p102
    %p104 = scmp.ne.s32.totalorder %s90, %s91
    %p105 = scmp.eq.s32.totalorder %s15, 1
    %p106 = por %p104, %p105
    %p108 = scmp.ne.s32.totalorder %s91, %s107
    %p109 = scmp.eq.s32.totalorder %s15, 0
    %p110 = por %p108, %p109
    %p111 = scmp.le.s32.totalorder 1, %s9
    %p112 = scmp.lt.s32.totalorder %s9, 3
    %p113 = pnand %p111, %p112
    %p114 = pneg %p113
    // Predicated region
    $region9: #{resnet_forward.6} parent=5 // pred_check
      _
    $region10: #{resnet_forward.6} parent=5 // pred_check_branch
      %116 = sbr.rel (%p113) target = $region12
    $region11: #{resnet_forward.6} parent=5 // pred_region
      %s117 = ssub.s32 %s9, 1
      // Predicated region
      $region13: #{resnet_forward.6} parent=11 // pred_check
        %p118 = pneg %p56
      $region14: #{resnet_forward.6} parent=11 // pred_check_branch
        %120 = sbr.rel (%p118) target = $region16
      $region15: #{resnet_forward.6} parent=11 // pred_region
        _
      $region16: #{resnet_forward.6} parent=11 // pred_fallthru
        _
      // Predicated region
      $region17: #{resnet_forward.6} parent=11 // pred_check
        %p121 = pneg %p77
      $region18: #{resnet_forward.6} parent=11 // pred_check_branch
        %123 = sbr.rel (%p121) target = $region20
      $region19: #{resnet_forward.6} parent=11 // pred_region
        _
      $region20: #{resnet_forward.6} parent=11 // pred_fallthru
        _
    $region12: #{resnet_forward.6} parent=5 // pred_fallthru
      _
    %p124 = scmp.lt.s32.totalorder %s9, 2
    // Predicated region
    $region21: #{resnet_forward.6} parent=5 // pred_check
      %p125 = pneg %p124
    $region22: #{resnet_forward.6} parent=5 // pred_check_branch
      %127 = sbr.rel (%p125) target = $region24
    $region23: #{resnet_forward.6} parent=5 // pred_region
      // Predicated region
      $region25: #{resnet_forward.6} parent=23 // pred_check
        %p128 = pneg %p29
      $region26: #{resnet_forward.6} parent=23 // pred_check_branch
        %130 = sbr.rel (%p128) target = $region28
      $region27: #{resnet_forward.6} parent=23 // pred_region
        %p131 = scmp.lt.s32.totalorder %s9, 1
        %s132 = scalar_select %p131, %s9, 1
        %s133 = smul.addr %s132, 108
        %s134 = smul.addr %s133, 8
        %s135 = scalar_lea.vmem %s0, %s134
      $region28: #{resnet_forward.6} parent=23 // pred_fallthru
        _
    $region24: #{resnet_forward.6} parent=5 // pred_fallthru
      _
    %p136 = scmp.le.s32.totalorder 1, %s9
    %p137 = scmp.lt.s32.totalorder %s9, 3
    %p138 = pnand %p136, %p137
    %p139 = pneg %p138
    // Predicated region
    $region29: #{resnet_forward.6} parent=5 // pred_check
      _
    $region30: #{resnet_forward.6} parent=5 // pred_check_branch
      %141 = sbr.rel (%p138) target = $region32
    $region31: #{resnet_forward.6} parent=5 // pred_region
      %s142 = ssub.s32 %s9, 1
      %p143 = scmp.lt.s32.totalorder %s14, 1
      %s144 = scalar_select %p143, %s14, 1
      %s145 = smul.addr %s144, 108
      %s146 = smul.addr %s145, 8
      %s147 = scalar_lea.vmem %s0, %s146
      %p148 = pneg %p35
      %p149 = pneg %p32
      %p150 = pneg %p56
      %p151 = pneg %p53
      %p152 = pneg %p77
      %p153 = pneg %p74
      %p154 = pneg %p103
      %p155 = pneg %p100
      %p156 = scmp.lt.s32.totalorder %s14, 1
      %s157 = scalar_select %p156, %s14, 1
      %s158 = smul.addr %s157, 32
      %s159 = smul.addr %s158, 8
      %s160 = scalar_lea.vmem %s3, %s159
      %p161 = scmp.lt.s32.totalorder %s14, 1
      %s162 = scalar_select %p161, %s14, 1
      %s163 = smul.addr %s162, 108
      %s164 = smul.addr %s163, 8
      %s165 = scalar_lea.vmem %s0, %s164
      %p166 = scmp.lt.s32.totalorder %s14, 1
      %s167 = scalar_select %p166, %s14, 1
      %s168 = smul.addr %s167, 32
      %s169 = smul.addr %s168, 8
      %s170 = scalar_lea.vmem %s3, %s169
      %v171 = vld [vmem:[%s165] sm:$0xff]
      %v172 = vld [vmem:[%s165 + $0x8] sm:$0xff]
      %v173 = vld [vmem:[%s165 + $0x10] sm:$0xff]
      %v174 = vld [vmem:[%s165 + $0x18] sm:$0xff]
      %v175 = vld [vmem:[%s165 + $0x20] sm:$0xff]
      %v176 = vld [vmem:[%s165 + $0x28] sm:$0xff]
      %v177 = vld [vmem:[%s165 + $0x30] sm:$0xff]
      %v178 = vld [vmem:[%s165 + $0x38] sm:$0xff]
      %v179 = vld [vmem:[%s165 + $0x40] sm:$0xff]
      %v180 = vld [vmem:[%s165 + $0x48] sm:$0xff]
      %v181 = vld [vmem:[%s165 + $0x50] sm:$0xff]
      %v182 = vld [vmem:[%s165 + $0x58] sm:$0xff]
      %v183 = vld [vmem:[%s165 + $0x60] sm:$0xff]
      %v184 = vld [vmem:[%s165 + $0x68] sm:$0xff]
      %v185 = vld [vmem:[%s165 + $0x70] sm:$0xff]
      %v186 = vld [vmem:[%s165 + $0x78] sm:$0xff]
      %v187 = vld [vmem:[%s165 + $0x80] sm:$0xff]
      %v188 = vld [vmem:[%s165 + $0x88] sm:$0xff]
      %v189 = vld [vmem:[%s165 + $0x90] sm:$0xff]
      %v190 = vld [vmem:[%s165 + $0x98] sm:$0xff]
      %v191 = vld [vmem:[%s165 + $0xa0] sm:$0xff]
      %v192 = vld [vmem:[%s165 + $0xa8] sm:$0xff]
      %v193 = vld [vmem:[%s165 + $0xb0] sm:$0xff]
      %v194 = vld [vmem:[%s165 + $0xb8] sm:$0xff]
      %v195 = vld [vmem:[%s165 + $0xc0] sm:$0xff]
      %v196 = vld [vmem:[%s165 + $0xc8] sm:$0xff]
      %v197 = vld [vmem:[%s165 + $0xd0] sm:$0xff]
      %v198 = vld [vmem:[%s165 + $0xd8] sm:$0xff]
      %v199 = vld [vmem:[%s165 + $0xe0] sm:$0xff]
      %v200 = vld [vmem:[%s165 + $0xe8] sm:$0xff]
      %v201 = vld [vmem:[%s165 + $0xf0] sm:$0xff]
      %v202 = vld [vmem:[%s165 + $0xf8] sm:$0xff]
      %v203 = vpack.c.bf16 %v172, %v171
      %v204 = vpack.c.bf16 %v174, %v173
      %v205 = vpack.c.bf16 %v176, %v175
      %v206 = vpack.c.bf16 %v178, %v177
      %v207 = vpack.c.bf16 %v180, %v179
      %v208 = vpack.c.bf16 %v182, %v181
      %v209 = vpack.c.bf16 %v184, %v183
      %v210 = vpack.c.bf16 %v186, %v185
      %v211 = vpack.c.bf16 %v188, %v187
      %v212 = vpack.c.bf16 %v190, %v189
      %v213 = vpack.c.bf16 %v192, %v191
      %v214 = vpack.c.bf16 %v194, %v193
      %v215 = vpack.c.bf16 %v196, %v195
      %v216 = vpack.c.bf16 %v198, %v197
      %v217 = vpack.c.bf16 %v200, %v199
      %v218 = vpack.c.bf16 %v202, %v201
      %v219 = vld [vmem:[%s1] sm:$0xf]
      %v220 = vld [vmem:[%s1 + $0x4] sm:$0xf]
      %v221 = vld [vmem:[%s1 + $0x8] sm:$0xf]
      %v222 = vld [vmem:[%s1 + $0xc] sm:$0xf]
      %v223 = vld [vmem:[%s1 + $0x10] sm:$0xf]
      %v224 = vld [vmem:[%s1 + $0x14] sm:$0xf]
      %v225 = vld [vmem:[%s1 + $0x18] sm:$0xf]
      %v226 = vld [vmem:[%s1 + $0x1c] sm:$0xf]
      %v227 = vld [vmem:[%s1 + $0x20] sm:$0xf]
      %v228 = vld [vmem:[%s1 + $0x24] sm:$0xf]
      %v229 = vld [vmem:[%s1 + $0x28] sm:$0xf]
      %v230 = vld [vmem:[%s1 + $0x2c] sm:$0xf]
      %v231 = vld [vmem:[%s1 + $0x30] sm:$0xf]
      %v232 = vld [vmem:[%s1 + $0x34] sm:$0xf]
      %v233 = vld [vmem:[%s1 + $0x38] sm:$0xf]
      %v234 = vld [vmem:[%s1 + $0x3c] sm:$0xf]
      %v235 = vld [vmem:[%s165 + $0x120] sm:$0xff]
      %v236 = vld [vmem:[%s165 + $0x128] sm:$0xff]
      %v237 = vld [vmem:[%s165 + $0x130] sm:$0xff]
      %v238 = vld [vmem:[%s165 + $0x138] sm:$0xff]
      %v239 = vld [vmem:[%s165 + $0x140] sm:$0xff]
      %v240 = vld [vmem:[%s165 + $0x148] sm:$0xff]
      %v241 = vld [vmem:[%s165 + $0x150] sm:$0xff]
      %v242 = vld [vmem:[%s165 + $0x158] sm:$0xff]
      %v243 = vld [vmem:[%s165 + $0x160] sm:$0xff]
      %v244 = vld [vmem:[%s165 + $0x168] sm:$0xff]
      %v245 = vld [vmem:[%s165 + $0x170] sm:$0xff]
      %v246 = vld [vmem:[%s165 + $0x178] sm:$0xff]
      %v247 = vld [vmem:[%s165 + $0x180] sm:$0xff]
      %v248 = vld [vmem:[%s165 + $0x188] sm:$0xff]
      %v249 = vld [vmem:[%s165 + $0x190] sm:$0xff]
      %v250 = vld [vmem:[%s165 + $0x198] sm:$0xff]
      %v251 = vld [vmem:[%s165 + $0x1a0] sm:$0xff]
      %v252 = vld [vmem:[%s165 + $0x1a8] sm:$0xff]
      %v253 = vld [vmem:[%s165 + $0x1b0] sm:$0xff]
      %v254 = vld [vmem:[%s165 + $0x1b8] sm:$0xff]
      %v255 = vld [vmem:[%s165 + $0x1c0] sm:$0xff]
      %v256 = vld [vmem:[%s165 + $0x1c8] sm:$0xff]
      %v257 = vld [vmem:[%s165 + $0x1d0] sm:$0xff]
      %v258 = vld [vmem:[%s165 + $0x1d8] sm:$0xff]
      %v259 = vld [vmem:[%s165 + $0x1e0] sm:$0xff]
      %v260 = vld [vmem:[%s165 + $0x1e8] sm:$0xff]
      %v261 = vld [vmem:[%s165 + $0x1f0] sm:$0xff]
      %v262 = vld [vmem:[%s165 + $0x1f8] sm:$0xff]
      %v263 = vld [vmem:[%s165 + $0x200] sm:$0xff]
      %v264 = vld [vmem:[%s165 + $0x208] sm:$0xff]
      %v265 = vld [vmem:[%s165 + $0x210] sm:$0xff]
      %v266 = vld [vmem:[%s165 + $0x218] sm:$0xff]
      %v267 = vpack.c.bf16 %v236, %v235
      %v268 = vpack.c.bf16 %v238, %v237
      %v269 = vpack.c.bf16 %v240, %v239
      %v270 = vpack.c.bf16 %v242, %v241
      %v271 = vpack.c.bf16 %v244, %v243
      %v272 = vpack.c.bf16 %v246, %v245
      %v273 = vpack.c.bf16 %v248, %v247
      %v274 = vpack.c.bf16 %v250, %v249
      %v275 = vpack.c.bf16 %v252, %v251
      %v276 = vpack.c.bf16 %v254, %v253
      %v277 = vpack.c.bf16 %v256, %v255
      %v278 = vpack.c.bf16 %v258, %v257
      %v279 = vpack.c.bf16 %v260, %v259
      %v280 = vpack.c.bf16 %v262, %v261
      %v281 = vpack.c.bf16 %v264, %v263
      %v282 = vpack.c.bf16 %v266, %v265
      %s283 = scalar_lea.vmem %s1, 64
      %v284 = vld [vmem:[%s283] sm:$0xf]
      %v285 = vld [vmem:[%s283 + $0x4] sm:$0xf]
      %v286 = vld [vmem:[%s283 + $0x8] sm:$0xf]
      %v287 = vld [vmem:[%s283 + $0xc] sm:$0xf]
      %v288 = vld [vmem:[%s283 + $0x10] sm:$0xf]
      %v289 = vld [vmem:[%s283 + $0x14] sm:$0xf]
      %v290 = vld [vmem:[%s283 + $0x18] sm:$0xf]
      %v291 = vld [vmem:[%s283 + $0x1c] sm:$0xf]
      %v292 = vld [vmem:[%s283 + $0x20] sm:$0xf]
      %v293 = vld [vmem:[%s283 + $0x24] sm:$0xf]
      %v294 = vld [vmem:[%s283 + $0x28] sm:$0xf]
      %v295 = vld [vmem:[%s283 + $0x2c] sm:$0xf]
      %v296 = vld [vmem:[%s283 + $0x30] sm:$0xf]
      %v297 = vld [vmem:[%s283 + $0x34] sm:$0xf]
      %v298 = vld [vmem:[%s283 + $0x38] sm:$0xf]
      %v299 = vld [vmem:[%s283 + $0x3c] sm:$0xf]
      %v316 = vunpack.c.l.b16 %v284
      %v317 = vunpack.c.l.b16 %v285
      %v318 = vunpack.c.l.b16 %v286
      %v319 = vunpack.c.l.b16 %v287
      %v320 = vunpack.c.l.b16 %v288
      %v321 = vunpack.c.l.b16 %v289
      %v322 = vunpack.c.l.b16 %v290
      %v323 = vunpack.c.l.b16 %v291
      %v324 = vunpack.c.l.b16 %v292
      %v325 = vunpack.c.l.b16 %v293
      %v326 = vunpack.c.l.b16 %v294
      %v327 = vunpack.c.l.b16 %v295
      %v328 = vunpack.c.l.b16 %v296
      %v329 = vunpack.c.l.b16 %v297
      %v330 = vunpack.c.l.b16 %v298
      %v331 = vunpack.c.l.b16 %v299
      %v332 = vpack.c.b16 %v317, %v316
      %v333 = vpack.c.b16 %v319, %v318
      %v334 = vpack.c.b16 %v321, %v320
      %v335 = vpack.c.b16 %v323, %v322
      %v336 = vpack.c.b16 %v325, %v324
      %v337 = vpack.c.b16 %v327, %v326
      %v338 = vpack.c.b16 %v329, %v328
      %v339 = vpack.c.b16 %v331, %v330
      %348 = vmatpush.bf16.msra.mxu0 %v339
      %349 = vmatpush.bf16.msra.mxu0 %v338
      %350 = vmatpush.bf16.msra.mxu0 %v337
      %351 = vmatpush.bf16.msra.mxu0 %v336
      %352 = vmatpush.bf16.msra.mxu0 %v335
      %353 = vmatpush.bf16.msra.mxu0 %v334
      %354 = vmatpush.bf16.msra.mxu0 %v333
      %355 = vmatpush.bf16.msra.mxu0 %v332
      %356 = vmatmul.bf16.gmra.mxu0 %v267
      %v357 = vpop.f32.mrf.mxu0
      %v358 = vadd.f32 0.0, %v357
      %v359 = vpop.f32.mrf.mxu0
      %v360 = vadd.f32 0.0, %v359
      %361 = vmatmul.bf16.gmra.mxu0 %v268
      %v362 = vpop.f32.mrf.mxu0
      %v363 = vadd.f32 0.0, %v362
      %v364 = vpop.f32.mrf.mxu0
      %v365 = vadd.f32 0.0, %v364
      %366 = vmatmul.bf16.gmra.mxu0 %v269
      %v367 = vpop.f32.mrf.mxu0
      %v368 = vadd.f32 0.0, %v367
      %v369 = vpop.f32.mrf.mxu0
      %v370 = vadd.f32 0.0, %v369
      %371 = vmatmul.bf16.gmra.mxu0 %v270
      %v372 = vpop.f32.mrf.mxu0
      %v373 = vadd.f32 0.0, %v372
      %v374 = vpop.f32.mrf.mxu0
      %v375 = vadd.f32 0.0, %v374
      %376 = vmatmul.bf16.gmra.mxu0 %v271
      %v377 = vpop.f32.mrf.mxu0
      %v378 = vadd.f32 0.0, %v377
      %v379 = vpop.f32.mrf.mxu0
      %v380 = vadd.f32 0.0, %v379
      %381 = vmatmul.bf16.gmra.mxu0 %v272
      %v382 = vpop.f32.mrf.mxu0
      %v383 = vadd.f32 0.0, %v382
      %v384 = vpop.f32.mrf.mxu0
      %v385 = vadd.f32 0.0, %v384
      %386 = vmatmul.bf16.gmra.mxu0 %v273
      %v387 = vpop.f32.mrf.mxu0
      %v388 = vadd.f32 0.0, %v387
      %v389 = vpop.f32.mrf.mxu0
      %v390 = vadd.f32 0.0, %v389
      %391 = vmatmul.bf16.gmra.mxu0 %v274
      %v392 = vpop.f32.mrf.mxu0
      %v393 = vadd.f32 0.0, %v392
      %v394 = vpop.f32.mrf.mxu0
      %v395 = vadd.f32 0.0, %v394
      %396 = vmatmul.bf16.gmra.mxu0 %v275
      %v397 = vpop.f32.mrf.mxu0
      %v398 = vadd.f32 0.0, %v397
      %v399 = vpop.f32.mrf.mxu0
      %v400 = vadd.f32 0.0, %v399
      %401 = vmatmul.bf16.gmra.mxu0 %v276
      %v402 = vpop.f32.mrf.mxu0
      %v403 = vadd.f32 0.0, %v402
      %v404 = vpop.f32.mrf.mxu0
      %v405 = vadd.f32 0.0, %v404
      %406 = vmatmul.bf16.gmra.mxu0 %v277
      %v407 = vpop.f32.mrf.mxu0
      %v408 = vadd.f32 0.0, %v407
      %v409 = vpop.f32.mrf.mxu0
      %v410 = vadd.f32 0.0, %v409
      %411 = vmatmul.bf16.gmra.mxu0 %v278
      %v412 = vpop.f32.mrf.mxu0
      %v413 = vadd.f32 0.0, %v412
      %v414 = vpop.f32.mrf.mxu0
      %v415 = vadd.f32 0.0, %v414
      %416 = vmatmul.bf16.gmra.mxu0 %v279
      %v417 = vpop.f32.mrf.mxu0
      %v418 = vadd.f32 0.0, %v417
      %v419 = vpop.f32.mrf.mxu0
      %v420 = vadd.f32 0.0, %v419
      %421 = vmatmul.bf16.gmra.mxu0 %v280
      %v422 = vpop.f32.mrf.mxu0
      %v423 = vadd.f32 0.0, %v422
      %v424 = vpop.f32.mrf.mxu0
      %v425 = vadd.f32 0.0, %v424
      %426 = vmatmul.bf16.gmra.mxu0 %v281
      %v427 = vpop.f32.mrf.mxu0
      %v428 = vadd.f32 0.0, %v427
      %v429 = vpop.f32.mrf.mxu0
      %v430 = vadd.f32 0.0, %v429
      %431 = vmatmul.bf16.gmra.mxu0 %v282
      %v432 = vpop.f32.mrf.mxu0
      %v433 = vadd.f32 0.0, %v432
      %v434 = vpop.f32.mrf.mxu0
      %v435 = vadd.f32 0.0, %v434
      %436 = vdwg.mxu0
      %v453 = vunpack.c.l.b16 %v219
      %v454 = vunpack.c.l.b16 %v220
      %v455 = vunpack.c.l.b16 %v221
      %v456 = vunpack.c.l.b16 %v222
      %v457 = vunpack.c.l.b16 %v223
      %v458 = vunpack.c.l.b16 %v224
      %v459 = vunpack.c.l.b16 %v225
      %v460 = vunpack.c.l.b16 %v226
      %v461 = vunpack.c.l.b16 %v227
      %v462 = vunpack.c.l.b16 %v228
      %v463 = vunpack.c.l.b16 %v229
      %v464 = vunpack.c.l.b16 %v230
      %v465 = vunpack.c.l.b16 %v231
      %v466 = vunpack.c.l.b16 %v232
      %v467 = vunpack.c.l.b16 %v233
      %v468 = vunpack.c.l.b16 %v234
      %v469 = vpack.c.b16 %v454, %v453
      %v470 = vpack.c.b16 %v456, %v455
      %v471 = vpack.c.b16 %v458, %v457
      %v472 = vpack.c.b16 %v460, %v459
      %v473 = vpack.c.b16 %v462, %v461
      %v474 = vpack.c.b16 %v464, %v463
      %v475 = vpack.c.b16 %v466, %v465
      %v476 = vpack.c.b16 %v468, %v467
      %485 = vmatpush.bf16.msra.mxu0 %v476
      %486 = vmatpush.bf16.msra.mxu0 %v475
      %487 = vmatpush.bf16.msra.mxu0 %v474
      %488 = vmatpush.bf16.msra.mxu0 %v473
      %489 = vmatpush.bf16.msra.mxu0 %v472
      %490 = vmatpush.bf16.msra.mxu0 %v471
      %491 = vmatpush.bf16.msra.mxu0 %v470
      %492 = vmatpush.bf16.msra.mxu0 %v469
      %493 = vmatmul.bf16.gmra.mxu0 %v203
      %v494 = vpop.f32.mrf.mxu0
      %v495 = vadd.f32 %v358, %v494
      %v496 = vpop.f32.mrf.mxu0
      %v497 = vadd.f32 %v360, %v496
      %498 = vmatmul.bf16.gmra.mxu0 %v204
      %v499 = vpop.f32.mrf.mxu0
      %v500 = vadd.f32 %v363, %v499
      %v501 = vpop.f32.mrf.mxu0
      %v502 = vadd.f32 %v365, %v501
      %503 = vmatmul.bf16.gmra.mxu0 %v205
      %v504 = vpop.f32.mrf.mxu0
      %v505 = vadd.f32 %v368, %v504
      %v506 = vpop.f32.mrf.mxu0
      %v507 = vadd.f32 %v370, %v506
      %508 = vmatmul.bf16.gmra.mxu0 %v206
      %v509 = vpop.f32.mrf.mxu0
      %v510 = vadd.f32 %v373, %v509
      %v511 = vpop.f32.mrf.mxu0
      %v512 = vadd.f32 %v375, %v511
      %513 = vmatmul.bf16.gmra.mxu0 %v207
      %v514 = vpop.f32.mrf.mxu0
      %v515 = vadd.f32 %v378, %v514
      %v516 = vpop.f32.mrf.mxu0
      %v517 = vadd.f32 %v380, %v516
      %518 = vmatmul.bf16.gmra.mxu0 %v208
      %v519 = vpop.f32.mrf.mxu0
      %v520 = vadd.f32 %v383, %v519
      %v521 = vpop.f32.mrf.mxu0
      %v522 = vadd.f32 %v385, %v521
      %523 = vmatmul.bf16.gmra.mxu0 %v209
      %v524 = vpop.f32.mrf.mxu0
      %v525 = vadd.f32 %v388, %v524
      %v526 = vpop.f32.mrf.mxu0
      %v527 = vadd.f32 %v390, %v526
      %528 = vmatmul.bf16.gmra.mxu0 %v210
      %v529 = vpop.f32.mrf.mxu0
      %v530 = vadd.f32 %v393, %v529
      %v531 = vpop.f32.mrf.mxu0
      %v532 = vadd.f32 %v395, %v531
      %533 = vmatmul.bf16.gmra.mxu0 %v211
      %v534 = vpop.f32.mrf.mxu0
      %v535 = vadd.f32 %v398, %v534
      %v536 = vpop.f32.mrf.mxu0
      %v537 = vadd.f32 %v400, %v536
      %538 = vmatmul.bf16.gmra.mxu0 %v212
      %v539 = vpop.f32.mrf.mxu0
      %v540 = vadd.f32 %v403, %v539
      %v541 = vpop.f32.mrf.mxu0
      %v542 = vadd.f32 %v405, %v541
      %543 = vmatmul.bf16.gmra.mxu0 %v213
      %v544 = vpop.f32.mrf.mxu0
      %v545 = vadd.f32 %v408, %v544
      %v546 = vpop.f32.mrf.mxu0
      %v547 = vadd.f32 %v410, %v546
      %548 = vmatmul.bf16.gmra.mxu0 %v214
      %v549 = vpop.f32.mrf.mxu0
      %v550 = vadd.f32 %v413, %v549
      %v551 = vpop.f32.mrf.mxu0
      %v552 = vadd.f32 %v415, %v551
      %553 = vmatmul.bf16.gmra.mxu0 %v215
      %v554 = vpop.f32.mrf.mxu0
      %v555 = vadd.f32 %v418, %v554
      %v556 = vpop.f32.mrf.mxu0
      %v557 = vadd.f32 %v420, %v556
      %558 = vmatmul.bf16.gmra.mxu0 %v216
      %v559 = vpop.f32.mrf.mxu0
      %v560 = vadd.f32 %v423, %v559
      %v561 = vpop.f32.mrf.mxu0
      %v562 = vadd.f32 %v425, %v561
      %563 = vmatmul.bf16.gmra.mxu0 %v217
      %v564 = vpop.f32.mrf.mxu0
      %v565 = vadd.f32 %v428, %v564
      %v566 = vpop.f32.mrf.mxu0
      %v567 = vadd.f32 %v430, %v566
      %568 = vmatmul.bf16.gmra.mxu0 %v218
      %v569 = vpop.f32.mrf.mxu0
      %v570 = vadd.f32 %v433, %v569
      %v571 = vpop.f32.mrf.mxu0
      %v572 = vadd.f32 %v435, %v571
      %573 = vdwg.mxu0
      %v574 = vld [vmem:[%s165 + $0x240] sm:$0xff]
      %v575 = vld [vmem:[%s165 + $0x248] sm:$0xff]
      %v576 = vld [vmem:[%s165 + $0x250] sm:$0xff]
      %v577 = vld [vmem:[%s165 + $0x258] sm:$0xff]
      %v578 = vld [vmem:[%s165 + $0x260] sm:$0xff]
      %v579 = vld [vmem:[%s165 + $0x268] sm:$0xff]
      %v580 = vld [vmem:[%s165 + $0x270] sm:$0xff]
      %v581 = vld [vmem:[%s165 + $0x278] sm:$0xff]
      %v582 = vld [vmem:[%s165 + $0x280] sm:$0xff]
      %v583 = vld [vmem:[%s165 + $0x288] sm:$0xff]
      %v584 = vld [vmem:[%s165 + $0x290] sm:$0xff]
      %v585 = vld [vmem:[%s165 + $0x298] sm:$0xff]
      %v586 = vld [vmem:[%s165 + $0x2a0] sm:$0xff]
      %v587 = vld [vmem:[%s165 + $0x2a8] sm:$0xff]
      %v588 = vld [vmem:[%s165 + $0x2b0] sm:$0xff]
      %v589 = vld [vmem:[%s165 + $0x2b8] sm:$0xff]
      %v590 = vld [vmem:[%s165 + $0x2c0] sm:$0xff]
      %v591 = vld [vmem:[%s165 + $0x2c8] sm:$0xff]
      %v592 = vld [vmem:[%s165 + $0x2d0] sm:$0xff]
      %v593 = vld [vmem:[%s165 + $0x2d8] sm:$0xff]
      %v594 = vld [vmem:[%s165 + $0x2e0] sm:$0xff]
      %v595 = vld [vmem:[%s165 + $0x2e8] sm:$0xff]
      %v596 = vld [vmem:[%s165 + $0x2f0] sm:$0xff]
      %v597 = vld [vmem:[%s165 + $0x2f8] sm:$0xff]
      %v598 = vld [vmem:[%s165 + $0x300] sm:$0xff]
      %v599 = vld [vmem:[%s165 + $0x308] sm:$0xff]
      %v600 = vld [vmem:[%s165 + $0x310] sm:$0xff]
      %v601 = vld [vmem:[%s165 + $0x318] sm:$0xff]
      %v602 = vld [vmem:[%s165 + $0x320] sm:$0xff]
      %v603 = vld [vmem:[%s165 + $0x328] sm:$0xff]
      %v604 = vld [vmem:[%s165 + $0x330] sm:$0xff]
      %v605 = vld [vmem:[%s165 + $0x338] sm:$0xff]
      %v606 = vpack.c.bf16 %v575, %v574
      %v607 = vpack.c.bf16 %v577, %v576
      %v608 = vpack.c.bf16 %v579, %v578
      %v609 = vpack.c.bf16 %v581, %v580
      %v610 = vpack.c.bf16 %v583, %v582
      %v611 = vpack.c.bf16 %v585, %v584
      %v612 = vpack.c.bf16 %v587, %v586
      %v613 = vpack.c.bf16 %v589, %v588
      %v614 = vpack.c.bf16 %v591, %v590
      %v615 = vpack.c.bf16 %v593, %v592
      %v616 = vpack.c.bf16 %v595, %v594
      %v617 = vpack.c.bf16 %v597, %v596
      %v618 = vpack.c.bf16 %v599, %v598
      %v619 = vpack.c.bf16 %v601, %v600
      %v620 = vpack.c.bf16 %v603, %v602
      %v621 = vpack.c.bf16 %v605, %v604
      %s622 = scalar_lea.vmem %s1, 128
      %v623 = vld [vmem:[%s622] sm:$0xf]
      %v624 = vld [vmem:[%s622 + $0x4] sm:$0xf]
      %v625 = vld [vmem:[%s622 + $0x8] sm:$0xf]
      %v626 = vld [vmem:[%s622 + $0xc] sm:$0xf]
      %v627 = vld [vmem:[%s622 + $0x10] sm:$0xf]
      %v628 = vld [vmem:[%s622 + $0x14] sm:$0xf]
      %v629 = vld [vmem:[%s622 + $0x18] sm:$0xf]
      %v630 = vld [vmem:[%s622 + $0x1c] sm:$0xf]
      %v631 = vld [vmem:[%s622 + $0x20] sm:$0xf]
      %v632 = vld [vmem:[%s622 + $0x24] sm:$0xf]
      %v633 = vld [vmem:[%s622 + $0x28] sm:$0xf]
      %v634 = vld [vmem:[%s622 + $0x2c] sm:$0xf]
      %v635 = vld [vmem:[%s622 + $0x30] sm:$0xf]
      %v636 = vld [vmem:[%s622 + $0x34] sm:$0xf]
      %v637 = vld [vmem:[%s622 + $0x38] sm:$0xf]
      %v638 = vld [vmem:[%s622 + $0x3c] sm:$0xf]
      %v655 = vunpack.c.l.b16 %v623
      %v656 = vunpack.c.l.b16 %v624
      %v657 = vunpack.c.l.b16 %v625
      %v658 = vunpack.c.l.b16 %v626
      %v659 = vunpack.c.l.b16 %v627
      %v660 = vunpack.c.l.b16 %v628
      %v661 = vunpack.c.l.b16 %v629
      %v662 = vunpack.c.l.b16 %v630
      %v663 = vunpack.c.l.b16 %v631
      %v664 = vunpack.c.l.b16 %v632
      %v665 = vunpack.c.l.b16 %v633
      %v666 = vunpack.c.l.b16 %v634
      %v667 = vunpack.c.l.b16 %v635
      %v668 = vunpack.c.l.b16 %v636
      %v669 = vunpack.c.l.b16 %v637
      %v670 = vunpack.c.l.b16 %v638
      %v671 = vpack.c.b16 %v656, %v655
      %v672 = vpack.c.b16 %v658, %v657
      %v673 = vpack.c.b16 %v660, %v659
      %v674 = vpack.c.b16 %v662, %v661
      %v675 = vpack.c.b16 %v664, %v663
      %v676 = vpack.c.b16 %v666, %v665
      %v677 = vpack.c.b16 %v668, %v667
      %v678 = vpack.c.b16 %v670, %v669
      %687 = vmatpush.bf16.msra.mxu0 %v678
      %688 = vmatpush.bf16.msra.mxu0 %v677
      %689 = vmatpush.bf16.msra.mxu0 %v676
      %690 = vmatpush.bf16.msra.mxu0 %v675
      %691 = vmatpush.bf16.msra.mxu0 %v674
      %692 = vmatpush.bf16.msra.mxu0 %v673
      %693 = vmatpush.bf16.msra.mxu0 %v672
      %694 = vmatpush.bf16.msra.mxu0 %v671
      %695 = vmatmul.bf16.gmra.mxu0 %v606
      %v696 = vpop.f32.mrf.mxu0
      %v697 = vadd.f32 0.0, %v696
      %v698 = vpop.f32.mrf.mxu0
      %v699 = vadd.f32 0.0, %v698
      %700 = vmatmul.bf16.gmra.mxu0 %v607
      %v701 = vpop.f32.mrf.mxu0
      %v702 = vadd.f32 0.0, %v701
      %v703 = vpop.f32.mrf.mxu0
      %v704 = vadd.f32 0.0, %v703
      %705 = vmatmul.bf16.gmra.mxu0 %v608
      %v706 = vpop.f32.mrf.mxu0
      %v707 = vadd.f32 0.0, %v706
      %v708 = vpop.f32.mrf.mxu0
      %v709 = vadd.f32 0.0, %v708
      %710 = vmatmul.bf16.gmra.mxu0 %v609
      %v711 = vpop.f32.mrf.mxu0
      %v712 = vadd.f32 0.0, %v711
      %v713 = vpop.f32.mrf.mxu0
      %v714 = vadd.f32 0.0, %v713
      %715 = vmatmul.bf16.gmra.mxu0 %v610
      %v716 = vpop.f32.mrf.mxu0
      %v717 = vadd.f32 0.0, %v716
      %v718 = vpop.f32.mrf.mxu0
      %v719 = vadd.f32 0.0, %v718
      %720 = vmatmul.bf16.gmra.mxu0 %v611
      %v721 = vpop.f32.mrf.mxu0
      %v722 = vadd.f32 0.0, %v721
      %v723 = vpop.f32.mrf.mxu0
      %v724 = vadd.f32 0.0, %v723
      %725 = vmatmul.bf16.gmra.mxu0 %v612
      %v726 = vpop.f32.mrf.mxu0
      %v727 = vadd.f32 0.0, %v726
      %v728 = vpop.f32.mrf.mxu0
      %v729 = vadd.f32 0.0, %v728
      %730 = vmatmul.bf16.gmra.mxu0 %v613
      %v731 = vpop.f32.mrf.mxu0
      %v732 = vadd.f32 0.0, %v731
      %v733 = vpop.f32.mrf.mxu0
      %v734 = vadd.f32 0.0, %v733
      %735 = vmatmul.bf16.gmra.mxu0 %v614
      %v736 = vpop.f32.mrf.mxu0
      %v737 = vadd.f32 0.0, %v736
      %v738 = vpop.f32.mrf.mxu0
      %v739 = vadd.f32 0.0, %v738
      %740 = vmatmul.bf16.gmra.mxu0 %v615
      %v741 = vpop.f32.mrf.mxu0
      %v742 = vadd.f32 0.0, %v741
      %v743 = vpop.f32.mrf.mxu0
      %v744 = vadd.f32 0.0, %v743
      %745 = vmatmul.bf16.gmra.mxu0 %v616
      %v746 = vpop.f32.mrf.mxu0
      %v747 = vadd.f32 0.0, %v746
      %v748 = vpop.f32.mrf.mxu0
      %v749 = vadd.f32 0.0, %v748
      %750 = vmatmul.bf16.gmra.mxu0 %v617
      %v751 = vpop.f32.mrf.mxu0
      %v752 = vadd.f32 0.0, %v751
      %v753 = vpop.f32.mrf.mxu0
      %v754 = vadd.f32 0.0, %v753
      %755 = vmatmul.bf16.gmra.mxu0 %v618
      %v756 = vpop.f32.mrf.mxu0
      %v757 = vadd.f32 0.0, %v756
      %v758 = vpop.f32.mrf.mxu0
      %v759 = vadd.f32 0.0, %v758
      %760 = vmatmul.bf16.gmra.mxu0 %v619
      %v761 = vpop.f32.mrf.mxu0
      %v762 = vadd.f32 0.0, %v761
      %v763 = vpop.f32.mrf.mxu0
      %v764 = vadd.f32 0.0, %v763
      %765 = vmatmul.bf16.gmra.mxu0 %v620
      %v766 = vpop.f32.mrf.mxu0
      %v767 = vadd.f32 0.0, %v766
      %v768 = vpop.f32.mrf.mxu0
      %v769 = vadd.f32 0.0, %v768
      %770 = vmatmul.bf16.gmra.mxu0 %v621
      %v771 = vpop.f32.mrf.mxu0
      %v772 = vadd.f32 0.0, %v771
      %v773 = vpop.f32.mrf.mxu0
      %v774 = vadd.f32 0.0, %v773
      %775 = vdwg.mxu0
      %v776 = vadd.f32 %v495, %v697
      %v777 = vadd.f32 %v497, %v699
      %v778 = vadd.f32 %v500, %v702
      %v779 = vadd.f32 %v502, %v704
      %v780 = vadd.f32 %v505, %v707
      %v781 = vadd.f32 %v507, %v709
      %v782 = vadd.f32 %v510, %v712
      %v783 = vadd.f32 %v512, %v714
      %v784 = vadd.f32 %v515, %v717
      %v785 = vadd.f32 %v517, %v719
      %v786 = vadd.f32 %v520, %v722
      %v787 = vadd.f32 %v522, %v724
      %v788 = vadd.f32 %v525, %v727
      %v789 = vadd.f32 %v527, %v729
      %v790 = vadd.f32 %v530, %v732
      %v791 = vadd.f32 %v532, %v734
      %v792 = vadd.f32 %v535, %v737
      %v793 = vadd.f32 %v537, %v739
      %v794 = vadd.f32 %v540, %v742
      %v795 = vadd.f32 %v542, %v744
      %v796 = vadd.f32 %v545, %v747
      %v797 = vadd.f32 %v547, %v749
      %v798 = vadd.f32 %v550, %v752
      %v799 = vadd.f32 %v552, %v754
      %v800 = vadd.f32 %v555, %v757
      %v801 = vadd.f32 %v557, %v759
      %v802 = vadd.f32 %v560, %v762
      %v803 = vadd.f32 %v562, %v764
      %v804 = vadd.f32 %v565, %v767
      %v805 = vadd.f32 %v567, %v769
      %v806 = vadd.f32 %v570, %v772
      %v807 = vadd.f32 %v572, %v774
      %v808 = vld [vmem:[%s165 + $0x10] sm:$0xff]
      %v809 = vld [vmem:[%s165 + $0x18] sm:$0xff]
      %v810 = vld [vmem:[%s165 + $0x20] sm:$0xff]
      %v811 = vld [vmem:[%s165 + $0x28] sm:$0xff]
      %v812 = vld [vmem:[%s165 + $0x30] sm:$0xff]
      %v813 = vld [vmem:[%s165 + $0x38] sm:$0xff]
      %v814 = vld [vmem:[%s165 + $0x40] sm:$0xff]
      %v815 = vld [vmem:[%s165 + $0x48] sm:$0xff]
      %v816 = vld [vmem:[%s165 + $0x50] sm:$0xff]
      %v817 = vld [vmem:[%s165 + $0x58] sm:$0xff]
      %v818 = vld [vmem:[%s165 + $0x60] sm:$0xff]
      %v819 = vld [vmem:[%s165 + $0x68] sm:$0xff]
      %v820 = vld [vmem:[%s165 + $0x70] sm:$0xff]
      %v821 = vld [vmem:[%s165 + $0x78] sm:$0xff]
      %v822 = vld [vmem:[%s165 + $0x80] sm:$0xff]
      %v823 = vld [vmem:[%s165 + $0x88] sm:$0xff]
      %v824 = vld [vmem:[%s165 + $0x90] sm:$0xff]
      %v825 = vld [vmem:[%s165 + $0x98] sm:$0xff]
      %v826 = vld [vmem:[%s165 + $0xa0] sm:$0xff]
      %v827 = vld [vmem:[%s165 + $0xa8] sm:$0xff]
      %v828 = vld [vmem:[%s165 + $0xb0] sm:$0xff]
      %v829 = vld [vmem:[%s165 + $0xb8] sm:$0xff]
      %v830 = vld [vmem:[%s165 + $0xc0] sm:$0xff]
      %v831 = vld [vmem:[%s165 + $0xc8] sm:$0xff]
      %v832 = vld [vmem:[%s165 + $0xd0] sm:$0xff]
      %v833 = vld [vmem:[%s165 + $0xd8] sm:$0xff]
      %v834 = vld [vmem:[%s165 + $0xe0] sm:$0xff]
      %v835 = vld [vmem:[%s165 + $0xe8] sm:$0xff]
      %v836 = vld [vmem:[%s165 + $0xf0] sm:$0xff]
      %v837 = vld [vmem:[%s165 + $0xf8] sm:$0xff]
      %v838 = vld [vmem:[%s165 + $0x100] sm:$0xff]
      %v839 = vld [vmem:[%s165 + $0x108] sm:$0xff]
      %v840 = vpack.c.bf16 %v809, %v808
      %v841 = vpack.c.bf16 %v811, %v810
      %v842 = vpack.c.bf16 %v813, %v812
      %v843 = vpack.c.bf16 %v815, %v814
      %v844 = vpack.c.bf16 %v817, %v816
      %v845 = vpack.c.bf16 %v819, %v818
      %v846 = vpack.c.bf16 %v821, %v820
      %v847 = vpack.c.bf16 %v823, %v822
      %v848 = vpack.c.bf16 %v825, %v824
      %v849 = vpack.c.bf16 %v827, %v826
      %v850 = vpack.c.bf16 %v829, %v828
      %v851 = vpack.c.bf16 %v831, %v830
      %v852 = vpack.c.bf16 %v833, %v832
      %v853 = vpack.c.bf16 %v835, %v834
      %v854 = vpack.c.bf16 %v837, %v836
      %v855 = vpack.c.bf16 %v839, %v838
      %s856 = scalar_lea.vmem %s1, 192
      %v857 = vld [vmem:[%s856] sm:$0xf]
      %v858 = vld [vmem:[%s856 + $0x4] sm:$0xf]
      %v859 = vld [vmem:[%s856 + $0x8] sm:$0xf]
      %v860 = vld [vmem:[%s856 + $0xc] sm:$0xf]
      %v861 = vld [vmem:[%s856 + $0x10] sm:$0xf]
      %v862 = vld [vmem:[%s856 + $0x14] sm:$0xf]
      %v863 = vld [vmem:[%s856 + $0x18] sm:$0xf]
      %v864 = vld [vmem:[%s856 + $0x1c] sm:$0xf]
      %v865 = vld [vmem:[%s856 + $0x20] sm:$0xf]
      %v866 = vld [vmem:[%s856 + $0x24] sm:$0xf]
      %v867 = vld [vmem:[%s856 + $0x28] sm:$0xf]
      %v868 = vld [vmem:[%s856 + $0x2c] sm:$0xf]
      %v869 = vld [vmem:[%s856 + $0x30] sm:$0xf]
      %v870 = vld [vmem:[%s856 + $0x34] sm:$0xf]
      %v871 = vld [vmem:[%s856 + $0x38] sm:$0xf]
      %v872 = vld [vmem:[%s856 + $0x3c] sm:$0xf]
      %v889 = vunpack.c.l.b16 %v857
      %v890 = vunpack.c.l.b16 %v858
      %v891 = vunpack.c.l.b16 %v859
      %v892 = vunpack.c.l.b16 %v860
      %v893 = vunpack.c.l.b16 %v861
      %v894 = vunpack.c.l.b16 %v862
      %v895 = vunpack.c.l.b16 %v863
      %v896 = vunpack.c.l.b16 %v864
      %v897 = vunpack.c.l.b16 %v865
      %v898 = vunpack.c.l.b16 %v866
      %v899 = vunpack.c.l.b16 %v867
      %v900 = vunpack.c.l.b16 %v868
      %v901 = vunpack.c.l.b16 %v869
      %v902 = vunpack.c.l.b16 %v870
      %v903 = vunpack.c.l.b16 %v871
      %v904 = vunpack.c.l.b16 %v872
      %v905 = vpack.c.b16 %v890, %v889
      %v906 = vpack.c.b16 %v892, %v891
      %v907 = vpack.c.b16 %v894, %v893
      %v908 = vpack.c.b16 %v896, %v895
      %v909 = vpack.c.b16 %v898, %v897
      %v910 = vpack.c.b16 %v900, %v899
      %v911 = vpack.c.b16 %v902, %v901
      %v912 = vpack.c.b16 %v904, %v903
      %921 = vmatpush.bf16.msra.mxu0 %v912
      %922 = vmatpush.bf16.msra.mxu0 %v911
      %923 = vmatpush.bf16.msra.mxu0 %v910
      %924 = vmatpush.bf16.msra.mxu0 %v909
      %925 = vmatpush.bf16.msra.mxu0 %v908
      %926 = vmatpush.bf16.msra.mxu0 %v907
      %927 = vmatpush.bf16.msra.mxu0 %v906
      %928 = vmatpush.bf16.msra.mxu0 %v905
      %929 = vmatmul.bf16.gmra.mxu0 %v840
      %v930 = vpop.f32.mrf.mxu0
      %v931 = vadd.f32 0.0, %v930
      %v932 = vpop.f32.mrf.mxu0
      %v933 = vadd.f32 0.0, %v932
      %934 = vmatmul.bf16.gmra.mxu0 %v841
      %v935 = vpop.f32.mrf.mxu0
      %v936 = vadd.f32 0.0, %v935
      %v937 = vpop.f32.mrf.mxu0
      %v938 = vadd.f32 0.0, %v937
      %939 = vmatmul.bf16.gmra.mxu0 %v842
      %v940 = vpop.f32.mrf.mxu0
      %v941 = vadd.f32 0.0, %v940
      %v942 = vpop.f32.mrf.mxu0
      %v943 = vadd.f32 0.0, %v942
      %944 = vmatmul.bf16.gmra.mxu0 %v843
      %v945 = vpop.f32.mrf.mxu0
      %v946 = vadd.f32 0.0, %v945
      %v947 = vpop.f32.mrf.mxu0
      %v948 = vadd.f32 0.0, %v947
      %949 = vmatmul.bf16.gmra.mxu0 %v844
      %v950 = vpop.f32.mrf.mxu0
      %v951 = vadd.f32 0.0, %v950
      %v952 = vpop.f32.mrf.mxu0
      %v953 = vadd.f32 0.0, %v952
      %954 = vmatmul.bf16.gmra.mxu0 %v845
      %v955 = vpop.f32.mrf.mxu0
      %v956 = vadd.f32 0.0, %v955
      %v957 = vpop.f32.mrf.mxu0
      %v958 = vadd.f32 0.0, %v957
      %959 = vmatmul.bf16.gmra.mxu0 %v846
      %v960 = vpop.f32.mrf.mxu0
      %v961 = vadd.f32 0.0, %v960
      %v962 = vpop.f32.mrf.mxu0
      %v963 = vadd.f32 0.0, %v962
      %964 = vmatmul.bf16.gmra.mxu0 %v847
      %v965 = vpop.f32.mrf.mxu0
      %v966 = vadd.f32 0.0, %v965
      %v967 = vpop.f32.mrf.mxu0
      %v968 = vadd.f32 0.0, %v967
      %969 = vmatmul.bf16.gmra.mxu0 %v848
      %v970 = vpop.f32.mrf.mxu0
      %v971 = vadd.f32 0.0, %v970
      %v972 = vpop.f32.mrf.mxu0
      %v973 = vadd.f32 0.0, %v972
      %974 = vmatmul.bf16.gmra.mxu0 %v849
      %v975 = vpop.f32.mrf.mxu0
      %v976 = vadd.f32 0.0, %v975
      %v977 = vpop.f32.mrf.mxu0
      %v978 = vadd.f32 0.0, %v977
      %979 = vmatmul.bf16.gmra.mxu0 %v850
      %v980 = vpop.f32.mrf.mxu0
      %v981 = vadd.f32 0.0, %v980
      %v982 = vpop.f32.mrf.mxu0
      %v983 = vadd.f32 0.0, %v982
      %984 = vmatmul.bf16.gmra.mxu0 %v851
      %v985 = vpop.f32.mrf.mxu0
      %v986 = vadd.f32 0.0, %v985
      %v987 = vpop.f32.mrf.mxu0
      %v988 = vadd.f32 0.0, %v987
      %989 = vmatmul.bf16.gmra.mxu0 %v852
      %v990 = vpop.f32.mrf.mxu0
      %v991 = vadd.f32 0.0, %v990
      %v992 = vpop.f32.mrf.mxu0
      %v993 = vadd.f32 0.0, %v992
      %994 = vmatmul.bf16.gmra.mxu0 %v853
      %v995 = vpop.f32.mrf.mxu0
      %v996 = vadd.f32 0.0, %v995
      %v997 = vpop.f32.mrf.mxu0
      %v998 = vadd.f32 0.0, %v997
      %999 = vmatmul.bf16.gmra.mxu0 %v854
      %v1000 = vpop.f32.mrf.mxu0
      %v1001 = vadd.f32 0.0, %v1000
      %v1002 = vpop.f32.mrf.mxu0
      %v1003 = vadd.f32 0.0, %v1002
      %1004 = vmatmul.bf16.gmra.mxu0 %v855
      %v1005 = vpop.f32.mrf.mxu0
      %v1006 = vadd.f32 0.0, %v1005
      %v1007 = vpop.f32.mrf.mxu0
      %v1008 = vadd.f32 0.0, %v1007
      %1009 = vdwg.mxu0
      %v1010 = vadd.f32 %v776, %v931
      %v1011 = vadd.f32 %v777, %v933
      %v1012 = vadd.f32 %v778, %v936
      %v1013 = vadd.f32 %v779, %v938
      %v1014 = vadd.f32 %v780, %v941
      %v1015 = vadd.f32 %v781, %v943
      %v1016 = vadd.f32 %v782, %v946
      %v1017 = vadd.f32 %v783, %v948
      %v1018 = vadd.f32 %v784, %v951
      %v1019 = vadd.f32 %v785, %v953
      %v1020 = vadd.f32 %v786, %v956
      %v1021 = vadd.f32 %v787, %v958
      %v1022 = vadd.f32 %v788, %v961
      %v1023 = vadd.f32 %v789, %v963
      %v1024 = vadd.f32 %v790, %v966
      %v1025 = vadd.f32 %v791, %v968
      %v1026 = vadd.f32 %v792, %v971
      %v1027 = vadd.f32 %v793, %v973
      %v1028 = vadd.f32 %v794, %v976
      %v1029 = vadd.f32 %v795, %v978
      %v1030 = vadd.f32 %v796, %v981
      %v1031 = vadd.f32 %v797, %v983
      %v1032 = vadd.f32 %v798, %v986
      %v1033 = vadd.f32 %v799, %v988
      %v1034 = vadd.f32 %v800, %v991
      %v1035 = vadd.f32 %v801, %v993
      %v1036 = vadd.f32 %v802, %v996
      %v1037 = vadd.f32 %v803, %v998
      %v1038 = vadd.f32 %v804, %v1001
      %v1039 = vadd.f32 %v805, %v1003
      %v1040 = vadd.f32 %v806, %v1006
      %v1041 = vadd.f32 %v807, %v1008
      %v1042 = vld [vmem:[%s165 + $0x130] sm:$0xff]
      %v1043 = vld [vmem:[%s165 + $0x138] sm:$0xff]
      %v1044 = vld [vmem:[%s165 + $0x140] sm:$0xff]
      %v1045 = vld [vmem:[%s165 + $0x148] sm:$0xff]
      %v1046 = vld [vmem:[%s165 + $0x150] sm:$0xff]
      %v1047 = vld [vmem:[%s165 + $0x158] sm:$0xff]
      %v1048 = vld [vmem:[%s165 + $0x160] sm:$0xff]
      %v1049 = vld [vmem:[%s165 + $0x168] sm:$0xff]
      %v1050 = vld [vmem:[%s165 + $0x170] sm:$0xff]
      %v1051 = vld [vmem:[%s165 + $0x178] sm:$0xff]
      %v1052 = vld [vmem:[%s165 + $0x180] sm:$0xff]
      %v1053 = vld [vmem:[%s165 + $0x188] sm:$0xff]
      %v1054 = vld [vmem:[%s165 + $0x190] sm:$0xff]
      %v1055 = vld [vmem:[%s165 + $0x198] sm:$0xff]
      %v1056 = vld [vmem:[%s165 + $0x1a0] sm:$0xff]
      %v1057 = vld [vmem:[%s165 + $0x1a8] sm:$0xff]
      %v1058 = vld [vmem:[%s165 + $0x1b0] sm:$0xff]
      %v1059 = vld [vmem:[%s165 + $0x1b8] sm:$0xff]
      %v1060 = vld [vmem:[%s165 + $0x1c0] sm:$0xff]
      %v1061 = vld [vmem:[%s165 + $0x1c8] sm:$0xff]
      %v1062 = vld [vmem:[%s165 + $0x1d0] sm:$0xff]
      %v1063 = vld [vmem:[%s165 + $0x1d8] sm:$0xff]
      %v1064 = vld [vmem:[%s165 + $0x1e0] sm:$0xff]
      %v1065 = vld [vmem:[%s165 + $0x1e8] sm:$0xff]
      %v1066 = vld [vmem:[%s165 + $0x1f0] sm:$0xff]
      %v1067 = vld [vmem:[%s165 + $0x1f8] sm:$0xff]
      %v1068 = vld [vmem:[%s165 + $0x200] sm:$0xff]
      %v1069 = vld [vmem:[%s165 + $0x208] sm:$0xff]
      %v1070 = vld [vmem:[%s165 + $0x210] sm:$0xff]
      %v1071 = vld [vmem:[%s165 + $0x218] sm:$0xff]
      %v1072 = vld [vmem:[%s165 + $0x220] sm:$0xff]
      %v1073 = vld [vmem:[%s165 + $0x228] sm:$0xff]
      %v1074 = vpack.c.bf16 %v1043, %v1042
      %v1075 = vpack.c.bf16 %v1045, %v1044
      %v1076 = vpack.c.bf16 %v1047, %v1046
      %v1077 = vpack.c.bf16 %v1049, %v1048
      %v1078 = vpack.c.bf16 %v1051, %v1050
      %v1079 = vpack.c.bf16 %v1053, %v1052
      %v1080 = vpack.c.bf16 %v1055, %v1054
      %v1081 = vpack.c.bf16 %v1057, %v1056
      %v1082 = vpack.c.bf16 %v1059, %v1058
      %v1083 = vpack.c.bf16 %v1061, %v1060
      %v1084 = vpack.c.bf16 %v1063, %v1062
      %v1085 = vpack.c.bf16 %v1065, %v1064
      %v1086 = vpack.c.bf16 %v1067, %v1066
      %v1087 = vpack.c.bf16 %v1069, %v1068
      %v1088 = vpack.c.bf16 %v1071, %v1070
      %v1089 = vpack.c.bf16 %v1073, %v1072
      %s1090 = scalar_lea.vmem %s1, 256
      %v1091 = vld [vmem:[%s1090] sm:$0xf]
      %v1092 = vld [vmem:[%s1090 + $0x4] sm:$0xf]
      %v1093 = vld [vmem:[%s1090 + $0x8] sm:$0xf]
      %v1094 = vld [vmem:[%s1090 + $0xc] sm:$0xf]
      %v1095 = vld [vmem:[%s1090 + $0x10] sm:$0xf]
      %v1096 = vld [vmem:[%s1090 + $0x14] sm:$0xf]
      %v1097 = vld [vmem:[%s1090 + $0x18] sm:$0xf]
      %v1098 = vld [vmem:[%s1090 + $0x1c] sm:$0xf]
      %v1099 = vld [vmem:[%s1090 + $0x20] sm:$0xf]
      %v1100 = vld [vmem:[%s1090 + $0x24] sm:$0xf]
      %v1101 = vld [vmem:[%s1090 + $0x28] sm:$0xf]
      %v1102 = vld [vmem:[%s1090 + $0x2c] sm:$0xf]
      %v1103 = vld [vmem:[%s1090 + $0x30] sm:$0xf]
      %v1104 = vld [vmem:[%s1090 + $0x34] sm:$0xf]
      %v1105 = vld [vmem:[%s1090 + $0x38] sm:$0xf]
      %v1106 = vld [vmem:[%s1090 + $0x3c] sm:$0xf]
      %v1123 = vunpack.c.l.b16 %v1091
      %v1124 = vunpack.c.l.b16 %v1092
      %v1125 = vunpack.c.l.b16 %v1093
      %v1126 = vunpack.c.l.b16 %v1094
      %v1127 = vunpack.c.l.b16 %v1095
      %v1128 = vunpack.c.l.b16 %v1096
      %v1129 = vunpack.c.l.b16 %v1097
      %v1130 = vunpack.c.l.b16 %v1098
      %v1131 = vunpack.c.l.b16 %v1099
      %v1132 = vunpack.c.l.b16 %v1100
      %v1133 = vunpack.c.l.b16 %v1101
      %v1134 = vunpack.c.l.b16 %v1102
      %v1135 = vunpack.c.l.b16 %v1103
      %v1136 = vunpack.c.l.b16 %v1104
      %v1137 = vunpack.c.l.b16 %v1105
      %v1138 = vunpack.c.l.b16 %v1106
      %v1139 = vpack.c.b16 %v1124, %v1123
      %v1140 = vpack.c.b16 %v1126, %v1125
      %v1141 = vpack.c.b16 %v1128, %v1127
      %v1142 = vpack.c.b16 %v1130, %v1129
      %v1143 = vpack.c.b16 %v1132, %v1131
      %v1144 = vpack.c.b16 %v1134, %v1133
      %v1145 = vpack.c.b16 %v1136, %v1135
      %v1146 = vpack.c.b16 %v1138, %v1137
      %1155 = vmatpush.bf16.msra.mxu0 %v1146
      %1156 = vmatpush.bf16.msra.mxu0 %v1145
      %1157 = vmatpush.bf16.msra.mxu0 %v1144
      %1158 = vmatpush.bf16.msra.mxu0 %v1143
      %1159 = vmatpush.bf16.msra.mxu0 %v1142
      %1160 = vmatpush.bf16.msra.mxu0 %v1141
      %1161 = vmatpush.bf16.msra.mxu0 %v1140
      %1162 = vmatpush.bf16.msra.mxu0 %v1139
      %1163 = vmatmul.bf16.gmra.mxu0 %v1074
      %v1164 = vpop.f32.mrf.mxu0
      %v1165 = vadd.f32 0.0, %v1164
      %v1166 = vpop.f32.mrf.mxu0
      %v1167 = vadd.f32 0.0, %v1166
      %1168 = vmatmul.bf16.gmra.mxu0 %v1075
      %v1169 = vpop.f32.mrf.mxu0
      %v1170 = vadd.f32 0.0, %v1169
      %v1171 = vpop.f32.mrf.mxu0
      %v1172 = vadd.f32 0.0, %v1171
      %1173 = vmatmul.bf16.gmra.mxu0 %v1076
      %v1174 = vpop.f32.mrf.mxu0
      %v1175 = vadd.f32 0.0, %v1174
      %v1176 = vpop.f32.mrf.mxu0
      %v1177 = vadd.f32 0.0, %v1176
      %1178 = vmatmul.bf16.gmra.mxu0 %v1077
      %v1179 = vpop.f32.mrf.mxu0
      %v1180 = vadd.f32 0.0, %v1179
      %v1181 = vpop.f32.mrf.mxu0
      %v1182 = vadd.f32 0.0, %v1181
      %1183 = vmatmul.bf16.gmra.mxu0 %v1078
      %v1184 = vpop.f32.mrf.mxu0
      %v1185 = vadd.f32 0.0, %v1184
      %v1186 = vpop.f32.mrf.mxu0
      %v1187 = vadd.f32 0.0, %v1186
      %1188 = vmatmul.bf16.gmra.mxu0 %v1079
      %v1189 = vpop.f32.mrf.mxu0
      %v1190 = vadd.f32 0.0, %v1189
      %v1191 = vpop.f32.mrf.mxu0
      %v1192 = vadd.f32 0.0, %v1191
      %1193 = vmatmul.bf16.gmra.mxu0 %v1080
      %v1194 = vpop.f32.mrf.mxu0
      %v1195 = vadd.f32 0.0, %v1194
      %v1196 = vpop.f32.mrf.mxu0
      %v1197 = vadd.f32 0.0, %v1196
      %1198 = vmatmul.bf16.gmra.mxu0 %v1081
      %v1199 = vpop.f32.mrf.mxu0
      %v1200 = vadd.f32 0.0, %v1199
      %v1201 = vpop.f32.mrf.mxu0
      %v1202 = vadd.f32 0.0, %v1201
      %1203 = vmatmul.bf16.gmra.mxu0 %v1082
      %v1204 = vpop.f32.mrf.mxu0
      %v1205 = vadd.f32 0.0, %v1204
      %v1206 = vpop.f32.mrf.mxu0
      %v1207 = vadd.f32 0.0, %v1206
      %1208 = vmatmul.bf16.gmra.mxu0 %v1083
      %v1209 = vpop.f32.mrf.mxu0
      %v1210 = vadd.f32 0.0, %v1209
      %v1211 = vpop.f32.mrf.mxu0
      %v1212 = vadd.f32 0.0, %v1211
      %1213 = vmatmul.bf16.gmra.mxu0 %v1084
      %v1214 = vpop.f32.mrf.mxu0
      %v1215 = vadd.f32 0.0, %v1214
      %v1216 = vpop.f32.mrf.mxu0
      %v1217 = vadd.f32 0.0, %v1216
      %1218 = vmatmul.bf16.gmra.mxu0 %v1085
      %v1219 = vpop.f32.mrf.mxu0
      %v1220 = vadd.f32 0.0, %v1219
      %v1221 = vpop.f32.mrf.mxu0
      %v1222 = vadd.f32 0.0, %v1221
      %1223 = vmatmul.bf16.gmra.mxu0 %v1086
      %v1224 = vpop.f32.mrf.mxu0
      %v1225 = vadd.f32 0.0, %v1224
      %v1226 = vpop.f32.mrf.mxu0
      %v1227 = vadd.f32 0.0, %v1226
      %1228 = vmatmul.bf16.gmra.mxu0 %v1087
      %v1229 = vpop.f32.mrf.mxu0
      %v1230 = vadd.f32 0.0, %v1229
      %v1231 = vpop.f32.mrf.mxu0
      %v1232 = vadd.f32 0.0, %v1231
      %1233 = vmatmul.bf16.gmra.mxu0 %v1088
      %v1234 = vpop.f32.mrf.mxu0
      %v1235 = vadd.f32 0.0, %v1234
      %v1236 = vpop.f32.mrf.mxu0
      %v1237 = vadd.f32 0.0, %v1236
      %1238 = vmatmul.bf16.gmra.mxu0 %v1089
      %v1239 = vpop.f32.mrf.mxu0
      %v1240 = vadd.f32 0.0, %v1239
      %v1241 = vpop.f32.mrf.mxu0
      %v1242 = vadd.f32 0.0, %v1241
      %1243 = vdwg.mxu0
      %v1244 = vadd.f32 %v1010, %v1165
      %v1245 = vadd.f32 %v1011, %v1167
      %v1246 = vadd.f32 %v1012, %v1170
      %v1247 = vadd.f32 %v1013, %v1172
      %v1248 = vadd.f32 %v1014, %v1175
      %v1249 = vadd.f32 %v1015, %v1177
      %v1250 = vadd.f32 %v1016, %v1180
      %v1251 = vadd.f32 %v1017, %v1182
      %v1252 = vadd.f32 %v1018, %v1185
      %v1253 = vadd.f32 %v1019, %v1187
      %v1254 = vadd.f32 %v1020, %v1190
      %v1255 = vadd.f32 %v1021, %v1192
      %v1256 = vadd.f32 %v1022, %v1195
      %v1257 = vadd.f32 %v1023, %v1197
      %v1258 = vadd.f32 %v1024, %v1200
      %v1259 = vadd.f32 %v1025, %v1202
      %v1260 = vadd.f32 %v1026, %v1205
      %v1261 = vadd.f32 %v1027, %v1207
      %v1262 = vadd.f32 %v1028, %v1210
      %v1263 = vadd.f32 %v1029, %v1212
      %v1264 = vadd.f32 %v1030, %v1215
      %v1265 = vadd.f32 %v1031, %v1217
      %v1266 = vadd.f32 %v1032, %v1220
      %v1267 = vadd.f32 %v1033, %v1222
      %v1268 = vadd.f32 %v1034, %v1225
      %v1269 = vadd.f32 %v1035, %v1227
      %v1270 = vadd.f32 %v1036, %v1230
      %v1271 = vadd.f32 %v1037, %v1232
      %v1272 = vadd.f32 %v1038, %v1235
      %v1273 = vadd.f32 %v1039, %v1237
      %v1274 = vadd.f32 %v1040, %v1240
      %v1275 = vadd.f32 %v1041, %v1242
      %v1276 = vld [vmem:[%s165 + $0x250] sm:$0xff]
      %v1277 = vld [vmem:[%s165 + $0x258] sm:$0xff]
      %v1278 = vld [vmem:[%s165 + $0x260] sm:$0xff]
      %v1279 = vld [vmem:[%s165 + $0x268] sm:$0xff]
      %v1280 = vld [vmem:[%s165 + $0x270] sm:$0xff]
      %v1281 = vld [vmem:[%s165 + $0x278] sm:$0xff]
      %v1282 = vld [vmem:[%s165 + $0x280] sm:$0xff]
      %v1283 = vld [vmem:[%s165 + $0x288] sm:$0xff]
      %v1284 = vld [vmem:[%s165 + $0x290] sm:$0xff]
      %v1285 = vld [vmem:[%s165 + $0x298] sm:$0xff]
      %v1286 = vld [vmem:[%s165 + $0x2a0] sm:$0xff]
      %v1287 = vld [vmem:[%s165 + $0x2a8] sm:$0xff]
      %v1288 = vld [vmem:[%s165 + $0x2b0] sm:$0xff]
      %v1289 = vld [vmem:[%s165 + $0x2b8] sm:$0xff]
      %v1290 = vld [vmem:[%s165 + $0x2c0] sm:$0xff]
      %v1291 = vld [vmem:[%s165 + $0x2c8] sm:$0xff]
      %v1292 = vld [vmem:[%s165 + $0x2d0] sm:$0xff]
      %v1293 = vld [vmem:[%s165 + $0x2d8] sm:$0xff]
      %v1294 = vld [vmem:[%s165 + $0x2e0] sm:$0xff]
      %v1295 = vld [vmem:[%s165 + $0x2e8] sm:$0xff]
      %v1296 = vld [vmem:[%s165 + $0x2f0] sm:$0xff]
      %v1297 = vld [vmem:[%s165 + $0x2f8] sm:$0xff]
      %v1298 = vld [vmem:[%s165 + $0x300] sm:$0xff]
      %v1299 = vld [vmem:[%s165 + $0x308] sm:$0xff]
      %v1300 = vld [vmem:[%s165 + $0x310] sm:$0xff]
      %v1301 = vld [vmem:[%s165 + $0x318] sm:$0xff]
      %v1302 = vld [vmem:[%s165 + $0x320] sm:$0xff]
      %v1303 = vld [vmem:[%s165 + $0x328] sm:$0xff]
      %v1304 = vld [vmem:[%s165 + $0x330] sm:$0xff]
      %v1305 = vld [vmem:[%s165 + $0x338] sm:$0xff]
      %v1306 = vld [vmem:[%s165 + $0x340] sm:$0xff]
      %v1307 = vld [vmem:[%s165 + $0x348] sm:$0xff]
      %v1308 = vpack.c.bf16 %v1277, %v1276
      %v1309 = vpack.c.bf16 %v1279, %v1278
      %v1310 = vpack.c.bf16 %v1281, %v1280
      %v1311 = vpack.c.bf16 %v1283, %v1282
      %v1312 = vpack.c.bf16 %v1285, %v1284
      %v1313 = vpack.c.bf16 %v1287, %v1286
      %v1314 = vpack.c.bf16 %v1289, %v1288
      %v1315 = vpack.c.bf16 %v1291, %v1290
      %v1316 = vpack.c.bf16 %v1293, %v1292
      %v1317 = vpack.c.bf16 %v1295, %v1294
      %v1318 = vpack.c.bf16 %v1297, %v1296
      %v1319 = vpack.c.bf16 %v1299, %v1298
      %v1320 = vpack.c.bf16 %v1301, %v1300
      %v1321 = vpack.c.bf16 %v1303, %v1302
      %v1322 = vpack.c.bf16 %v1305, %v1304
      %v1323 = vpack.c.bf16 %v1307, %v1306
      %s1324 = scalar_lea.vmem %s1, 320
      %v1325 = vld [vmem:[%s1324] sm:$0xf]
      %v1326 = vld [vmem:[%s1324 + $0x4] sm:$0xf]
      %v1327 = vld [vmem:[%s1324 + $0x8] sm:$0xf]
      %v1328 = vld [vmem:[%s1324 + $0xc] sm:$0xf]
      %v1329 = vld [vmem:[%s1324 + $0x10] sm:$0xf]
      %v1330 = vld [vmem:[%s1324 + $0x14] sm:$0xf]
      %v1331 = vld [vmem:[%s1324 + $0x18] sm:$0xf]
      %v1332 = vld [vmem:[%s1324 + $0x1c] sm:$0xf]
      %v1333 = vld [vmem:[%s1324 + $0x20] sm:$0xf]
      %v1334 = vld [vmem:[%s1324 + $0x24] sm:$0xf]
      %v1335 = vld [vmem:[%s1324 + $0x28] sm:$0xf]
      %v1336 = vld [vmem:[%s1324 + $0x2c] sm:$0xf]
      %v1337 = vld [vmem:[%s1324 + $0x30] sm:$0xf]
      %v1338 = vld [vmem:[%s1324 + $0x34] sm:$0xf]
      %v1339 = vld [vmem:[%s1324 + $0x38] sm:$0xf]
      %v1340 = vld [vmem:[%s1324 + $0x3c] sm:$0xf]
      %v1357 = vunpack.c.l.b16 %v1325
      %v1358 = vunpack.c.l.b16 %v1326
      %v1359 = vunpack.c.l.b16 %v1327
      %v1360 = vunpack.c.l.b16 %v1328
      %v1361 = vunpack.c.l.b16 %v1329
      %v1362 = vunpack.c.l.b16 %v1330
      %v1363 = vunpack.c.l.b16 %v1331
      %v1364 = vunpack.c.l.b16 %v1332
      %v1365 = vunpack.c.l.b16 %v1333
      %v1366 = vunpack.c.l.b16 %v1334
      %v1367 = vunpack.c.l.b16 %v1335
      %v1368 = vunpack.c.l.b16 %v1336
      %v1369 = vunpack.c.l.b16 %v1337
      %v1370 = vunpack.c.l.b16 %v1338
      %v1371 = vunpack.c.l.b16 %v1339
      %v1372 = vunpack.c.l.b16 %v1340
      %v1373 = vpack.c.b16 %v1358, %v1357
      %v1374 = vpack.c.b16 %v1360, %v1359
      %v1375 = vpack.c.b16 %v1362, %v1361
      %v1376 = vpack.c.b16 %v1364, %v1363
      %v1377 = vpack.c.b16 %v1366, %v1365
      %v1378 = vpack.c.b16 %v1368, %v1367
      %v1379 = vpack.c.b16 %v1370, %v1369
      %v1380 = vpack.c.b16 %v1372, %v1371
      %1389 = vmatpush.bf16.msra.mxu0 %v1380
      %1390 = vmatpush.bf16.msra.mxu0 %v1379
      %1391 = vmatpush.bf16.msra.mxu0 %v1378
      %1392 = vmatpush.bf16.msra.mxu0 %v1377
      %1393 = vmatpush.bf16.msra.mxu0 %v1376
      %1394 = vmatpush.bf16.msra.mxu0 %v1375
      %1395 = vmatpush.bf16.msra.mxu0 %v1374
      %1396 = vmatpush.bf16.msra.mxu0 %v1373
      %1397 = vmatmul.bf16.gmra.mxu0 %v1308
      %v1398 = vpop.f32.mrf.mxu0
      %v1399 = vadd.f32 0.0, %v1398
      %v1400 = vpop.f32.mrf.mxu0
      %v1401 = vadd.f32 0.0, %v1400
      %1402 = vmatmul.bf16.gmra.mxu0 %v1309
      %v1403 = vpop.f32.mrf.mxu0
      %v1404 = vadd.f32 0.0, %v1403
      %v1405 = vpop.f32.mrf.mxu0
      %v1406 = vadd.f32 0.0, %v1405
      %1407 = vmatmul.bf16.gmra.mxu0 %v1310
      %v1408 = vpop.f32.mrf.mxu0
      %v1409 = vadd.f32 0.0, %v1408
      %v1410 = vpop.f32.mrf.mxu0
      %v1411 = vadd.f32 0.0, %v1410
      %1412 = vmatmul.bf16.gmra.mxu0 %v1311
      %v1413 = vpop.f32.mrf.mxu0
      %v1414 = vadd.f32 0.0, %v1413
      %v1415 = vpop.f32.mrf.mxu0
      %v1416 = vadd.f32 0.0, %v1415
      %1417 = vmatmul.bf16.gmra.mxu0 %v1312
      %v1418 = vpop.f32.mrf.mxu0
      %v1419 = vadd.f32 0.0, %v1418
      %v1420 = vpop.f32.mrf.mxu0
      %v1421 = vadd.f32 0.0, %v1420
      %1422 = vmatmul.bf16.gmra.mxu0 %v1313
      %v1423 = vpop.f32.mrf.mxu0
      %v1424 = vadd.f32 0.0, %v1423
      %v1425 = vpop.f32.mrf.mxu0
      %v1426 = vadd.f32 0.0, %v1425
      %1427 = vmatmul.bf16.gmra.mxu0 %v1314
      %v1428 = vpop.f32.mrf.mxu0
      %v1429 = vadd.f32 0.0, %v1428
      %v1430 = vpop.f32.mrf.mxu0
      %v1431 = vadd.f32 0.0, %v1430
      %1432 = vmatmul.bf16.gmra.mxu0 %v1315
      %v1433 = vpop.f32.mrf.mxu0
      %v1434 = vadd.f32 0.0, %v1433
      %v1435 = vpop.f32.mrf.mxu0
      %v1436 = vadd.f32 0.0, %v1435
      %1437 = vmatmul.bf16.gmra.mxu0 %v1316
      %v1438 = vpop.f32.mrf.mxu0
      %v1439 = vadd.f32 0.0, %v1438
      %v1440 = vpop.f32.mrf.mxu0
      %v1441 = vadd.f32 0.0, %v1440
      %1442 = vmatmul.bf16.gmra.mxu0 %v1317
      %v1443 = vpop.f32.mrf.mxu0
      %v1444 = vadd.f32 0.0, %v1443
      %v1445 = vpop.f32.mrf.mxu0
      %v1446 = vadd.f32 0.0, %v1445
      %1447 = vmatmul.bf16.gmra.mxu0 %v1318
      %v1448 = vpop.f32.mrf.mxu0
      %v1449 = vadd.f32 0.0, %v1448
      %v1450 = vpop.f32.mrf.mxu0
      %v1451 = vadd.f32 0.0, %v1450
      %1452 = vmatmul.bf16.gmra.mxu0 %v1319
      %v1453 = vpop.f32.mrf.mxu0
      %v1454 = vadd.f32 0.0, %v1453
      %v1455 = vpop.f32.mrf.mxu0
      %v1456 = vadd.f32 0.0, %v1455
      %1457 = vmatmul.bf16.gmra.mxu0 %v1320
      %v1458 = vpop.f32.mrf.mxu0
      %v1459 = vadd.f32 0.0, %v1458
      %v1460 = vpop.f32.mrf.mxu0
      %v1461 = vadd.f32 0.0, %v1460
      %1462 = vmatmul.bf16.gmra.mxu0 %v1321
      %v1463 = vpop.f32.mrf.mxu0
      %v1464 = vadd.f32 0.0, %v1463
      %v1465 = vpop.f32.mrf.mxu0
      %v1466 = vadd.f32 0.0, %v1465
      %1467 = vmatmul.bf16.gmra.mxu0 %v1322
      %v1468 = vpop.f32.mrf.mxu0
      %v1469 = vadd.f32 0.0, %v1468
      %v1470 = vpop.f32.mrf.mxu0
      %v1471 = vadd.f32 0.0, %v1470
      %1472 = vmatmul.bf16.gmra.mxu0 %v1323
      %v1473 = vpop.f32.mrf.mxu0
      %v1474 = vadd.f32 0.0, %v1473
      %v1475 = vpop.f32.mrf.mxu0
      %v1476 = vadd.f32 0.0, %v1475
      %1477 = vdwg.mxu0
      %v1478 = vadd.f32 %v1244, %v1399
      %v1479 = vadd.f32 %v1245, %v1401
      %v1480 = vadd.f32 %v1246, %v1404
      %v1481 = vadd.f32 %v1247, %v1406
      %v1482 = vadd.f32 %v1248, %v1409
      %v1483 = vadd.f32 %v1249, %v1411
      %v1484 = vadd.f32 %v1250, %v1414
      %v1485 = vadd.f32 %v1251, %v1416
      %v1486 = vadd.f32 %v1252, %v1419
      %v1487 = vadd.f32 %v1253, %v1421
      %v1488 = vadd.f32 %v1254, %v1424
      %v1489 = vadd.f32 %v1255, %v1426
      %v1490 = vadd.f32 %v1256, %v1429
      %v1491 = vadd.f32 %v1257, %v1431
      %v1492 = vadd.f32 %v1258, %v1434
      %v1493 = vadd.f32 %v1259, %v1436
      %v1494 = vadd.f32 %v1260, %v1439
      %v1495 = vadd.f32 %v1261, %v1441
      %v1496 = vadd.f32 %v1262, %v1444
      %v1497 = vadd.f32 %v1263, %v1446
      %v1498 = vadd.f32 %v1264, %v1449
      %v1499 = vadd.f32 %v1265, %v1451
      %v1500 = vadd.f32 %v1266, %v1454
      %v1501 = vadd.f32 %v1267, %v1456
      %v1502 = vadd.f32 %v1268, %v1459
      %v1503 = vadd.f32 %v1269, %v1461
      %v1504 = vadd.f32 %v1270, %v1464
      %v1505 = vadd.f32 %v1271, %v1466
      %v1506 = vadd.f32 %v1272, %v1469
      %v1507 = vadd.f32 %v1273, %v1471
      %v1508 = vadd.f32 %v1274, %v1474
      %v1509 = vadd.f32 %v1275, %v1476
      %v1510 = vld [vmem:[%s165 + $0x20] sm:$0xff]
      %v1511 = vld [vmem:[%s165 + $0x28] sm:$0xff]
      %v1512 = vld [vmem:[%s165 + $0x30] sm:$0xff]
      %v1513 = vld [vmem:[%s165 + $0x38] sm:$0xff]
      %v1514 = vld [vmem:[%s165 + $0x40] sm:$0xff]
      %v1515 = vld [vmem:[%s165 + $0x48] sm:$0xff]
      %v1516 = vld [vmem:[%s165 + $0x50] sm:$0xff]
      %v1517 = vld [vmem:[%s165 + $0x58] sm:$0xff]
      %v1518 = vld [vmem:[%s165 + $0x60] sm:$0xff]
      %v1519 = vld [vmem:[%s165 + $0x68] sm:$0xff]
      %v1520 = vld [vmem:[%s165 + $0x70] sm:$0xff]
      %v1521 = vld [vmem:[%s165 + $0x78] sm:$0xff]
      %v1522 = vld [vmem:[%s165 + $0x80] sm:$0xff]
      %v1523 = vld [vmem:[%s165 + $0x88] sm:$0xff]
      %v1524 = vld [vmem:[%s165 + $0x90] sm:$0xff]
      %v1525 = vld [vmem:[%s165 + $0x98] sm:$0xff]
      %v1526 = vld [vmem:[%s165 + $0xa0] sm:$0xff]
      %v1527 = vld [vmem:[%s165 + $0xa8] sm:$0xff]
      %v1528 = vld [vmem:[%s165 + $0xb0] sm:$0xff]
      %v1529 = vld [vmem:[%s165 + $0xb8] sm:$0xff]
      %v1530 = vld [vmem:[%s165 + $0xc0] sm:$0xff]
      %v1531 = vld [vmem:[%s165 + $0xc8] sm:$0xff]
      %v1532 = vld [vmem:[%s165 + $0xd0] sm:$0xff]
      %v1533 = vld [vmem:[%s165 + $0xd8] sm:$0xff]
      %v1534 = vld [vmem:[%s165 + $0xe0] sm:$0xff]
      %v1535 = vld [vmem:[%s165 + $0xe8] sm:$0xff]
      %v1536 = vld [vmem:[%s165 + $0xf0] sm:$0xff]
      %v1537 = vld [vmem:[%s165 + $0xf8] sm:$0xff]
      %v1538 = vld [vmem:[%s165 + $0x100] sm:$0xff]
      %v1539 = vld [vmem:[%s165 + $0x108] sm:$0xff]
      %v1540 = vld [vmem:[%s165 + $0x110] sm:$0xff]
      %v1541 = vld [vmem:[%s165 + $0x118] sm:$0xff]
      %v1542 = vpack.c.bf16 %v1511, %v1510
      %v1543 = vpack.c.bf16 %v1513, %v1512
      %v1544 = vpack.c.bf16 %v1515, %v1514
      %v1545 = vpack.c.bf16 %v1517, %v1516
      %v1546 = vpack.c.bf16 %v1519, %v1518
      %v1547 = vpack.c.bf16 %v1521, %v1520
      %v1548 = vpack.c.bf16 %v1523, %v1522
      %v1549 = vpack.c.bf16 %v1525, %v1524
      %v1550 = vpack.c.bf16 %v1527, %v1526
      %v1551 = vpack.c.bf16 %v1529, %v1528
      %v1552 = vpack.c.bf16 %v1531, %v1530
      %v1553 = vpack.c.bf16 %v1533, %v1532
      %v1554 = vpack.c.bf16 %v1535, %v1534
      %v1555 = vpack.c.bf16 %v1537, %v1536
      %v1556 = vpack.c.bf16 %v1539, %v1538
      %v1557 = vpack.c.bf16 %v1541, %v1540
      %s1558 = scalar_lea.vmem %s1, 384
      %v1559 = vld [vmem:[%s1558] sm:$0xf]
      %v1560 = vld [vmem:[%s1558 + $0x4] sm:$0xf]
      %v1561 = vld [vmem:[%s1558 + $0x8] sm:$0xf]
      %v1562 = vld [vmem:[%s1558 + $0xc] sm:$0xf]
      %v1563 = vld [vmem:[%s1558 + $0x10] sm:$0xf]
      %v1564 = vld [vmem:[%s1558 + $0x14] sm:$0xf]
      %v1565 = vld [vmem:[%s1558 + $0x18] sm:$0xf]
      %v1566 = vld [vmem:[%s1558 + $0x1c] sm:$0xf]
      %v1567 = vld [vmem:[%s1558 + $0x20] sm:$0xf]
      %v1568 = vld [vmem:[%s1558 + $0x24] sm:$0xf]
      %v1569 = vld [vmem:[%s1558 + $0x28] sm:$0xf]
      %v1570 = vld [vmem:[%s1558 + $0x2c] sm:$0xf]
      %v1571 = vld [vmem:[%s1558 + $0x30] sm:$0xf]
      %v1572 = vld [vmem:[%s1558 + $0x34] sm:$0xf]
      %v1573 = vld [vmem:[%s1558 + $0x38] sm:$0xf]
      %v1574 = vld [vmem:[%s1558 + $0x3c] sm:$0xf]
      %v1591 = vunpack.c.l.b16 %v1559
      %v1592 = vunpack.c.l.b16 %v1560
      %v1593 = vunpack.c.l.b16 %v1561
      %v1594 = vunpack.c.l.b16 %v1562
      %v1595 = vunpack.c.l.b16 %v1563
      %v1596 = vunpack.c.l.b16 %v1564
      %v1597 = vunpack.c.l.b16 %v1565
      %v1598 = vunpack.c.l.b16 %v1566
      %v1599 = vunpack.c.l.b16 %v1567
      %v1600 = vunpack.c.l.b16 %v1568
      %v1601 = vunpack.c.l.b16 %v1569
      %v1602 = vunpack.c.l.b16 %v1570
      %v1603 = vunpack.c.l.b16 %v1571
      %v1604 = vunpack.c.l.b16 %v1572
      %v1605 = vunpack.c.l.b16 %v1573
      %v1606 = vunpack.c.l.b16 %v1574
      %v1607 = vpack.c.b16 %v1592, %v1591
      %v1608 = vpack.c.b16 %v1594, %v1593
      %v1609 = vpack.c.b16 %v1596, %v1595
      %v1610 = vpack.c.b16 %v1598, %v1597
      %v1611 = vpack.c.b16 %v1600, %v1599
      %v1612 = vpack.c.b16 %v1602, %v1601
      %v1613 = vpack.c.b16 %v1604, %v1603
      %v1614 = vpack.c.b16 %v1606, %v1605
      %1623 = vmatpush.bf16.msra.mxu0 %v1614
      %1624 = vmatpush.bf16.msra.mxu0 %v1613
      %1625 = vmatpush.bf16.msra.mxu0 %v1612
      %1626 = vmatpush.bf16.msra.mxu0 %v1611
      %1627 = vmatpush.bf16.msra.mxu0 %v1610
      %1628 = vmatpush.bf16.msra.mxu0 %v1609
      %1629 = vmatpush.bf16.msra.mxu0 %v1608
      %1630 = vmatpush.bf16.msra.mxu0 %v1607
      %1631 = vmatmul.bf16.gmra.mxu0 %v1542
      %v1632 = vpop.f32.mrf.mxu0
      %v1633 = vadd.f32 0.0, %v1632
      %v1634 = vpop.f32.mrf.mxu0
      %v1635 = vadd.f32 0.0, %v1634
      %1636 = vmatmul.bf16.gmra.mxu0 %v1543
      %v1637 = vpop.f32.mrf.mxu0
      %v1638 = vadd.f32 0.0, %v1637
      %v1639 = vpop.f32.mrf.mxu0
      %v1640 = vadd.f32 0.0, %v1639
      %1641 = vmatmul.bf16.gmra.mxu0 %v1544
      %v1642 = vpop.f32.mrf.mxu0
      %v1643 = vadd.f32 0.0, %v1642
      %v1644 = vpop.f32.mrf.mxu0
      %v1645 = vadd.f32 0.0, %v1644
      %1646 = vmatmul.bf16.gmra.mxu0 %v1545
      %v1647 = vpop.f32.mrf.mxu0
      %v1648 = vadd.f32 0.0, %v1647
      %v1649 = vpop.f32.mrf.mxu0
      %v1650 = vadd.f32 0.0, %v1649
      %1651 = vmatmul.bf16.gmra.mxu0 %v1546
      %v1652 = vpop.f32.mrf.mxu0
      %v1653 = vadd.f32 0.0, %v1652
      %v1654 = vpop.f32.mrf.mxu0
      %v1655 = vadd.f32 0.0, %v1654
      %1656 = vmatmul.bf16.gmra.mxu0 %v1547
      %v1657 = vpop.f32.mrf.mxu0
      %v1658 = vadd.f32 0.0, %v1657
      %v1659 = vpop.f32.mrf.mxu0
      %v1660 = vadd.f32 0.0, %v1659
      %1661 = vmatmul.bf16.gmra.mxu0 %v1548
      %v1662 = vpop.f32.mrf.mxu0
      %v1663 = vadd.f32 0.0, %v1662
      %v1664 = vpop.f32.mrf.mxu0
      %v1665 = vadd.f32 0.0, %v1664
      %1666 = vmatmul.bf16.gmra.mxu0 %v1549
      %v1667 = vpop.f32.mrf.mxu0
      %v1668 = vadd.f32 0.0, %v1667
      %v1669 = vpop.f32.mrf.mxu0
      %v1670 = vadd.f32 0.0, %v1669
      %1671 = vmatmul.bf16.gmra.mxu0 %v1550
      %v1672 = vpop.f32.mrf.mxu0
      %v1673 = vadd.f32 0.0, %v1672
      %v1674 = vpop.f32.mrf.mxu0
      %v1675 = vadd.f32 0.0, %v1674
      %1676 = vmatmul.bf16.gmra.mxu0 %v1551
      %v1677 = vpop.f32.mrf.mxu0
      %v1678 = vadd.f32 0.0, %v1677
      %v1679 = vpop.f32.mrf.mxu0
      %v1680 = vadd.f32 0.0, %v1679
      %1681 = vmatmul.bf16.gmra.mxu0 %v1552
      %v1682 = vpop.f32.mrf.mxu0
      %v1683 = vadd.f32 0.0, %v1682
      %v1684 = vpop.f32.mrf.mxu0
      %v1685 = vadd.f32 0.0, %v1684
      %1686 = vmatmul.bf16.gmra.mxu0 %v1553
      %v1687 = vpop.f32.mrf.mxu0
      %v1688 = vadd.f32 0.0, %v1687
      %v1689 = vpop.f32.mrf.mxu0
      %v1690 = vadd.f32 0.0, %v1689
      %1691 = vmatmul.bf16.gmra.mxu0 %v1554
      %v1692 = vpop.f32.mrf.mxu0
      %v1693 = vadd.f32 0.0, %v1692
      %v1694 = vpop.f32.mrf.mxu0
      %v1695 = vadd.f32 0.0, %v1694
      %1696 = vmatmul.bf16.gmra.mxu0 %v1555
      %v1697 = vpop.f32.mrf.mxu0
      %v1698 = vadd.f32 0.0, %v1697
      %v1699 = vpop.f32.mrf.mxu0
      %v1700 = vadd.f32 0.0, %v1699
      %1701 = vmatmul.bf16.gmra.mxu0 %v1556
      %v1702 = vpop.f32.mrf.mxu0
      %v1703 = vadd.f32 0.0, %v1702
      %v1704 = vpop.f32.mrf.mxu0
      %v1705 = vadd.f32 0.0, %v1704
      %1706 = vmatmul.bf16.gmra.mxu0 %v1557
      %v1707 = vpop.f32.mrf.mxu0
      %v1708 = vadd.f32 0.0, %v1707
      %v1709 = vpop.f32.mrf.mxu0
      %v1710 = vadd.f32 0.0, %v1709
      %1711 = vdwg.mxu0
      %v1712 = vadd.f32 %v1478, %v1633
      %v1713 = vadd.f32 %v1479, %v1635
      %v1714 = vadd.f32 %v1480, %v1638
      %v1715 = vadd.f32 %v1481, %v1640
      %v1716 = vadd.f32 %v1482, %v1643
      %v1717 = vadd.f32 %v1483, %v1645
      %v1718 = vadd.f32 %v1484, %v1648
      %v1719 = vadd.f32 %v1485, %v1650
      %v1720 = vadd.f32 %v1486, %v1653
      %v1721 = vadd.f32 %v1487, %v1655
      %v1722 = vadd.f32 %v1488, %v1658
      %v1723 = vadd.f32 %v1489, %v1660
      %v1724 = vadd.f32 %v1490, %v1663
      %v1725 = vadd.f32 %v1491, %v1665
      %v1726 = vadd.f32 %v1492, %v1668
      %v1727 = vadd.f32 %v1493, %v1670
      %v1728 = vadd.f32 %v1494, %v1673
      %v1729 = vadd.f32 %v1495, %v1675
      %v1730 = vadd.f32 %v1496, %v1678
      %v1731 = vadd.f32 %v1497, %v1680
      %v1732 = vadd.f32 %v1498, %v1683
      %v1733 = vadd.f32 %v1499, %v1685
      %v1734 = vadd.f32 %v1500, %v1688
      %v1735 = vadd.f32 %v1501, %v1690
      %v1736 = vadd.f32 %v1502, %v1693
      %v1737 = vadd.f32 %v1503, %v1695
      %v1738 = vadd.f32 %v1504, %v1698
      %v1739 = vadd.f32 %v1505, %v1700
      %v1740 = vadd.f32 %v1506, %v1703
      %v1741 = vadd.f32 %v1507, %v1705
      %v1742 = vadd.f32 %v1508, %v1708
      %v1743 = vadd.f32 %v1509, %v1710
      %v1744 = vld [vmem:[%s165 + $0x140] sm:$0xff]
      %v1745 = vld [vmem:[%s165 + $0x148] sm:$0xff]
      %v1746 = vld [vmem:[%s165 + $0x150] sm:$0xff]
      %v1747 = vld [vmem:[%s165 + $0x158] sm:$0xff]
      %v1748 = vld [vmem:[%s165 + $0x160] sm:$0xff]
      %v1749 = vld [vmem:[%s165 + $0x168] sm:$0xff]
      %v1750 = vld [vmem:[%s165 + $0x170] sm:$0xff]
      %v1751 = vld [vmem:[%s165 + $0x178] sm:$0xff]
      %v1752 = vld [vmem:[%s165 + $0x180] sm:$0xff]
      %v1753 = vld [vmem:[%s165 + $0x188] sm:$0xff]
      %v1754 = vld [vmem:[%s165 + $0x190] sm:$0xff]
      %v1755 = vld [vmem:[%s165 + $0x198] sm:$0xff]
      %v1756 = vld [vmem:[%s165 + $0x1a0] sm:$0xff]
      %v1757 = vld [vmem:[%s165 + $0x1a8] sm:$0xff]
      %v1758 = vld [vmem:[%s165 + $0x1b0] sm:$0xff]
      %v1759 = vld [vmem:[%s165 + $0x1b8] sm:$0xff]
      %v1760 = vld [vmem:[%s165 + $0x1c0] sm:$0xff]
      %v1761 = vld [vmem:[%s165 + $0x1c8] sm:$0xff]
      %v1762 = vld [vmem:[%s165 + $0x1d0] sm:$0xff]
      %v1763 = vld [vmem:[%s165 + $0x1d8] sm:$0xff]
      %v1764 = vld [vmem:[%s165 + $0x1e0] sm:$0xff]
      %v1765 = vld [vmem:[%s165 + $0x1e8] sm:$0xff]
      %v1766 = vld [vmem:[%s165 + $0x1f0] sm:$0xff]
      %v1767 = vld [vmem:[%s165 + $0x1f8] sm:$0xff]
      %v1768 = vld [vmem:[%s165 + $0x200] sm:$0xff]
      %v1769 = vld [vmem:[%s165 + $0x208] sm:$0xff]
      %v1770 = vld [vmem:[%s165 + $0x210] sm:$0xff]
      %v1771 = vld [vmem:[%s165 + $0x218] sm:$0xff]
      %v1772 = vld [vmem:[%s165 + $0x220] sm:$0xff]
      %v1773 = vld [vmem:[%s165 + $0x228] sm:$0xff]
      %v1774 = vld [vmem:[%s165 + $0x230] sm:$0xff]
      %v1775 = vld [vmem:[%s165 + $0x238] sm:$0xff]
      %v1776 = vpack.c.bf16 %v1745, %v1744
      %v1777 = vpack.c.bf16 %v1747, %v1746
      %v1778 = vpack.c.bf16 %v1749, %v1748
      %v1779 = vpack.c.bf16 %v1751, %v1750
      %v1780 = vpack.c.bf16 %v1753, %v1752
      %v1781 = vpack.c.bf16 %v1755, %v1754
      %v1782 = vpack.c.bf16 %v1757, %v1756
      %v1783 = vpack.c.bf16 %v1759, %v1758
      %v1784 = vpack.c.bf16 %v1761, %v1760
      %v1785 = vpack.c.bf16 %v1763, %v1762
      %v1786 = vpack.c.bf16 %v1765, %v1764
      %v1787 = vpack.c.bf16 %v1767, %v1766
      %v1788 = vpack.c.bf16 %v1769, %v1768
      %v1789 = vpack.c.bf16 %v1771, %v1770
      %v1790 = vpack.c.bf16 %v1773, %v1772
      %v1791 = vpack.c.bf16 %v1775, %v1774
      %s1792 = scalar_lea.vmem %s1, 448
      %v1793 = vld [vmem:[%s1792] sm:$0xf]
      %v1794 = vld [vmem:[%s1792 + $0x4] sm:$0xf]
      %v1795 = vld [vmem:[%s1792 + $0x8] sm:$0xf]
      %v1796 = vld [vmem:[%s1792 + $0xc] sm:$0xf]
      %v1797 = vld [vmem:[%s1792 + $0x10] sm:$0xf]
      %v1798 = vld [vmem:[%s1792 + $0x14] sm:$0xf]
      %v1799 = vld [vmem:[%s1792 + $0x18] sm:$0xf]
      %v1800 = vld [vmem:[%s1792 + $0x1c] sm:$0xf]
      %v1801 = vld [vmem:[%s1792 + $0x20] sm:$0xf]
      %v1802 = vld [vmem:[%s1792 + $0x24] sm:$0xf]
      %v1803 = vld [vmem:[%s1792 + $0x28] sm:$0xf]
      %v1804 = vld [vmem:[%s1792 + $0x2c] sm:$0xf]
      %v1805 = vld [vmem:[%s1792 + $0x30] sm:$0xf]
      %v1806 = vld [vmem:[%s1792 + $0x34] sm:$0xf]
      %v1807 = vld [vmem:[%s1792 + $0x38] sm:$0xf]
      %v1808 = vld [vmem:[%s1792 + $0x3c] sm:$0xf]
      %v1825 = vunpack.c.l.b16 %v1793
      %v1826 = vunpack.c.l.b16 %v1794
      %v1827 = vunpack.c.l.b16 %v1795
      %v1828 = vunpack.c.l.b16 %v1796
      %v1829 = vunpack.c.l.b16 %v1797
      %v1830 = vunpack.c.l.b16 %v1798
      %v1831 = vunpack.c.l.b16 %v1799
      %v1832 = vunpack.c.l.b16 %v1800
      %v1833 = vunpack.c.l.b16 %v1801
      %v1834 = vunpack.c.l.b16 %v1802
      %v1835 = vunpack.c.l.b16 %v1803
      %v1836 = vunpack.c.l.b16 %v1804
      %v1837 = vunpack.c.l.b16 %v1805
      %v1838 = vunpack.c.l.b16 %v1806
      %v1839 = vunpack.c.l.b16 %v1807
      %v1840 = vunpack.c.l.b16 %v1808
      %v1841 = vpack.c.b16 %v1826, %v1825
      %v1842 = vpack.c.b16 %v1828, %v1827
      %v1843 = vpack.c.b16 %v1830, %v1829
      %v1844 = vpack.c.b16 %v1832, %v1831
      %v1845 = vpack.c.b16 %v1834, %v1833
      %v1846 = vpack.c.b16 %v1836, %v1835
      %v1847 = vpack.c.b16 %v1838, %v1837
      %v1848 = vpack.c.b16 %v1840, %v1839
      %1857 = vmatpush.bf16.msra.mxu0 %v1848
      %1858 = vmatpush.bf16.msra.mxu0 %v1847
      %1859 = vmatpush.bf16.msra.mxu0 %v1846
      %1860 = vmatpush.bf16.msra.mxu0 %v1845
      %1861 = vmatpush.bf16.msra.mxu0 %v1844
      %1862 = vmatpush.bf16.msra.mxu0 %v1843
      %1863 = vmatpush.bf16.msra.mxu0 %v1842
      %1864 = vmatpush.bf16.msra.mxu0 %v1841
      %1865 = vmatmul.bf16.gmra.mxu0 %v1776
      %v1866 = vpop.f32.mrf.mxu0
      %v1867 = vadd.f32 0.0, %v1866
      %v1868 = vpop.f32.mrf.mxu0
      %v1869 = vadd.f32 0.0, %v1868
      %1870 = vmatmul.bf16.gmra.mxu0 %v1777
      %v1871 = vpop.f32.mrf.mxu0
      %v1872 = vadd.f32 0.0, %v1871
      %v1873 = vpop.f32.mrf.mxu0
      %v1874 = vadd.f32 0.0, %v1873
      %1875 = vmatmul.bf16.gmra.mxu0 %v1778
      %v1876 = vpop.f32.mrf.mxu0
      %v1877 = vadd.f32 0.0, %v1876
      %v1878 = vpop.f32.mrf.mxu0
      %v1879 = vadd.f32 0.0, %v1878
      %1880 = vmatmul.bf16.gmra.mxu0 %v1779
      %v1881 = vpop.f32.mrf.mxu0
      %v1882 = vadd.f32 0.0, %v1881
      %v1883 = vpop.f32.mrf.mxu0
      %v1884 = vadd.f32 0.0, %v1883
      %1885 = vmatmul.bf16.gmra.mxu0 %v1780
      %v1886 = vpop.f32.mrf.mxu0
      %v1887 = vadd.f32 0.0, %v1886
      %v1888 = vpop.f32.mrf.mxu0
      %v1889 = vadd.f32 0.0, %v1888
      %1890 = vmatmul.bf16.gmra.mxu0 %v1781
      %v1891 = vpop.f32.mrf.mxu0
      %v1892 = vadd.f32 0.0, %v1891
      %v1893 = vpop.f32.mrf.mxu0
      %v1894 = vadd.f32 0.0, %v1893
      %1895 = vmatmul.bf16.gmra.mxu0 %v1782
      %v1896 = vpop.f32.mrf.mxu0
      %v1897 = vadd.f32 0.0, %v1896
      %v1898 = vpop.f32.mrf.mxu0
      %v1899 = vadd.f32 0.0, %v1898
      %1900 = vmatmul.bf16.gmra.mxu0 %v1783
      %v1901 = vpop.f32.mrf.mxu0
      %v1902 = vadd.f32 0.0, %v1901
      %v1903 = vpop.f32.mrf.mxu0
      %v1904 = vadd.f32 0.0, %v1903
      %1905 = vmatmul.bf16.gmra.mxu0 %v1784
      %v1906 = vpop.f32.mrf.mxu0
      %v1907 = vadd.f32 0.0, %v1906
      %v1908 = vpop.f32.mrf.mxu0
      %v1909 = vadd.f32 0.0, %v1908
      %1910 = vmatmul.bf16.gmra.mxu0 %v1785
      %v1911 = vpop.f32.mrf.mxu0
      %v1912 = vadd.f32 0.0, %v1911
      %v1913 = vpop.f32.mrf.mxu0
      %v1914 = vadd.f32 0.0, %v1913
      %1915 = vmatmul.bf16.gmra.mxu0 %v1786
      %v1916 = vpop.f32.mrf.mxu0
      %v1917 = vadd.f32 0.0, %v1916
      %v1918 = vpop.f32.mrf.mxu0
      %v1919 = vadd.f32 0.0, %v1918
      %1920 = vmatmul.bf16.gmra.mxu0 %v1787
      %v1921 = vpop.f32.mrf.mxu0
      %v1922 = vadd.f32 0.0, %v1921
      %v1923 = vpop.f32.mrf.mxu0
      %v1924 = vadd.f32 0.0, %v1923
      %1925 = vmatmul.bf16.gmra.mxu0 %v1788
      %v1926 = vpop.f32.mrf.mxu0
      %v1927 = vadd.f32 0.0, %v1926
      %v1928 = vpop.f32.mrf.mxu0
      %v1929 = vadd.f32 0.0, %v1928
      %1930 = vmatmul.bf16.gmra.mxu0 %v1789
      %v1931 = vpop.f32.mrf.mxu0
      %v1932 = vadd.f32 0.0, %v1931
      %v1933 = vpop.f32.mrf.mxu0
      %v1934 = vadd.f32 0.0, %v1933
      %1935 = vmatmul.bf16.gmra.mxu0 %v1790
      %v1936 = vpop.f32.mrf.mxu0
      %v1937 = vadd.f32 0.0, %v1936
      %v1938 = vpop.f32.mrf.mxu0
      %v1939 = vadd.f32 0.0, %v1938
      %1940 = vmatmul.bf16.gmra.mxu0 %v1791
      %v1941 = vpop.f32.mrf.mxu0
      %v1942 = vadd.f32 0.0, %v1941
      %v1943 = vpop.f32.mrf.mxu0
      %v1944 = vadd.f32 0.0, %v1943
      %1945 = vdwg.mxu0
      %v1946 = vadd.f32 %v1712, %v1867
      %v1947 = vadd.f32 %v1713, %v1869
      %v1948 = vadd.f32 %v1714, %v1872
      %v1949 = vadd.f32 %v1715, %v1874
      %v1950 = vadd.f32 %v1716, %v1877
      %v1951 = vadd.f32 %v1717, %v1879
      %v1952 = vadd.f32 %v1718, %v1882
      %v1953 = vadd.f32 %v1719, %v1884
      %v1954 = vadd.f32 %v1720, %v1887
      %v1955 = vadd.f32 %v1721, %v1889
      %v1956 = vadd.f32 %v1722, %v1892
      %v1957 = vadd.f32 %v1723, %v1894
      %v1958 = vadd.f32 %v1724, %v1897
      %v1959 = vadd.f32 %v1725, %v1899
      %v1960 = vadd.f32 %v1726, %v1902
      %v1961 = vadd.f32 %v1727, %v1904
      %v1962 = vadd.f32 %v1728, %v1907
      %v1963 = vadd.f32 %v1729, %v1909
      %v1964 = vadd.f32 %v1730, %v1912
      %v1965 = vadd.f32 %v1731, %v1914
      %v1966 = vadd.f32 %v1732, %v1917
      %v1967 = vadd.f32 %v1733, %v1919
      %v1968 = vadd.f32 %v1734, %v1922
      %v1969 = vadd.f32 %v1735, %v1924
      %v1970 = vadd.f32 %v1736, %v1927
      %v1971 = vadd.f32 %v1737, %v1929
      %v1972 = vadd.f32 %v1738, %v1932
      %v1973 = vadd.f32 %v1739, %v1934
      %v1974 = vadd.f32 %v1740, %v1937
      %v1975 = vadd.f32 %v1741, %v1939
      %v1976 = vadd.f32 %v1742, %v1942
      %v1977 = vadd.f32 %v1743, %v1944
      %v1978 = vld [vmem:[%s165 + $0x260] sm:$0xff]
      %v1979 = vld [vmem:[%s165 + $0x268] sm:$0xff]
      %v1980 = vld [vmem:[%s165 + $0x270] sm:$0xff]
      %v1981 = vld [vmem:[%s165 + $0x278] sm:$0xff]
      %v1982 = vld [vmem:[%s165 + $0x280] sm:$0xff]
      %v1983 = vld [vmem:[%s165 + $0x288] sm:$0xff]
      %v1984 = vld [vmem:[%s165 + $0x290] sm:$0xff]
      %v1985 = vld [vmem:[%s165 + $0x298] sm:$0xff]
      %v1986 = vld [vmem:[%s165 + $0x2a0] sm:$0xff]
      %v1987 = vld [vmem:[%s165 + $0x2a8] sm:$0xff]
      %v1988 = vld [vmem:[%s165 + $0x2b0] sm:$0xff]
      %v1989 = vld [vmem:[%s165 + $0x2b8] sm:$0xff]
      %v1990 = vld [vmem:[%s165 + $0x2c0] sm:$0xff]
      %v1991 = vld [vmem:[%s165 + $0x2c8] sm:$0xff]
      %v1992 = vld [vmem:[%s165 + $0x2d0] sm:$0xff]
      %v1993 = vld [vmem:[%s165 + $0x2d8] sm:$0xff]
      %v1994 = vld [vmem:[%s165 + $0x2e0] sm:$0xff]
      %v1995 = vld [vmem:[%s165 + $0x2e8] sm:$0xff]
      %v1996 = vld [vmem:[%s165 + $0x2f0] sm:$0xff]
      %v1997 = vld [vmem:[%s165 + $0x2f8] sm:$0xff]
      %v1998 = vld [vmem:[%s165 + $0x300] sm:$0xff]
      %v1999 = vld [vmem:[%s165 + $0x308] sm:$0xff]
      %v2000 = vld [vmem:[%s165 + $0x310] sm:$0xff]
      %v2001 = vld [vmem:[%s165 + $0x318] sm:$0xff]
      %v2002 = vld [vmem:[%s165 + $0x320] sm:$0xff]
      %v2003 = vld [vmem:[%s165 + $0x328] sm:$0xff]
      %v2004 = vld [vmem:[%s165 + $0x330] sm:$0xff]
      %v2005 = vld [vmem:[%s165 + $0x338] sm:$0xff]
      %v2006 = vld [vmem:[%s165 + $0x340] sm:$0xff]
      %v2007 = vld [vmem:[%s165 + $0x348] sm:$0xff]
      %v2008 = vld [vmem:[%s165 + $0x350] sm:$0xff]
      %v2009 = vld [vmem:[%s165 + $0x358] sm:$0xff]
      %v2010 = vpack.c.bf16 %v1979, %v1978
      %v2011 = vpack.c.bf16 %v1981, %v1980
      %v2012 = vpack.c.bf16 %v1983, %v1982
      %v2013 = vpack.c.bf16 %v1985, %v1984
      %v2014 = vpack.c.bf16 %v1987, %v1986
      %v2015 = vpack.c.bf16 %v1989, %v1988
      %v2016 = vpack.c.bf16 %v1991, %v1990
      %v2017 = vpack.c.bf16 %v1993, %v1992
      %v2018 = vpack.c.bf16 %v1995, %v1994
      %v2019 = vpack.c.bf16 %v1997, %v1996
      %v2020 = vpack.c.bf16 %v1999, %v1998
      %v2021 = vpack.c.bf16 %v2001, %v2000
      %v2022 = vpack.c.bf16 %v2003, %v2002
      %v2023 = vpack.c.bf16 %v2005, %v2004
      %v2024 = vpack.c.bf16 %v2007, %v2006
      %v2025 = vpack.c.bf16 %v2009, %v2008
      %s2026 = scalar_lea.vmem %s1, 512
      %v2027 = vld [vmem:[%s2026] sm:$0xf]
      %v2028 = vld [vmem:[%s2026 + $0x4] sm:$0xf]
      %v2029 = vld [vmem:[%s2026 + $0x8] sm:$0xf]
      %v2030 = vld [vmem:[%s2026 + $0xc] sm:$0xf]
      %v2031 = vld [vmem:[%s2026 + $0x10] sm:$0xf]
      %v2032 = vld [vmem:[%s2026 + $0x14] sm:$0xf]
      %v2033 = vld [vmem:[%s2026 + $0x18] sm:$0xf]
      %v2034 = vld [vmem:[%s2026 + $0x1c] sm:$0xf]
      %v2035 = vld [vmem:[%s2026 + $0x20] sm:$0xf]
      %v2036 = vld [vmem:[%s2026 + $0x24] sm:$0xf]
      %v2037 = vld [vmem:[%s2026 + $0x28] sm:$0xf]
      %v2038 = vld [vmem:[%s2026 + $0x2c] sm:$0xf]
      %v2039 = vld [vmem:[%s2026 + $0x30] sm:$0xf]
      %v2040 = vld [vmem:[%s2026 + $0x34] sm:$0xf]
      %v2041 = vld [vmem:[%s2026 + $0x38] sm:$0xf]
      %v2042 = vld [vmem:[%s2026 + $0x3c] sm:$0xf]
      %v2059 = vunpack.c.l.b16 %v2027
      %v2060 = vunpack.c.l.b16 %v2028
      %v2061 = vunpack.c.l.b16 %v2029
      %v2062 = vunpack.c.l.b16 %v2030
      %v2063 = vunpack.c.l.b16 %v2031
      %v2064 = vunpack.c.l.b16 %v2032
      %v2065 = vunpack.c.l.b16 %v2033
      %v2066 = vunpack.c.l.b16 %v2034
      %v2067 = vunpack.c.l.b16 %v2035
      %v2068 = vunpack.c.l.b16 %v2036
      %v2069 = vunpack.c.l.b16 %v2037
      %v2070 = vunpack.c.l.b16 %v2038
      %v2071 = vunpack.c.l.b16 %v2039
      %v2072 = vunpack.c.l.b16 %v2040
      %v2073 = vunpack.c.l.b16 %v2041
      %v2074 = vunpack.c.l.b16 %v2042
      %v2075 = vpack.c.b16 %v2060, %v2059
      %v2076 = vpack.c.b16 %v2062, %v2061
      %v2077 = vpack.c.b16 %v2064, %v2063
      %v2078 = vpack.c.b16 %v2066, %v2065
      %v2079 = vpack.c.b16 %v2068, %v2067
      %v2080 = vpack.c.b16 %v2070, %v2069
      %v2081 = vpack.c.b16 %v2072, %v2071
      %v2082 = vpack.c.b16 %v2074, %v2073
      %2091 = vmatpush.bf16.msra.mxu0 %v2082
      %2092 = vmatpush.bf16.msra.mxu0 %v2081
      %2093 = vmatpush.bf16.msra.mxu0 %v2080
      %2094 = vmatpush.bf16.msra.mxu0 %v2079
      %2095 = vmatpush.bf16.msra.mxu0 %v2078
      %2096 = vmatpush.bf16.msra.mxu0 %v2077
      %2097 = vmatpush.bf16.msra.mxu0 %v2076
      %2098 = vmatpush.bf16.msra.mxu0 %v2075
      %2099 = vmatmul.bf16.gmra.mxu0 %v2010
      %v2100 = vpop.f32.mrf.mxu0
      %v2101 = vadd.f32 0.0, %v2100
      %v2102 = vpop.f32.mrf.mxu0
      %v2103 = vadd.f32 0.0, %v2102
      %2104 = vmatmul.bf16.gmra.mxu0 %v2011
      %v2105 = vpop.f32.mrf.mxu0
      %v2106 = vadd.f32 0.0, %v2105
      %v2107 = vpop.f32.mrf.mxu0
      %v2108 = vadd.f32 0.0, %v2107
      %2109 = vmatmul.bf16.gmra.mxu0 %v2012
      %v2110 = vpop.f32.mrf.mxu0
      %v2111 = vadd.f32 0.0, %v2110
      %v2112 = vpop.f32.mrf.mxu0
      %v2113 = vadd.f32 0.0, %v2112
      %2114 = vmatmul.bf16.gmra.mxu0 %v2013
      %v2115 = vpop.f32.mrf.mxu0
      %v2116 = vadd.f32 0.0, %v2115
      %v2117 = vpop.f32.mrf.mxu0
      %v2118 = vadd.f32 0.0, %v2117
      %2119 = vmatmul.bf16.gmra.mxu0 %v2014
      %v2120 = vpop.f32.mrf.mxu0
      %v2121 = vadd.f32 0.0, %v2120
      %v2122 = vpop.f32.mrf.mxu0
      %v2123 = vadd.f32 0.0, %v2122
      %2124 = vmatmul.bf16.gmra.mxu0 %v2015
      %v2125 = vpop.f32.mrf.mxu0
      %v2126 = vadd.f32 0.0, %v2125
      %v2127 = vpop.f32.mrf.mxu0
      %v2128 = vadd.f32 0.0, %v2127
      %2129 = vmatmul.bf16.gmra.mxu0 %v2016
      %v2130 = vpop.f32.mrf.mxu0
      %v2131 = vadd.f32 0.0, %v2130
      %v2132 = vpop.f32.mrf.mxu0
      %v2133 = vadd.f32 0.0, %v2132
      %2134 = vmatmul.bf16.gmra.mxu0 %v2017
      %v2135 = vpop.f32.mrf.mxu0
      %v2136 = vadd.f32 0.0, %v2135
      %v2137 = vpop.f32.mrf.mxu0
      %v2138 = vadd.f32 0.0, %v2137
      %2139 = vmatmul.bf16.gmra.mxu0 %v2018
      %v2140 = vpop.f32.mrf.mxu0
      %v2141 = vadd.f32 0.0, %v2140
      %v2142 = vpop.f32.mrf.mxu0
      %v2143 = vadd.f32 0.0, %v2142
      %2144 = vmatmul.bf16.gmra.mxu0 %v2019
      %v2145 = vpop.f32.mrf.mxu0
      %v2146 = vadd.f32 0.0, %v2145
      %v2147 = vpop.f32.mrf.mxu0
      %v2148 = vadd.f32 0.0, %v2147
      %2149 = vmatmul.bf16.gmra.mxu0 %v2020
      %v2150 = vpop.f32.mrf.mxu0
      %v2151 = vadd.f32 0.0, %v2150
      %v2152 = vpop.f32.mrf.mxu0
      %v2153 = vadd.f32 0.0, %v2152
      %2154 = vmatmul.bf16.gmra.mxu0 %v2021
      %v2155 = vpop.f32.mrf.mxu0
      %v2156 = vadd.f32 0.0, %v2155
      %v2157 = vpop.f32.mrf.mxu0
      %v2158 = vadd.f32 0.0, %v2157
      %2159 = vmatmul.bf16.gmra.mxu0 %v2022
      %v2160 = vpop.f32.mrf.mxu0
      %v2161 = vadd.f32 0.0, %v2160
      %v2162 = vpop.f32.mrf.mxu0
      %v2163 = vadd.f32 0.0, %v2162
      %2164 = vmatmul.bf16.gmra.mxu0 %v2023
      %v2165 = vpop.f32.mrf.mxu0
      %v2166 = vadd.f32 0.0, %v2165
      %v2167 = vpop.f32.mrf.mxu0
      %v2168 = vadd.f32 0.0, %v2167
      %2169 = vmatmul.bf16.gmra.mxu0 %v2024
      %v2170 = vpop.f32.mrf.mxu0
      %v2171 = vadd.f32 0.0, %v2170
      %v2172 = vpop.f32.mrf.mxu0
      %v2173 = vadd.f32 0.0, %v2172
      %2174 = vmatmul.bf16.gmra.mxu0 %v2025
      %v2175 = vpop.f32.mrf.mxu0
      %v2176 = vadd.f32 0.0, %v2175
      %v2177 = vpop.f32.mrf.mxu0
      %v2178 = vadd.f32 0.0, %v2177
      %2179 = vdwg.mxu0
      %v2180 = vadd.f32 %v1946, %v2101
      %v2181 = vadd.f32 %v1947, %v2103
      %v2182 = vadd.f32 %v1948, %v2106
      %v2183 = vadd.f32 %v1949, %v2108
      %v2184 = vadd.f32 %v1950, %v2111
      %v2185 = vadd.f32 %v1951, %v2113
      %v2186 = vadd.f32 %v1952, %v2116
      %v2187 = vadd.f32 %v1953, %v2118
      %v2188 = vadd.f32 %v1954, %v2121
      %v2189 = vadd.f32 %v1955, %v2123
      %v2190 = vadd.f32 %v1956, %v2126
      %v2191 = vadd.f32 %v1957, %v2128
      %v2192 = vadd.f32 %v1958, %v2131
      %v2193 = vadd.f32 %v1959, %v2133
      %v2194 = vadd.f32 %v1960, %v2136
      %v2195 = vadd.f32 %v1961, %v2138
      %v2196 = vadd.f32 %v1962, %v2141
      %v2197 = vadd.f32 %v1963, %v2143
      %v2198 = vadd.f32 %v1964, %v2146
      %v2199 = vadd.f32 %v1965, %v2148
      %v2200 = vadd.f32 %v1966, %v2151
      %v2201 = vadd.f32 %v1967, %v2153
      %v2202 = vadd.f32 %v1968, %v2156
      %v2203 = vadd.f32 %v1969, %v2158
      %v2204 = vadd.f32 %v1970, %v2161
      %v2205 = vadd.f32 %v1971, %v2163
      %v2206 = vadd.f32 %v1972, %v2166
      %v2207 = vadd.f32 %v1973, %v2168
      %v2208 = vadd.f32 %v1974, %v2171
      %v2209 = vadd.f32 %v1975, %v2173
      %v2210 = vadd.f32 %v1976, %v2176
      %v2211 = vadd.f32 %v1977, %v2178
      %v2212 = vld [vmem:[%s2] sm:$0x1]
      %v2214 = vperm.slane %v2212, 0
      %v2216 = vadd.f32 %v2180, %v2214
      %v2217 = vadd.f32 %v2181, %v2214
      %v2218 = vadd.f32 %v2182, %v2214
      %v2219 = vadd.f32 %v2183, %v2214
      %v2220 = vadd.f32 %v2184, %v2214
      %v2221 = vadd.f32 %v2185, %v2214
      %v2222 = vadd.f32 %v2186, %v2214
      %v2223 = vadd.f32 %v2187, %v2214
      %v2224 = vadd.f32 %v2188, %v2214
      %v2225 = vadd.f32 %v2189, %v2214
      %v2226 = vadd.f32 %v2190, %v2214
      %v2227 = vadd.f32 %v2191, %v2214
      %v2228 = vadd.f32 %v2192, %v2214
      %v2229 = vadd.f32 %v2193, %v2214
      %v2230 = vadd.f32 %v2194, %v2214
      %v2231 = vadd.f32 %v2195, %v2214
      %v2232 = vadd.f32 %v2196, %v2214
      %v2233 = vadd.f32 %v2197, %v2214
      %v2234 = vadd.f32 %v2198, %v2214
      %v2235 = vadd.f32 %v2199, %v2214
      %v2236 = vadd.f32 %v2200, %v2214
      %v2237 = vadd.f32 %v2201, %v2214
      %v2238 = vadd.f32 %v2202, %v2214
      %v2239 = vadd.f32 %v2203, %v2214
      %v2240 = vadd.f32 %v2204, %v2214
      %v2241 = vadd.f32 %v2205, %v2214
      %v2242 = vadd.f32 %v2206, %v2214
      %v2243 = vadd.f32 %v2207, %v2214
      %v2244 = vadd.f32 %v2208, %v2214
      %v2245 = vadd.f32 %v2209, %v2214
      %v2246 = vadd.f32 %v2210, %v2214
      %v2247 = vadd.f32 %v2211, %v2214
      %2248 = vst [vmem:[%s170] sm:$0xff] %v2216
      %2249 = vst [vmem:[%s170 + $0x8] sm:$0xff] %v2217
      %2250 = vst [vmem:[%s170 + $0x10] sm:$0xff] %v2218
      %2251 = vst [vmem:[%s170 + $0x18] sm:$0xff] %v2219
      %2252 = vst [vmem:[%s170 + $0x20] sm:$0xff] %v2220
      %2253 = vst [vmem:[%s170 + $0x28] sm:$0xff] %v2221
      %2254 = vst [vmem:[%s170 + $0x30] sm:$0xff] %v2222
      %2255 = vst [vmem:[%s170 + $0x38] sm:$0xff] %v2223
      %2256 = vst [vmem:[%s170 + $0x40] sm:$0xff] %v2224
      %2257 = vst [vmem:[%s170 + $0x48] sm:$0xff] %v2225
      %2258 = vst [vmem:[%s170 + $0x50] sm:$0xff] %v2226
      %2259 = vst [vmem:[%s170 + $0x58] sm:$0xff] %v2227
      %2260 = vst [vmem:[%s170 + $0x60] sm:$0xff] %v2228
      %2261 = vst [vmem:[%s170 + $0x68] sm:$0xff] %v2229
      %2262 = vst [vmem:[%s170 + $0x70] sm:$0xff] %v2230
      %2263 = vst [vmem:[%s170 + $0x78] sm:$0xff] %v2231
      %2264 = vst [vmem:[%s170 + $0x80] sm:$0xff] %v2232
      %2265 = vst [vmem:[%s170 + $0x88] sm:$0xff] %v2233
      %2266 = vst [vmem:[%s170 + $0x90] sm:$0xff] %v2234
      %2267 = vst [vmem:[%s170 + $0x98] sm:$0xff] %v2235
      %2268 = vst [vmem:[%s170 + $0xa0] sm:$0xff] %v2236
      %2269 = vst [vmem:[%s170 + $0xa8] sm:$0xff] %v2237
      %2270 = vst [vmem:[%s170 + $0xb0] sm:$0xff] %v2238
      %2271 = vst [vmem:[%s170 + $0xb8] sm:$0xff] %v2239
      %2272 = vst [vmem:[%s170 + $0xc0] sm:$0xff] %v2240
      %2273 = vst [vmem:[%s170 + $0xc8] sm:$0xff] %v2241
      %2274 = vst [vmem:[%s170 + $0xd0] sm:$0xff] %v2242
      %2275 = vst [vmem:[%s170 + $0xd8] sm:$0xff] %v2243
      %2276 = vst [vmem:[%s170 + $0xe0] sm:$0xff] %v2244
      %2277 = vst [vmem:[%s170 + $0xe8] sm:$0xff] %v2245
      %2278 = vst [vmem:[%s170 + $0xf0] sm:$0xff] %v2246
      %2279 = vst [vmem:[%s170 + $0xf8] sm:$0xff] %v2247
      %p2280 = scmp.lt.s32.totalorder %s14, 1
      %s2281 = scalar_select %p2280, %s14, 1
      %s2282 = smul.addr %s2281, 32
      %s2283 = smul.addr %s2282, 8
      %s2284 = scalar_lea.vmem %s3, %s2283
      // Predicated region
      $region33: #{resnet_forward.6} parent=31 // pred_check
        %p2285 = pneg %p100
      $region34: #{resnet_forward.6} parent=31 // pred_check_branch
        %2287 = sbr.rel (%p2285) target = $region36
      $region35: #{resnet_forward.6} parent=31 // pred_region
        _
      $region36: #{resnet_forward.6} parent=31 // pred_fallthru
        _
    $region32: #{resnet_forward.6} parent=5 // pred_fallthru
      _
    %p2288 = scmp.le.s32.totalorder 2, %s9
    // Predicated region
    $region37: #{resnet_forward.6} parent=5 // pred_check
      %p2289 = pneg %p2288
    $region38: #{resnet_forward.6} parent=5 // pred_check_branch
      %2291 = sbr.rel (%p2289) target = $region40
    $region39: #{resnet_forward.6} parent=5 // pred_region
      %s2292 = ssub.s32 %s9, 2
      // Predicated region
      $region41: #{resnet_forward.6} parent=39 // pred_check
        %p2293 = pneg %p106
      $region42: #{resnet_forward.6} parent=39 // pred_check_branch
        %2295 = sbr.rel (%p2293) target = $region44
      $region43: #{resnet_forward.6} parent=39 // pred_region
        %p2296 = scmp.lt.s32.totalorder %s15, 1
        %s2297 = scalar_select %p2296, %s15, 1
        %s2298 = smul.addr %s2297, 32
        %s2299 = smul.addr %s2298, 8
        %s2300 = scalar_lea.vmem %s3, %s2299
      $region44: #{resnet_forward.6} parent=39 // pred_fallthru
        _
    $region40: #{resnet_forward.6} parent=5 // pred_fallthru
      _
  $region6: #{resnet_forward.6} parent=0 // loop_footer
    %s13 = sadd.s32 1, %s9
  $region7: #{resnet_forward.6} parent=0 // loop_footer_branch
    %8 = sbr.rel target = $region3
  $region8: #{resnet_forward.6} parent=0 // loop_exit
    _

// kernel: resnet_forward.7
$region0: #{resnet_forward.7}
  #allocation0 [shape = 'u32[]', space=smem, size = 0x4, offset = 0x4, fixed_abs, tag = 'smem constant byte address 0x4 - core index']
  #allocation1 [shape = 'u32[72,128]{1,0:T(1,128)}', space=vmem, size = 0x9000, scoped, tag = 'internal scratch']
  %s0 = inlined_call_operand.vmem [shape: f32[2,256,128], index: 0, kind: input, shape index: {}]
  %s1 = inlined_call_operand.vmem [shape: f32[1,128], index: 1, kind: input, shape index: {}]
  %s2 = inlined_call_operand.vmem [shape: f32[1,128], index: 2, kind: input, shape index: {}]
  %s3 = inlined_call_operand.vmem [shape: f32[1024,256], index: 3, kind: input, shape index: {}]
  %s4 = inlined_call_operand.vmem [shape: f32[256,1024], index: 4, kind: input, shape index: {}]
  %s5 = inlined_call_operand.vmem [shape: f32[2,256,128], index: 5, kind: output, shape index: {}]
  %s6 = sld [smem:[#allocation0]]
  $region53: #{resnet_forward.7} parent=0
    _
  %s8 = ssub.s32 1, %s6
  %s9 = scalar_select 0, %s8, %s6
  loop: start=0, step=1, limit=4
  $region2: #{resnet_forward.7} parent=0 // loop_pre_header
    _
  $region3: #{resnet_forward.7} parent=0 // loop_header
    %s11 = sphi 0, %s15
    %p12 = scmp.ge.s32.totalorder %s11, 4
    %s21 = sphi 0, %s23
    %s24 = sphi 0, %s21
    %s25 = sphi 0, %s24
    %s41 = sphi 0, %s25
    %s45 = sphi 0, %s45
    %s47 = sphi 0, %s45
    %s48 = sphi 0, %s47
    %s62 = sphi 0, %s48
    %s66 = sphi 0, %s66
    %s68 = sphi 0, %s66
    %s69 = sphi 0, %s68
    %s83 = sphi 0, %s69
    %s87 = sphi 0, %s87
    %s89 = sphi 0, %s87
    %s90 = sphi 0, %s89
    %s104 = sphi 0, %s90
    %s108 = sphi 0, %s108
    %s110 = sphi 0, %s108
    %s111 = sphi 0, %s110
    %s125 = sphi 0, %s111
    %s131 = sphi 0, %s133
    %s134 = sphi 0, %s131
    %s135 = sphi 0, %s134
    %s151 = sphi 0, %s135
  $region4: #{resnet_forward.7} parent=0 // loop_header_branch
    %14 = sbr.rel (%p12) target = $region8
  $region5: #{resnet_forward.7} parent=0 // loop_body
    %s16 = ssub.s32 %s11, 1
    %s17 = ssub.s32 %s11, 2
    %s18 = sadd.s32 %s11, 1
    %s19 = ssub.s32 %s11, %s18
    %p20 = scmp.eq.s32.totalorder %s19, 0
    %s22 = sadd.s32 %s21, 1
    %s23 = scalar_select %p20, %s21, %s22
    %p26 = pneg %p20
    %p27 = scmp.eq.s32.totalorder %s11, 1
    %p28 = por %p26, %p27
    %p29 = scmp.ne.s32.totalorder %s21, %s24
    %p30 = scmp.eq.s32.totalorder %s11, 0
    %p31 = por %p29, %p30
    %p32 = scmp.ne.s32.totalorder %s21, %s24
    %p33 = scmp.eq.s32.totalorder %s16, 1
    %p34 = por %p32, %p33
    %p35 = scmp.ne.s32.totalorder %s24, %s25
    %p36 = scmp.eq.s32.totalorder %s16, 0
    %p37 = por %p35, %p36
    %p38 = scmp.ne.s32.totalorder %s24, %s25
    %p39 = scmp.eq.s32.totalorder %s17, 1
    %p40 = por %p38, %p39
    %p42 = scmp.ne.s32.totalorder %s25, %s41
    %p43 = scmp.eq.s32.totalorder %s17, 0
    %p44 = por %p42, %p43
    %s46 = sadd.s32 %s45, 1
    %p49 = scmp.eq.s32.totalorder %s11, 1
    %p50 = scmp.ne.s32.totalorder %s45, %s47
    %p51 = scmp.eq.s32.totalorder %s11, 0
    %p52 = por %p50, %p51
    %p53 = scmp.ne.s32.totalorder %s45, %s47
    %p54 = scmp.eq.s32.totalorder %s16, 1
    %p55 = por %p53, %p54
    %p56 = scmp.ne.s32.totalorder %s47, %s48
    %p57 = scmp.eq.s32.totalorder %s16, 0
    %p58 = por %p56, %p57
    %p59 = scmp.ne.s32.totalorder %s47, %s48
    %p60 = scmp.eq.s32.totalorder %s17, 1
    %p61 = por %p59, %p60
    %p63 = scmp.ne.s32.totalorder %s48, %s62
    %p64 = scmp.eq.s32.totalorder %s17, 0
    %p65 = por %p63, %p64
    %s67 = sadd.s32 %s66, 1
    %p70 = scmp.eq.s32.totalorder %s11, 1
    %p71 = scmp.ne.s32.totalorder %s66, %s68
    %p72 = scmp.eq.s32.totalorder %s11, 0
    %p73 = por %p71, %p72
    %p74 = scmp.ne.s32.totalorder %s66, %s68
    %p75 = scmp.eq.s32.totalorder %s16, 1
    %p76 = por %p74, %p75
    %p77 = scmp.ne.s32.totalorder %s68, %s69
    %p78 = scmp.eq.s32.totalorder %s16, 0
    %p79 = por %p77, %p78
    %p80 = scmp.ne.s32.totalorder %s68, %s69
    %p81 = scmp.eq.s32.totalorder %s17, 1
    %p82 = por %p80, %p81
    %p84 = scmp.ne.s32.totalorder %s69, %s83
    %p85 = scmp.eq.s32.totalorder %s17, 0
    %p86 = por %p84, %p85
    %s88 = sadd.s32 %s87, 1
    %p91 = scmp.eq.s32.totalorder %s11, 1
    %p92 = scmp.ne.s32.totalorder %s87, %s89
    %p93 = scmp.eq.s32.totalorder %s11, 0
    %p94 = por %p92, %p93
    %p95 = scmp.ne.s32.totalorder %s87, %s89
    %p96 = scmp.eq.s32.totalorder %s16, 1
    %p97 = por %p95, %p96
    %p98 = scmp.ne.s32.totalorder %s89, %s90
    %p99 = scmp.eq.s32.totalorder %s16, 0
    %p100 = por %p98, %p99
    %p101 = scmp.ne.s32.totalorder %s89, %s90
    %p102 = scmp.eq.s32.totalorder %s17, 1
    %p103 = por %p101, %p102
    %p105 = scmp.ne.s32.totalorder %s90, %s104
    %p106 = scmp.eq.s32.totalorder %s17, 0
    %p107 = por %p105, %p106
    %s109 = sadd.s32 %s108, 1
    %p112 = scmp.eq.s32.totalorder %s11, 1
    %p113 = scmp.ne.s32.totalorder %s108, %s110
    %p114 = scmp.eq.s32.totalorder %s11, 0
    %p115 = por %p113, %p114
    %p116 = scmp.ne.s32.totalorder %s108, %s110
    %p117 = scmp.eq.s32.totalorder %s16, 1
    %p118 = por %p116, %p117
    %p119 = scmp.ne.s32.totalorder %s110, %s111
    %p120 = scmp.eq.s32.totalorder %s16, 0
    %p121 = por %p119, %p120
    %p122 = scmp.ne.s32.totalorder %s110, %s111
    %p123 = scmp.eq.s32.totalorder %s17, 1
    %p124 = por %p122, %p123
    %p126 = scmp.ne.s32.totalorder %s111, %s125
    %p127 = scmp.eq.s32.totalorder %s17, 0
    %p128 = por %p126, %p127
    %s129 = ssub.s32 %s11, %s18
    %p130 = scmp.eq.s32.totalorder %s129, 0
    %s132 = sadd.s32 %s131, 1
    %s133 = scalar_select %p130, %s131, %s132
    %p136 = pneg %p130
    %p137 = scmp.eq.s32.totalorder %s11, 1
    %p138 = por %p136, %p137
    %p139 = scmp.ne.s32.totalorder %s131, %s134
    %p140 = scmp.eq.s32.totalorder %s11, 0
    %p141 = por %p139, %p140
    %p142 = scmp.ne.s32.totalorder %s131, %s134
    %p143 = scmp.eq.s32.totalorder %s16, 1
    %p144 = por %p142, %p143
    %p145 = scmp.ne.s32.totalorder %s134, %s135
    %p146 = scmp.eq.s32.totalorder %s16, 0
    %p147 = por %p145, %p146
    %p148 = scmp.ne.s32.totalorder %s134, %s135
    %p149 = scmp.eq.s32.totalorder %s17, 1
    %p150 = por %p148, %p149
    %p152 = scmp.ne.s32.totalorder %s135, %s151
    %p153 = scmp.eq.s32.totalorder %s17, 0
    %p154 = por %p152, %p153
    %p155 = scmp.le.s32.totalorder 1, %s11
    %p156 = scmp.lt.s32.totalorder %s11, 3
    %p157 = pnand %p155, %p156
    %p158 = pneg %p157
    // Predicated region
    $region9: #{resnet_forward.7} parent=5 // pred_check
      _
    $region10: #{resnet_forward.7} parent=5 // pred_check_branch
      %160 = sbr.rel (%p157) target = $region12
    $region11: #{resnet_forward.7} parent=5 // pred_region
      %s161 = ssub.s32 %s11, 1
      // Predicated region
      $region13: #{resnet_forward.7} parent=11 // pred_check
        %p162 = pneg %p58
      $region14: #{resnet_forward.7} parent=11 // pred_check_branch
        %164 = sbr.rel (%p162) target = $region16
      $region15: #{resnet_forward.7} parent=11 // pred_region
        _
      $region16: #{resnet_forward.7} parent=11 // pred_fallthru
        _
      // Predicated region
      $region17: #{resnet_forward.7} parent=11 // pred_check
        %p165 = pneg %p79
      $region18: #{resnet_forward.7} parent=11 // pred_check_branch
        %167 = sbr.rel (%p165) target = $region20
      $region19: #{resnet_forward.7} parent=11 // pred_region
        _
      $region20: #{resnet_forward.7} parent=11 // pred_fallthru
        _
      // Predicated region
      $region21: #{resnet_forward.7} parent=11 // pred_check
        %p168 = pneg %p100
      $region22: #{resnet_forward.7} parent=11 // pred_check_branch
        %170 = sbr.rel (%p168) target = $region24
      $region23: #{resnet_forward.7} parent=11 // pred_region
        _
      $region24: #{resnet_forward.7} parent=11 // pred_fallthru
        _
      // Predicated region
      $region25: #{resnet_forward.7} parent=11 // pred_check
        %p171 = pneg %p121
      $region26: #{resnet_forward.7} parent=11 // pred_check_branch
        %173 = sbr.rel (%p171) target = $region28
      $region27: #{resnet_forward.7} parent=11 // pred_region
        _
      $region28: #{resnet_forward.7} parent=11 // pred_fallthru
        _
    $region12: #{resnet_forward.7} parent=5 // pred_fallthru
      _
    %p174 = scmp.lt.s32.totalorder %s11, 2
    // Predicated region
    $region29: #{resnet_forward.7} parent=5 // pred_check
      %p175 = pneg %p174
    $region30: #{resnet_forward.7} parent=5 // pred_check_branch
      %177 = sbr.rel (%p175) target = $region32
    $region31: #{resnet_forward.7} parent=5 // pred_region
      // Predicated region
      $region33: #{resnet_forward.7} parent=31 // pred_check
        %p178 = pneg %p31
      $region34: #{resnet_forward.7} parent=31 // pred_check_branch
        %180 = sbr.rel (%p178) target = $region36
      $region35: #{resnet_forward.7} parent=31 // pred_region
        %p181 = scmp.lt.s32.totalorder %s11, 1
        %s182 = scalar_select %p181, %s11, 1
        %s183 = smul.addr %s182, 32
        %s184 = smul.addr %s183, 8
        %s185 = scalar_lea.vmem %s0, %s184
      $region36: #{resnet_forward.7} parent=31 // pred_fallthru
        _
    $region32: #{resnet_forward.7} parent=5 // pred_fallthru
      _
    %p186 = scmp.le.s32.totalorder 1, %s11
    %p187 = scmp.lt.s32.totalorder %s11, 3
    %p188 = pnand %p186, %p187
    %p189 = pneg %p188
    // Predicated region
    $region37: #{resnet_forward.7} parent=5 // pred_check
      _
    $region38: #{resnet_forward.7} parent=5 // pred_check_branch
      %191 = sbr.rel (%p188) target = $region40
    $region39: #{resnet_forward.7} parent=5 // pred_region
      %s192 = ssub.s32 %s11, 1
      %p193 = scmp.lt.s32.totalorder %s16, 1
      %s194 = scalar_select %p193, %s16, 1
      %s195 = smul.addr %s194, 32
      %s196 = smul.addr %s195, 8
      %s197 = scalar_lea.vmem %s0, %s196
      %p198 = pneg %p37
      %p199 = pneg %p34
      %p200 = pneg %p58
      %p201 = pneg %p55
      %p202 = pneg %p79
      %p203 = pneg %p76
      %p204 = pneg %p100
      %p205 = pneg %p97
      %p206 = pneg %p121
      %p207 = pneg %p118
      %p208 = pneg %p147
      %p209 = pneg %p144
      %p210 = scmp.lt.s32.totalorder %s16, 1
      %s211 = scalar_select %p210, %s16, 1
      %s212 = smul.addr %s211, 32
      %s213 = smul.addr %s212, 8
      %s214 = scalar_lea.vmem %s5, %s213
      %p215 = scmp.lt.s32.totalorder %s16, 1
      %s216 = scalar_select %p215, %s16, 1
      %s217 = smul.addr %s216, 32
      %s218 = smul.addr %s217, 8
      %s219 = scalar_lea.vmem %s0, %s218
      %p220 = scmp.lt.s32.totalorder %s16, 1
      %s221 = scalar_select %p220, %s16, 1
      %s222 = smul.addr %s221, 32
      %s223 = smul.addr %s222, 8
      %s224 = scalar_lea.vmem %s5, %s223
      %v225 = vld [vmem:[%s219] sm:$0xff]
      %v226 = vld [vmem:[%s219 + $0x8] sm:$0xff]
      %v227 = vld [vmem:[%s219 + $0x10] sm:$0xff]
      %v228 = vld [vmem:[%s219 + $0x18] sm:$0xff]
      %v229 = vld [vmem:[%s219 + $0x20] sm:$0xff]
      %v230 = vld [vmem:[%s219 + $0x28] sm:$0xff]
      %v231 = vld [vmem:[%s219 + $0x30] sm:$0xff]
      %v232 = vld [vmem:[%s219 + $0x38] sm:$0xff]
      %v233 = vld [vmem:[%s219 + $0x40] sm:$0xff]
      %v234 = vld [vmem:[%s219 + $0x48] sm:$0xff]
      %v235 = vld [vmem:[%s219 + $0x50] sm:$0xff]
      %v236 = vld [vmem:[%s219 + $0x58] sm:$0xff]
      %v237 = vld [vmem:[%s219 + $0x60] sm:$0xff]
      %v238 = vld [vmem:[%s219 + $0x68] sm:$0xff]
      %v239 = vld [vmem:[%s219 + $0x70] sm:$0xff]
      %v240 = vld [vmem:[%s219 + $0x78] sm:$0xff]
      %v241 = vld [vmem:[%s219 + $0x80] sm:$0xff]
      %v242 = vld [vmem:[%s219 + $0x88] sm:$0xff]
      %v243 = vld [vmem:[%s219 + $0x90] sm:$0xff]
      %v244 = vld [vmem:[%s219 + $0x98] sm:$0xff]
      %v245 = vld [vmem:[%s219 + $0xa0] sm:$0xff]
      %v246 = vld [vmem:[%s219 + $0xa8] sm:$0xff]
      %v247 = vld [vmem:[%s219 + $0xb0] sm:$0xff]
      %v248 = vld [vmem:[%s219 + $0xb8] sm:$0xff]
      %v249 = vld [vmem:[%s219 + $0xc0] sm:$0xff]
      %v250 = vld [vmem:[%s219 + $0xc8] sm:$0xff]
      %v251 = vld [vmem:[%s219 + $0xd0] sm:$0xff]
      %v252 = vld [vmem:[%s219 + $0xd8] sm:$0xff]
      %v253 = vld [vmem:[%s219 + $0xe0] sm:$0xff]
      %v254 = vld [vmem:[%s219 + $0xe8] sm:$0xff]
      %v255 = vld [vmem:[%s219 + $0xf0] sm:$0xff]
      %v256 = vld [vmem:[%s219 + $0xf8] sm:$0xff]
      %v257 = vld [vmem:[%s1] sm:$0x1]
      %v259 = vperm.slane %v257, 0
      %v261 = vmul.f32 %v225, %v259
      %v262 = vmul.f32 %v226, %v259
      %v263 = vmul.f32 %v227, %v259
      %v264 = vmul.f32 %v228, %v259
      %v265 = vmul.f32 %v229, %v259
      %v266 = vmul.f32 %v230, %v259
      %v267 = vmul.f32 %v231, %v259
      %v268 = vmul.f32 %v232, %v259
      %v269 = vmul.f32 %v233, %v259
      %v270 = vmul.f32 %v234, %v259
      %v271 = vmul.f32 %v235, %v259
      %v272 = vmul.f32 %v236, %v259
      %v273 = vmul.f32 %v237, %v259
      %v274 = vmul.f32 %v238, %v259
      %v275 = vmul.f32 %v239, %v259
      %v276 = vmul.f32 %v240, %v259
      %v277 = vmul.f32 %v241, %v259
      %v278 = vmul.f32 %v242, %v259
      %v279 = vmul.f32 %v243, %v259
      %v280 = vmul.f32 %v244, %v259
      %v281 = vmul.f32 %v245, %v259
      %v282 = vmul.f32 %v246, %v259
      %v283 = vmul.f32 %v247, %v259
      %v284 = vmul.f32 %v248, %v259
      %v285 = vmul.f32 %v249, %v259
      %v286 = vmul.f32 %v250, %v259
      %v287 = vmul.f32 %v251, %v259
      %v288 = vmul.f32 %v252, %v259
      %v289 = vmul.f32 %v253, %v259
      %v290 = vmul.f32 %v254, %v259
      %v291 = vmul.f32 %v255, %v259
      %v292 = vmul.f32 %v256, %v259
      %v293 = vld [vmem:[%s2] sm:$0x1]
      %v295 = vperm.slane %v293, 0
      %v297 = vadd.f32 %v261, %v295
      %v298 = vadd.f32 %v262, %v295
      %v299 = vadd.f32 %v263, %v295
      %v300 = vadd.f32 %v264, %v295
      %v301 = vadd.f32 %v265, %v295
      %v302 = vadd.f32 %v266, %v295
      %v303 = vadd.f32 %v267, %v295
      %v304 = vadd.f32 %v268, %v295
      %v305 = vadd.f32 %v269, %v295
      %v306 = vadd.f32 %v270, %v295
      %v307 = vadd.f32 %v271, %v295
      %v308 = vadd.f32 %v272, %v295
      %v309 = vadd.f32 %v273, %v295
      %v310 = vadd.f32 %v274, %v295
      %v311 = vadd.f32 %v275, %v295
      %v312 = vadd.f32 %v276, %v295
      %v313 = vadd.f32 %v277, %v295
      %v314 = vadd.f32 %v278, %v295
      %v315 = vadd.f32 %v279, %v295
      %v316 = vadd.f32 %v280, %v295
      %v317 = vadd.f32 %v281, %v295
      %v318 = vadd.f32 %v282, %v295
      %v319 = vadd.f32 %v283, %v295
      %v320 = vadd.f32 %v284, %v295
      %v321 = vadd.f32 %v285, %v295
      %v322 = vadd.f32 %v286, %v295
      %v323 = vadd.f32 %v287, %v295
      %v324 = vadd.f32 %v288, %v295
      %v325 = vadd.f32 %v289, %v295
      %v326 = vadd.f32 %v290, %v295
      %v327 = vadd.f32 %v291, %v295
      %v328 = vadd.f32 %v292, %v295
      %v329 = vld [vmem:[%s3] sm:$0xff]
      %v330 = vld [vmem:[%s3 + $0x8] sm:$0xff]
      %v331 = vld [vmem:[%s3 + $0x10] sm:$0xff]
      %v332 = vld [vmem:[%s3 + $0x18] sm:$0xff]
      %v333 = vld [vmem:[%s3 + $0x20] sm:$0xff]
      %v334 = vld [vmem:[%s3 + $0x28] sm:$0xff]
      %v335 = vld [vmem:[%s3 + $0x30] sm:$0xff]
      %v336 = vld [vmem:[%s3 + $0x38] sm:$0xff]
      %v337 = vld [vmem:[%s3 + $0x40] sm:$0xff]
      %v338 = vld [vmem:[%s3 + $0x48] sm:$0xff]
      %v339 = vld [vmem:[%s3 + $0x50] sm:$0xff]
      %v340 = vld [vmem:[%s3 + $0x58] sm:$0xff]
      %v341 = vld [vmem:[%s3 + $0x60] sm:$0xff]
      %v342 = vld [vmem:[%s3 + $0x68] sm:$0xff]
      %v343 = vld [vmem:[%s3 + $0x70] sm:$0xff]
      %v344 = vld [vmem:[%s3 + $0x78] sm:$0xff]
      %v345 = vld [vmem:[%s3 + $0x80] sm:$0xff]
      %v346 = vld [vmem:[%s3 + $0x88] sm:$0xff]
      %v347 = vld [vmem:[%s3 + $0x90] sm:$0xff]
      %v348 = vld [vmem:[%s3 + $0x98] sm:$0xff]
      %v349 = vld [vmem:[%s3 + $0xa0] sm:$0xff]
      %v350 = vld [vmem:[%s3 + $0xa8] sm:$0xff]
      %v351 = vld [vmem:[%s3 + $0xb0] sm:$0xff]
      %v352 = vld [vmem:[%s3 + $0xb8] sm:$0xff]
      %v353 = vld [vmem:[%s3 + $0xc0] sm:$0xff]
      %v354 = vld [vmem:[%s3 + $0xc8] sm:$0xff]
      %v355 = vld [vmem:[%s3 + $0xd0] sm:$0xff]
      %v356 = vld [vmem:[%s3 + $0xd8] sm:$0xff]
      %v357 = vld [vmem:[%s3 + $0xe0] sm:$0xff]
      %v358 = vld [vmem:[%s3 + $0xe8] sm:$0xff]
      %v359 = vld [vmem:[%s3 + $0xf0] sm:$0xff]
      %v360 = vld [vmem:[%s3 + $0xf8] sm:$0xff]
      %v361 = vld [vmem:[%s3 + $0x100] sm:$0xff]
      %v362 = vld [vmem:[%s3 + $0x108] sm:$0xff]
      %v363 = vld [vmem:[%s3 + $0x110] sm:$0xff]
      %v364 = vld [vmem:[%s3 + $0x118] sm:$0xff]
      %v365 = vld [vmem:[%s3 + $0x120] sm:$0xff]
      %v366 = vld [vmem:[%s3 + $0x128] sm:$0xff]
      %v367 = vld [vmem:[%s3 + $0x130] sm:$0xff]
      %v368 = vld [vmem:[%s3 + $0x138] sm:$0xff]
      %v369 = vld [vmem:[%s3 + $0x140] sm:$0xff]
      %v370 = vld [vmem:[%s3 + $0x148] sm:$0xff]
      %v371 = vld [vmem:[%s3 + $0x150] sm:$0xff]
      %v372 = vld [vmem:[%s3 + $0x158] sm:$0xff]
      %v373 = vld [vmem:[%s3 + $0x160] sm:$0xff]
      %v374 = vld [vmem:[%s3 + $0x168] sm:$0xff]
      %v375 = vld [vmem:[%s3 + $0x170] sm:$0xff]
      %v376 = vld [vmem:[%s3 + $0x178] sm:$0xff]
      %v377 = vld [vmem:[%s3 + $0x180] sm:$0xff]
      %v378 = vld [vmem:[%s3 + $0x188] sm:$0xff]
      %v379 = vld [vmem:[%s3 + $0x190] sm:$0xff]
      %v380 = vld [vmem:[%s3 + $0x198] sm:$0xff]
      %v381 = vld [vmem:[%s3 + $0x1a0] sm:$0xff]
      %v382 = vld [vmem:[%s3 + $0x1a8] sm:$0xff]
      %v383 = vld [vmem:[%s3 + $0x1b0] sm:$0xff]
      %v384 = vld [vmem:[%s3 + $0x1b8] sm:$0xff]
      %v385 = vld [vmem:[%s3 + $0x1c0] sm:$0xff]
      %v386 = vld [vmem:[%s3 + $0x1c8] sm:$0xff]
      %v387 = vld [vmem:[%s3 + $0x1d0] sm:$0xff]
      %v388 = vld [vmem:[%s3 + $0x1d8] sm:$0xff]
      %v389 = vld [vmem:[%s3 + $0x1e0] sm:$0xff]
      %v390 = vld [vmem:[%s3 + $0x1e8] sm:$0xff]
      %v391 = vld [vmem:[%s3 + $0x1f0] sm:$0xff]
      %v392 = vld [vmem:[%s3 + $0x1f8] sm:$0xff]
      %v393 = vld [vmem:[%s3 + $0x200] sm:$0xff]
      %v394 = vld [vmem:[%s3 + $0x208] sm:$0xff]
      %v395 = vld [vmem:[%s3 + $0x210] sm:$0xff]
      %v396 = vld [vmem:[%s3 + $0x218] sm:$0xff]
      %v397 = vld [vmem:[%s3 + $0x220] sm:$0xff]
      %v398 = vld [vmem:[%s3 + $0x228] sm:$0xff]
      %v399 = vld [vmem:[%s3 + $0x230] sm:$0xff]
      %v400 = vld [vmem:[%s3 + $0x238] sm:$0xff]
      %v401 = vld [vmem:[%s3 + $0x240] sm:$0xff]
      %v402 = vld [vmem:[%s3 + $0x248] sm:$0xff]
      %v403 = vld [vmem:[%s3 + $0x250] sm:$0xff]
      %v404 = vld [vmem:[%s3 + $0x258] sm:$0xff]
      %v405 = vld [vmem:[%s3 + $0x260] sm:$0xff]
      %v406 = vld [vmem:[%s3 + $0x268] sm:$0xff]
      %v407 = vld [vmem:[%s3 + $0x270] sm:$0xff]
      %v408 = vld [vmem:[%s3 + $0x278] sm:$0xff]
      %v409 = vld [vmem:[%s3 + $0x280] sm:$0xff]
      %v410 = vld [vmem:[%s3 + $0x288] sm:$0xff]
      %v411 = vld [vmem:[%s3 + $0x290] sm:$0xff]
      %v412 = vld [vmem:[%s3 + $0x298] sm:$0xff]
      %v413 = vld [vmem:[%s3 + $0x2a0] sm:$0xff]
      %v414 = vld [vmem:[%s3 + $0x2a8] sm:$0xff]
      %v415 = vld [vmem:[%s3 + $0x2b0] sm:$0xff]
      %v416 = vld [vmem:[%s3 + $0x2b8] sm:$0xff]
      %v417 = vld [vmem:[%s3 + $0x2c0] sm:$0xff]
      %v418 = vld [vmem:[%s3 + $0x2c8] sm:$0xff]
      %v419 = vld [vmem:[%s3 + $0x2d0] sm:$0xff]
      %v420 = vld [vmem:[%s3 + $0x2d8] sm:$0xff]
      %v421 = vld [vmem:[%s3 + $0x2e0] sm:$0xff]
      %v422 = vld [vmem:[%s3 + $0x2e8] sm:$0xff]
      %v423 = vld [vmem:[%s3 + $0x2f0] sm:$0xff]
      %v424 = vld [vmem:[%s3 + $0x2f8] sm:$0xff]
      %v425 = vld [vmem:[%s3 + $0x300] sm:$0xff]
      %v426 = vld [vmem:[%s3 + $0x308] sm:$0xff]
      %v427 = vld [vmem:[%s3 + $0x310] sm:$0xff]
      %v428 = vld [vmem:[%s3 + $0x318] sm:$0xff]
      %v429 = vld [vmem:[%s3 + $0x320] sm:$0xff]
      %v430 = vld [vmem:[%s3 + $0x328] sm:$0xff]
      %v431 = vld [vmem:[%s3 + $0x330] sm:$0xff]
      %v432 = vld [vmem:[%s3 + $0x338] sm:$0xff]
      %v433 = vld [vmem:[%s3 + $0x340] sm:$0xff]
      %v434 = vld [vmem:[%s3 + $0x348] sm:$0xff]
      %v435 = vld [vmem:[%s3 + $0x350] sm:$0xff]
      %v436 = vld [vmem:[%s3 + $0x358] sm:$0xff]
      %v437 = vld [vmem:[%s3 + $0x360] sm:$0xff]
      %v438 = vld [vmem:[%s3 + $0x368] sm:$0xff]
      %v439 = vld [vmem:[%s3 + $0x370] sm:$0xff]
      %v440 = vld [vmem:[%s3 + $0x378] sm:$0xff]
      %v441 = vld [vmem:[%s3 + $0x380] sm:$0xff]
      %v442 = vld [vmem:[%s3 + $0x388] sm:$0xff]
      %v443 = vld [vmem:[%s3 + $0x390] sm:$0xff]
      %v444 = vld [vmem:[%s3 + $0x398] sm:$0xff]
      %v445 = vld [vmem:[%s3 + $0x3a0] sm:$0xff]
      %v446 = vld [vmem:[%s3 + $0x3a8] sm:$0xff]
      %v447 = vld [vmem:[%s3 + $0x3b0] sm:$0xff]
      %v448 = vld [vmem:[%s3 + $0x3b8] sm:$0xff]
      %v449 = vld [vmem:[%s3 + $0x3c0] sm:$0xff]
      %v450 = vld [vmem:[%s3 + $0x3c8] sm:$0xff]
      %v451 = vld [vmem:[%s3 + $0x3d0] sm:$0xff]
      %v452 = vld [vmem:[%s3 + $0x3d8] sm:$0xff]
      %v453 = vld [vmem:[%s3 + $0x3e0] sm:$0xff]
      %v454 = vld [vmem:[%s3 + $0x3e8] sm:$0xff]
      %v455 = vld [vmem:[%s3 + $0x3f0] sm:$0xff]
      %v456 = vld [vmem:[%s3 + $0x3f8] sm:$0xff]
      %v457 = vld [vmem:[%s3 + $0x400] sm:$0xff]
      %v458 = vld [vmem:[%s3 + $0x408] sm:$0xff]
      %v459 = vld [vmem:[%s3 + $0x410] sm:$0xff]
      %v460 = vld [vmem:[%s3 + $0x418] sm:$0xff]
      %v461 = vld [vmem:[%s3 + $0x420] sm:$0xff]
      %v462 = vld [vmem:[%s3 + $0x428] sm:$0xff]
      %v463 = vld [vmem:[%s3 + $0x430] sm:$0xff]
      %v464 = vld [vmem:[%s3 + $0x438] sm:$0xff]
      %v465 = vld [vmem:[%s3 + $0x440] sm:$0xff]
      %v466 = vld [vmem:[%s3 + $0x448] sm:$0xff]
      %v467 = vld [vmem:[%s3 + $0x450] sm:$0xff]
      %v468 = vld [vmem:[%s3 + $0x458] sm:$0xff]
      %v469 = vld [vmem:[%s3 + $0x460] sm:$0xff]
      %v470 = vld [vmem:[%s3 + $0x468] sm:$0xff]
      %v471 = vld [vmem:[%s3 + $0x470] sm:$0xff]
      %v472 = vld [vmem:[%s3 + $0x478] sm:$0xff]
      %v473 = vld [vmem:[%s3 + $0x480] sm:$0xff]
      %v474 = vld [vmem:[%s3 + $0x488] sm:$0xff]
      %v475 = vld [vmem:[%s3 + $0x490] sm:$0xff]
      %v476 = vld [vmem:[%s3 + $0x498] sm:$0xff]
      %v477 = vld [vmem:[%s3 + $0x4a0] sm:$0xff]
      %v478 = vld [vmem:[%s3 + $0x4a8] sm:$0xff]
      %v479 = vld [vmem:[%s3 + $0x4b0] sm:$0xff]
      %v480 = vld [vmem:[%s3 + $0x4b8] sm:$0xff]
      %v481 = vld [vmem:[%s3 + $0x4c0] sm:$0xff]
      %v482 = vld [vmem:[%s3 + $0x4c8] sm:$0xff]
      %v483 = vld [vmem:[%s3 + $0x4d0] sm:$0xff]
      %v484 = vld [vmem:[%s3 + $0x4d8] sm:$0xff]
      %v485 = vld [vmem:[%s3 + $0x4e0] sm:$0xff]
      %v486 = vld [vmem:[%s3 + $0x4e8] sm:$0xff]
      %v487 = vld [vmem:[%s3 + $0x4f0] sm:$0xff]
      %v488 = vld [vmem:[%s3 + $0x4f8] sm:$0xff]
      %v489 = vld [vmem:[%s3 + $0x500] sm:$0xff]
      %v490 = vld [vmem:[%s3 + $0x508] sm:$0xff]
      %v491 = vld [vmem:[%s3 + $0x510] sm:$0xff]
      %v492 = vld [vmem:[%s3 + $0x518] sm:$0xff]
      %v493 = vld [vmem:[%s3 + $0x520] sm:$0xff]
      %v494 = vld [vmem:[%s3 + $0x528] sm:$0xff]
      %v495 = vld [vmem:[%s3 + $0x530] sm:$0xff]
      %v496 = vld [vmem:[%s3 + $0x538] sm:$0xff]
      %v497 = vld [vmem:[%s3 + $0x540] sm:$0xff]
      %v498 = vld [vmem:[%s3 + $0x548] sm:$0xff]
      %v499 = vld [vmem:[%s3 + $0x550] sm:$0xff]
      %v500 = vld [vmem:[%s3 + $0x558] sm:$0xff]
      %v501 = vld [vmem:[%s3 + $0x560] sm:$0xff]
      %v502 = vld [vmem:[%s3 + $0x568] sm:$0xff]
      %v503 = vld [vmem:[%s3 + $0x570] sm:$0xff]
      %v504 = vld [vmem:[%s3 + $0x578] sm:$0xff]
      %v505 = vld [vmem:[%s3 + $0x580] sm:$0xff]
      %v506 = vld [vmem:[%s3 + $0x588] sm:$0xff]
      %v507 = vld [vmem:[%s3 + $0x590] sm:$0xff]
      %v508 = vld [vmem:[%s3 + $0x598] sm:$0xff]
      %v509 = vld [vmem:[%s3 + $0x5a0] sm:$0xff]
      %v510 = vld [vmem:[%s3 + $0x5a8] sm:$0xff]
      %v511 = vld [vmem:[%s3 + $0x5b0] sm:$0xff]
      %v512 = vld [vmem:[%s3 + $0x5b8] sm:$0xff]
      %v513 = vld [vmem:[%s3 + $0x5c0] sm:$0xff]
      %v514 = vld [vmem:[%s3 + $0x5c8] sm:$0xff]
      %v515 = vld [vmem:[%s3 + $0x5d0] sm:$0xff]
      %v516 = vld [vmem:[%s3 + $0x5d8] sm:$0xff]
      %v517 = vld [vmem:[%s3 + $0x5e0] sm:$0xff]
      %v518 = vld [vmem:[%s3 + $0x5e8] sm:$0xff]
      %v519 = vld [vmem:[%s3 + $0x5f0] sm:$0xff]
      %v520 = vld [vmem:[%s3 + $0x5f8] sm:$0xff]
      %v521 = vld [vmem:[%s3 + $0x600] sm:$0xff]
      %v522 = vld [vmem:[%s3 + $0x608] sm:$0xff]
      %v523 = vld [vmem:[%s3 + $0x610] sm:$0xff]
      %v524 = vld [vmem:[%s3 + $0x618] sm:$0xff]
      %v525 = vld [vmem:[%s3 + $0x620] sm:$0xff]
      %v526 = vld [vmem:[%s3 + $0x628] sm:$0xff]
      %v527 = vld [vmem:[%s3 + $0x630] sm:$0xff]
      %v528 = vld [vmem:[%s3 + $0x638] sm:$0xff]
      %v529 = vld [vmem:[%s3 + $0x640] sm:$0xff]
      %v530 = vld [vmem:[%s3 + $0x648] sm:$0xff]
      %v531 = vld [vmem:[%s3 + $0x650] sm:$0xff]
      %v532 = vld [vmem:[%s3 + $0x658] sm:$0xff]
      %v533 = vld [vmem:[%s3 + $0x660] sm:$0xff]
      %v534 = vld [vmem:[%s3 + $0x668] sm:$0xff]
      %v535 = vld [vmem:[%s3 + $0x670] sm:$0xff]
      %v536 = vld [vmem:[%s3 + $0x678] sm:$0xff]
      %v537 = vld [vmem:[%s3 + $0x680] sm:$0xff]
      %v538 = vld [vmem:[%s3 + $0x688] sm:$0xff]
      %v539 = vld [vmem:[%s3 + $0x690] sm:$0xff]
      %v540 = vld [vmem:[%s3 + $0x698] sm:$0xff]
      %v541 = vld [vmem:[%s3 + $0x6a0] sm:$0xff]
      %v542 = vld [vmem:[%s3 + $0x6a8] sm:$0xff]
      %v543 = vld [vmem:[%s3 + $0x6b0] sm:$0xff]
      %v544 = vld [vmem:[%s3 + $0x6b8] sm:$0xff]
      %v545 = vld [vmem:[%s3 + $0x6c0] sm:$0xff]
      %v546 = vld [vmem:[%s3 + $0x6c8] sm:$0xff]
      %v547 = vld [vmem:[%s3 + $0x6d0] sm:$0xff]
      %v548 = vld [vmem:[%s3 + $0x6d8] sm:$0xff]
      %v549 = vld [vmem:[%s3 + $0x6e0] sm:$0xff]
      %v550 = vld [vmem:[%s3 + $0x6e8] sm:$0xff]
      %v551 = vld [vmem:[%s3 + $0x6f0] sm:$0xff]
      %v552 = vld [vmem:[%s3 + $0x6f8] sm:$0xff]
      %v553 = vld [vmem:[%s3 + $0x700] sm:$0xff]
      %v554 = vld [vmem:[%s3 + $0x708] sm:$0xff]
      %v555 = vld [vmem:[%s3 + $0x710] sm:$0xff]
      %v556 = vld [vmem:[%s3 + $0x718] sm:$0xff]
      %v557 = vld [vmem:[%s3 + $0x720] sm:$0xff]
      %v558 = vld [vmem:[%s3 + $0x728] sm:$0xff]
      %v559 = vld [vmem:[%s3 + $0x730] sm:$0xff]
      %v560 = vld [vmem:[%s3 + $0x738] sm:$0xff]
      %v561 = vld [vmem:[%s3 + $0x740] sm:$0xff]
      %v562 = vld [vmem:[%s3 + $0x748] sm:$0xff]
      %v563 = vld [vmem:[%s3 + $0x750] sm:$0xff]
      %v564 = vld [vmem:[%s3 + $0x758] sm:$0xff]
      %v565 = vld [vmem:[%s3 + $0x760] sm:$0xff]
      %v566 = vld [vmem:[%s3 + $0x768] sm:$0xff]
      %v567 = vld [vmem:[%s3 + $0x770] sm:$0xff]
      %v568 = vld [vmem:[%s3 + $0x778] sm:$0xff]
      %v569 = vld [vmem:[%s3 + $0x780] sm:$0xff]
      %v570 = vld [vmem:[%s3 + $0x788] sm:$0xff]
      %v571 = vld [vmem:[%s3 + $0x790] sm:$0xff]
      %v572 = vld [vmem:[%s3 + $0x798] sm:$0xff]
      %v573 = vld [vmem:[%s3 + $0x7a0] sm:$0xff]
      %v574 = vld [vmem:[%s3 + $0x7a8] sm:$0xff]
      %v575 = vld [vmem:[%s3 + $0x7b0] sm:$0xff]
      %v576 = vld [vmem:[%s3 + $0x7b8] sm:$0xff]
      %v577 = vld [vmem:[%s3 + $0x7c0] sm:$0xff]
      %v578 = vld [vmem:[%s3 + $0x7c8] sm:$0xff]
      %v579 = vld [vmem:[%s3 + $0x7d0] sm:$0xff]
      %v580 = vld [vmem:[%s3 + $0x7d8] sm:$0xff]
      %v581 = vld [vmem:[%s3 + $0x7e0] sm:$0xff]
      %v582 = vld [vmem:[%s3 + $0x7e8] sm:$0xff]
      %v583 = vld [vmem:[%s3 + $0x7f0] sm:$0xff]
      %v584 = vld [vmem:[%s3 + $0x7f8] sm:$0xff]
      %585 = vmatpush.msra.mxu0 %v312
      %586 = vmatpush.msra.mxu0 %v311
      %587 = vmatpush.msra.mxu0 %v310
      %588 = vmatpush.msra.mxu0 %v309
      %589 = vmatpush.msra.mxu0 %v308
      %590 = vmatpush.msra.mxu0 %v307
      %591 = vmatpush.msra.mxu0 %v306
      %592 = vmatpush.msra.mxu0 %v305
      %593 = vmatpush.msra.mxu0 %v304
      %594 = vmatpush.msra.mxu0 %v303
      %595 = vmatpush.msra.mxu0 %v302
      %596 = vmatpush.msra.mxu0 %v301
      %597 = vmatpush.msra.mxu0 %v300
      %598 = vmatpush.msra.mxu0 %v299
      %599 = vmatpush.msra.mxu0 %v298
      %600 = vmatpush.msra.mxu0 %v297
      %601 = vmatmul.f32.gmra.mxu0 %v329
      %v602 = vpop.f32.mrf.mxu0
      %v603 = vadd.f32 0.0, %v602
      %604 = vmatmul.f32.gmra.mxu0 %v331
      %v605 = vpop.f32.mrf.mxu0
      %v606 = vadd.f32 0.0, %v605
      %607 = vmatmul.f32.gmra.mxu0 %v333
      %v608 = vpop.f32.mrf.mxu0
      %v609 = vadd.f32 0.0, %v608
      %610 = vmatmul.f32.gmra.mxu0 %v335
      %v611 = vpop.f32.mrf.mxu0
      %v612 = vadd.f32 0.0, %v611
      %613 = vmatmul.f32.gmra.mxu0 %v337
      %v614 = vpop.f32.mrf.mxu0
      %v615 = vadd.f32 0.0, %v614
      %616 = vmatmul.f32.gmra.mxu0 %v339
      %v617 = vpop.f32.mrf.mxu0
      %v618 = vadd.f32 0.0, %v617
      %619 = vmatmul.f32.gmra.mxu0 %v341
      %v620 = vpop.f32.mrf.mxu0
      %v621 = vadd.f32 0.0, %v620
      %622 = vmatmul.f32.gmra.mxu0 %v343
      %v623 = vpop.f32.mrf.mxu0
      %v624 = vadd.f32 0.0, %v623
      %625 = vmatmul.f32.gmra.mxu0 %v345
      %v626 = vpop.f32.mrf.mxu0
      %v627 = vadd.f32 0.0, %v626
      %628 = vmatmul.f32.gmra.mxu0 %v347
      %v629 = vpop.f32.mrf.mxu0
      %v630 = vadd.f32 0.0, %v629
      %631 = vmatmul.f32.gmra.mxu0 %v349
      %v632 = vpop.f32.mrf.mxu0
      %v633 = vadd.f32 0.0, %v632
      %634 = vmatmul.f32.gmra.mxu0 %v351
      %v635 = vpop.f32.mrf.mxu0
      %v636 = vadd.f32 0.0, %v635
      %637 = vmatmul.f32.gmra.mxu0 %v353
      %v638 = vpop.f32.mrf.mxu0
      %v639 = vadd.f32 0.0, %v638
      %640 = vmatmul.f32.gmra.mxu0 %v355
      %v641 = vpop.f32.mrf.mxu0
      %v642 = vadd.f32 0.0, %v641
      %643 = vmatmul.f32.gmra.mxu0 %v357
      %v644 = vpop.f32.mrf.mxu0
      %v645 = vadd.f32 0.0, %v644
      %646 = vmatmul.f32.gmra.mxu0 %v359
      %v647 = vpop.f32.mrf.mxu0
      %v648 = vadd.f32 0.0, %v647
      %649 = vmatmul.f32.gmra.mxu0 %v361
      %v650 = vpop.f32.mrf.mxu0
      %v651 = vadd.f32 0.0, %v650
      %652 = vmatmul.f32.gmra.mxu0 %v363
      %v653 = vpop.f32.mrf.mxu0
      %v654 = vadd.f32 0.0, %v653
      %655 = vmatmul.f32.gmra.mxu0 %v365
      %v656 = vpop.f32.mrf.mxu0
      %v657 = vadd.f32 0.0, %v656
      %658 = vmatmul.f32.gmra.mxu0 %v367
      %v659 = vpop.f32.mrf.mxu0
      %v660 = vadd.f32 0.0, %v659
      %661 = vmatmul.f32.gmra.mxu0 %v369
      %v662 = vpop.f32.mrf.mxu0
      %v663 = vadd.f32 0.0, %v662
      %664 = vmatmul.f32.gmra.mxu0 %v371
      %v665 = vpop.f32.mrf.mxu0
      %v666 = vadd.f32 0.0, %v665
      %667 = vmatmul.f32.gmra.mxu0 %v373
      %v668 = vpop.f32.mrf.mxu0
      %v669 = vadd.f32 0.0, %v668
      %670 = vmatmul.f32.gmra.mxu0 %v375
      %v671 = vpop.f32.mrf.mxu0
      %v672 = vadd.f32 0.0, %v671
      %673 = vmatmul.f32.gmra.mxu0 %v377
      %v674 = vpop.f32.mrf.mxu0
      %v675 = vadd.f32 0.0, %v674
      %676 = vmatmul.f32.gmra.mxu0 %v379
      %v677 = vpop.f32.mrf.mxu0
      %v678 = vadd.f32 0.0, %v677
      %679 = vmatmul.f32.gmra.mxu0 %v381
      %v680 = vpop.f32.mrf.mxu0
      %v681 = vadd.f32 0.0, %v680
      %682 = vmatmul.f32.gmra.mxu0 %v383
      %v683 = vpop.f32.mrf.mxu0
      %v684 = vadd.f32 0.0, %v683
      %685 = vmatmul.f32.gmra.mxu0 %v385
      %v686 = vpop.f32.mrf.mxu0
      %v687 = vadd.f32 0.0, %v686
      %688 = vmatmul.f32.gmra.mxu0 %v387
      %v689 = vpop.f32.mrf.mxu0
      %v690 = vadd.f32 0.0, %v689
      %691 = vmatmul.f32.gmra.mxu0 %v389
      %v692 = vpop.f32.mrf.mxu0
      %v693 = vadd.f32 0.0, %v692
      %694 = vmatmul.f32.gmra.mxu0 %v391
      %v695 = vpop.f32.mrf.mxu0
      %v696 = vadd.f32 0.0, %v695
      %697 = vmatmul.f32.gmra.mxu0 %v393
      %v698 = vpop.f32.mrf.mxu0
      %v699 = vadd.f32 0.0, %v698
      %700 = vmatmul.f32.gmra.mxu0 %v395
      %v701 = vpop.f32.mrf.mxu0
      %v702 = vadd.f32 0.0, %v701
      %703 = vmatmul.f32.gmra.mxu0 %v397
      %v704 = vpop.f32.mrf.mxu0
      %v705 = vadd.f32 0.0, %v704
      %706 = vmatmul.f32.gmra.mxu0 %v399
      %v707 = vpop.f32.mrf.mxu0
      %v708 = vadd.f32 0.0, %v707
      %709 = vmatmul.f32.gmra.mxu0 %v401
      %v710 = vpop.f32.mrf.mxu0
      %v711 = vadd.f32 0.0, %v710
      %712 = vmatmul.f32.gmra.mxu0 %v403
      %v713 = vpop.f32.mrf.mxu0
      %v714 = vadd.f32 0.0, %v713
      %715 = vmatmul.f32.gmra.mxu0 %v405
      %v716 = vpop.f32.mrf.mxu0
      %v717 = vadd.f32 0.0, %v716
      %718 = vmatmul.f32.gmra.mxu0 %v407
      %v719 = vpop.f32.mrf.mxu0
      %v720 = vadd.f32 0.0, %v719
      %721 = vmatmul.f32.gmra.mxu0 %v409
      %v722 = vpop.f32.mrf.mxu0
      %v723 = vadd.f32 0.0, %v722
      %724 = vmatmul.f32.gmra.mxu0 %v411
      %v725 = vpop.f32.mrf.mxu0
      %v726 = vadd.f32 0.0, %v725
      %727 = vmatmul.f32.gmra.mxu0 %v413
      %v728 = vpop.f32.mrf.mxu0
      %v729 = vadd.f32 0.0, %v728
      %730 = vmatmul.f32.gmra.mxu0 %v415
      %v731 = vpop.f32.mrf.mxu0
      %v732 = vadd.f32 0.0, %v731
      %733 = vmatmul.f32.gmra.mxu0 %v417
      %v734 = vpop.f32.mrf.mxu0
      %v735 = vadd.f32 0.0, %v734
      %736 = vmatmul.f32.gmra.mxu0 %v419
      %v737 = vpop.f32.mrf.mxu0
      %v738 = vadd.f32 0.0, %v737
      %739 = vmatmul.f32.gmra.mxu0 %v421
      %v740 = vpop.f32.mrf.mxu0
      %v741 = vadd.f32 0.0, %v740
      %742 = vmatmul.f32.gmra.mxu0 %v423
      %v743 = vpop.f32.mrf.mxu0
      %v744 = vadd.f32 0.0, %v743
      %745 = vmatmul.f32.gmra.mxu0 %v425
      %v746 = vpop.f32.mrf.mxu0
      %v747 = vadd.f32 0.0, %v746
      %748 = vmatmul.f32.gmra.mxu0 %v427
      %v749 = vpop.f32.mrf.mxu0
      %v750 = vadd.f32 0.0, %v749
      %751 = vmatmul.f32.gmra.mxu0 %v429
      %v752 = vpop.f32.mrf.mxu0
      %v753 = vadd.f32 0.0, %v752
      %754 = vmatmul.f32.gmra.mxu0 %v431
      %v755 = vpop.f32.mrf.mxu0
      %v756 = vadd.f32 0.0, %v755
      %757 = vmatmul.f32.gmra.mxu0 %v433
      %v758 = vpop.f32.mrf.mxu0
      %v759 = vadd.f32 0.0, %v758
      %760 = vmatmul.f32.gmra.mxu0 %v435
      %v761 = vpop.f32.mrf.mxu0
      %v762 = vadd.f32 0.0, %v761
      %763 = vmatmul.f32.gmra.mxu0 %v437
      %v764 = vpop.f32.mrf.mxu0
      %v765 = vadd.f32 0.0, %v764
      %766 = vmatmul.f32.gmra.mxu0 %v439
      %v767 = vpop.f32.mrf.mxu0
      %v768 = vadd.f32 0.0, %v767
      %769 = vmatmul.f32.gmra.mxu0 %v441
      %v770 = vpop.f32.mrf.mxu0
      %v771 = vadd.f32 0.0, %v770
      %772 = vmatmul.f32.gmra.mxu0 %v443
      %v773 = vpop.f32.mrf.mxu0
      %v774 = vadd.f32 0.0, %v773
      %775 = vmatmul.f32.gmra.mxu0 %v445
      %v776 = vpop.f32.mrf.mxu0
      %v777 = vadd.f32 0.0, %v776
      %778 = vmatmul.f32.gmra.mxu0 %v447
      %v779 = vpop.f32.mrf.mxu0
      %v780 = vadd.f32 0.0, %v779
      %781 = vmatmul.f32.gmra.mxu0 %v449
      %v782 = vpop.f32.mrf.mxu0
      %v783 = vadd.f32 0.0, %v782
      %784 = vmatmul.f32.gmra.mxu0 %v451
      %v785 = vpop.f32.mrf.mxu0
      %v786 = vadd.f32 0.0, %v785
      %787 = vmatmul.f32.gmra.mxu0 %v453
      %v788 = vpop.f32.mrf.mxu0
      %v789 = vadd.f32 0.0, %v788
      %790 = vmatmul.f32.gmra.mxu0 %v455
      %v791 = vpop.f32.mrf.mxu0
      %v792 = vadd.f32 0.0, %v791
      %793 = vmatmul.f32.gmra.mxu0 %v457
      %v794 = vpop.f32.mrf.mxu0
      %v795 = vadd.f32 0.0, %v794
      %796 = vmatmul.f32.gmra.mxu0 %v459
      %v797 = vpop.f32.mrf.mxu0
      %v798 = vadd.f32 0.0, %v797
      %799 = vmatmul.f32.gmra.mxu0 %v461
      %v800 = vpop.f32.mrf.mxu0
      %v801 = vadd.f32 0.0, %v800
      %802 = vmatmul.f32.gmra.mxu0 %v463
      %v803 = vpop.f32.mrf.mxu0
      %v804 = vadd.f32 0.0, %v803
      %805 = vmatmul.f32.gmra.mxu0 %v465
      %v806 = vpop.f32.mrf.mxu0
      %v807 = vadd.f32 0.0, %v806
      %808 = vmatmul.f32.gmra.mxu0 %v467
      %v809 = vpop.f32.mrf.mxu0
      %v810 = vadd.f32 0.0, %v809
      %811 = vmatmul.f32.gmra.mxu0 %v469
      %v812 = vpop.f32.mrf.mxu0
      %v813 = vadd.f32 0.0, %v812
      %814 = vmatmul.f32.gmra.mxu0 %v471
      %v815 = vpop.f32.mrf.mxu0
      %v816 = vadd.f32 0.0, %v815
      %817 = vmatmul.f32.gmra.mxu0 %v473
      %v818 = vpop.f32.mrf.mxu0
      %v819 = vadd.f32 0.0, %v818
      %820 = vmatmul.f32.gmra.mxu0 %v475
      %v821 = vpop.f32.mrf.mxu0
      %v822 = vadd.f32 0.0, %v821
      %823 = vmatmul.f32.gmra.mxu0 %v477
      %v824 = vpop.f32.mrf.mxu0
      %v825 = vadd.f32 0.0, %v824
      %826 = vmatmul.f32.gmra.mxu0 %v479
      %v827 = vpop.f32.mrf.mxu0
      %v828 = vadd.f32 0.0, %v827
      %829 = vmatmul.f32.gmra.mxu0 %v481
      %v830 = vpop.f32.mrf.mxu0
      %v831 = vadd.f32 0.0, %v830
      %832 = vmatmul.f32.gmra.mxu0 %v483
      %v833 = vpop.f32.mrf.mxu0
      %v834 = vadd.f32 0.0, %v833
      %835 = vmatmul.f32.gmra.mxu0 %v485
      %v836 = vpop.f32.mrf.mxu0
      %v837 = vadd.f32 0.0, %v836
      %838 = vmatmul.f32.gmra.mxu0 %v487
      %v839 = vpop.f32.mrf.mxu0
      %v840 = vadd.f32 0.0, %v839
      %841 = vmatmul.f32.gmra.mxu0 %v489
      %v842 = vpop.f32.mrf.mxu0
      %v843 = vadd.f32 0.0, %v842
      %844 = vmatmul.f32.gmra.mxu0 %v491
      %v845 = vpop.f32.mrf.mxu0
      %v846 = vadd.f32 0.0, %v845
      %847 = vmatmul.f32.gmra.mxu0 %v493
      %v848 = vpop.f32.mrf.mxu0
      %v849 = vadd.f32 0.0, %v848
      %850 = vmatmul.f32.gmra.mxu0 %v495
      %v851 = vpop.f32.mrf.mxu0
      %v852 = vadd.f32 0.0, %v851
      %853 = vmatmul.f32.gmra.mxu0 %v497
      %v854 = vpop.f32.mrf.mxu0
      %v855 = vadd.f32 0.0, %v854
      %856 = vmatmul.f32.gmra.mxu0 %v499
      %v857 = vpop.f32.mrf.mxu0
      %v858 = vadd.f32 0.0, %v857
      %859 = vmatmul.f32.gmra.mxu0 %v501
      %v860 = vpop.f32.mrf.mxu0
      %v861 = vadd.f32 0.0, %v860
      %862 = vmatmul.f32.gmra.mxu0 %v503
      %v863 = vpop.f32.mrf.mxu0
      %v864 = vadd.f32 0.0, %v863
      %865 = vmatmul.f32.gmra.mxu0 %v505
      %v866 = vpop.f32.mrf.mxu0
      %v867 = vadd.f32 0.0, %v866
      %868 = vmatmul.f32.gmra.mxu0 %v507
      %v869 = vpop.f32.mrf.mxu0
      %v870 = vadd.f32 0.0, %v869
      %871 = vmatmul.f32.gmra.mxu0 %v509
      %v872 = vpop.f32.mrf.mxu0
      %v873 = vadd.f32 0.0, %v872
      %874 = vmatmul.f32.gmra.mxu0 %v511
      %v875 = vpop.f32.mrf.mxu0
      %v876 = vadd.f32 0.0, %v875
      %877 = vmatmul.f32.gmra.mxu0 %v513
      %v878 = vpop.f32.mrf.mxu0
      %v879 = vadd.f32 0.0, %v878
      %880 = vmatmul.f32.gmra.mxu0 %v515
      %v881 = vpop.f32.mrf.mxu0
      %v882 = vadd.f32 0.0, %v881
      %883 = vmatmul.f32.gmra.mxu0 %v517
      %v884 = vpop.f32.mrf.mxu0
      %v885 = vadd.f32 0.0, %v884
      %886 = vmatmul.f32.gmra.mxu0 %v519
      %v887 = vpop.f32.mrf.mxu0
      %v888 = vadd.f32 0.0, %v887
      %889 = vmatmul.f32.gmra.mxu0 %v521
      %v890 = vpop.f32.mrf.mxu0
      %v891 = vadd.f32 0.0, %v890
      %892 = vmatmul.f32.gmra.mxu0 %v523
      %v893 = vpop.f32.mrf.mxu0
      %v894 = vadd.f32 0.0, %v893
      %895 = vmatmul.f32.gmra.mxu0 %v525
      %v896 = vpop.f32.mrf.mxu0
      %v897 = vadd.f32 0.0, %v896
      %898 = vmatmul.f32.gmra.mxu0 %v527
      %v899 = vpop.f32.mrf.mxu0
      %v900 = vadd.f32 0.0, %v899
      %901 = vmatmul.f32.gmra.mxu0 %v529
      %v902 = vpop.f32.mrf.mxu0
      %v903 = vadd.f32 0.0, %v902
      %904 = vmatmul.f32.gmra.mxu0 %v531
      %v905 = vpop.f32.mrf.mxu0
      %v906 = vadd.f32 0.0, %v905
      %907 = vmatmul.f32.gmra.mxu0 %v533
      %v908 = vpop.f32.mrf.mxu0
      %v909 = vadd.f32 0.0, %v908
      %910 = vmatmul.f32.gmra.mxu0 %v535
      %v911 = vpop.f32.mrf.mxu0
      %v912 = vadd.f32 0.0, %v911
      %913 = vmatmul.f32.gmra.mxu0 %v537
      %v914 = vpop.f32.mrf.mxu0
      %v915 = vadd.f32 0.0, %v914
      %916 = vmatmul.f32.gmra.mxu0 %v539
      %v917 = vpop.f32.mrf.mxu0
      %v918 = vadd.f32 0.0, %v917
      %919 = vmatmul.f32.gmra.mxu0 %v541
      %v920 = vpop.f32.mrf.mxu0
      %v921 = vadd.f32 0.0, %v920
      %922 = vmatmul.f32.gmra.mxu0 %v543
      %v923 = vpop.f32.mrf.mxu0
      %v924 = vadd.f32 0.0, %v923
      %925 = vmatmul.f32.gmra.mxu0 %v545
      %v926 = vpop.f32.mrf.mxu0
      %v927 = vadd.f32 0.0, %v926
      %928 = vmatmul.f32.gmra.mxu0 %v547
      %v929 = vpop.f32.mrf.mxu0
      %v930 = vadd.f32 0.0, %v929
      %931 = vmatmul.f32.gmra.mxu0 %v549
      %v932 = vpop.f32.mrf.mxu0
      %v933 = vadd.f32 0.0, %v932
      %934 = vmatmul.f32.gmra.mxu0 %v551
      %v935 = vpop.f32.mrf.mxu0
      %v936 = vadd.f32 0.0, %v935
      %937 = vmatmul.f32.gmra.mxu0 %v553
      %v938 = vpop.f32.mrf.mxu0
      %v939 = vadd.f32 0.0, %v938
      %940 = vmatmul.f32.gmra.mxu0 %v555
      %v941 = vpop.f32.mrf.mxu0
      %v942 = vadd.f32 0.0, %v941
      %943 = vmatmul.f32.gmra.mxu0 %v557
      %v944 = vpop.f32.mrf.mxu0
      %v945 = vadd.f32 0.0, %v944
      %946 = vmatmul.f32.gmra.mxu0 %v559
      %v947 = vpop.f32.mrf.mxu0
      %v948 = vadd.f32 0.0, %v947
      %949 = vmatmul.f32.gmra.mxu0 %v561
      %v950 = vpop.f32.mrf.mxu0
      %v951 = vadd.f32 0.0, %v950
      %952 = vmatmul.f32.gmra.mxu0 %v563
      %v953 = vpop.f32.mrf.mxu0
      %v954 = vadd.f32 0.0, %v953
      %955 = vmatmul.f32.gmra.mxu0 %v565
      %v956 = vpop.f32.mrf.mxu0
      %v957 = vadd.f32 0.0, %v956
      %958 = vmatmul.f32.gmra.mxu0 %v567
      %v959 = vpop.f32.mrf.mxu0
      %v960 = vadd.f32 0.0, %v959
      %961 = vmatmul.f32.gmra.mxu0 %v569
      %v962 = vpop.f32.mrf.mxu0
      %v963 = vadd.f32 0.0, %v962
      %964 = vmatmul.f32.gmra.mxu0 %v571
      %v965 = vpop.f32.mrf.mxu0
      %v966 = vadd.f32 0.0, %v965
      %967 = vmatmul.f32.gmra.mxu0 %v573
      %v968 = vpop.f32.mrf.mxu0
      %v969 = vadd.f32 0.0, %v968
      %970 = vmatmul.f32.gmra.mxu0 %v575
      %v971 = vpop.f32.mrf.mxu0
      %v972 = vadd.f32 0.0, %v971
      %973 = vmatmul.f32.gmra.mxu0 %v577
      %v974 = vpop.f32.mrf.mxu0
      %v975 = vadd.f32 0.0, %v974
      %976 = vmatmul.f32.gmra.mxu0 %v579
      %v977 = vpop.f32.mrf.mxu0
      %v978 = vadd.f32 0.0, %v977
      %979 = vmatmul.f32.gmra.mxu0 %v581
      %v980 = vpop.f32.mrf.mxu0
      %v981 = vadd.f32 0.0, %v980
      %982 = vmatmul.f32.gmra.mxu0 %v583
      %v983 = vpop.f32.mrf.mxu0
      %v984 = vadd.f32 0.0, %v983
      %985 = vdwg.mxu0
      %986 = vmatpush.msra.mxu0 %v328
      %987 = vmatpush.msra.mxu0 %v327
      %988 = vmatpush.msra.mxu0 %v326
      %989 = vmatpush.msra.mxu0 %v325
      %990 = vmatpush.msra.mxu0 %v324
      %991 = vmatpush.msra.mxu0 %v323
      %992 = vmatpush.msra.mxu0 %v322
      %993 = vmatpush.msra.mxu0 %v321
      %994 = vmatpush.msra.mxu0 %v320
      %995 = vmatpush.msra.mxu0 %v319
      %996 = vmatpush.msra.mxu0 %v318
      %997 = vmatpush.msra.mxu0 %v317
      %998 = vmatpush.msra.mxu0 %v316
      %999 = vmatpush.msra.mxu0 %v315
      %1000 = vmatpush.msra.mxu0 %v314
      %1001 = vmatpush.msra.mxu0 %v313
      %1002 = vmatmul.f32.gmra.mxu0 %v330
      %v1003 = vpop.f32.mrf.mxu0
      %v1004 = vadd.f32 %v603, %v1003
      %1005 = vmatmul.f32.gmra.mxu0 %v332
      %v1006 = vpop.f32.mrf.mxu0
      %v1007 = vadd.f32 %v606, %v1006
      %1008 = vmatmul.f32.gmra.mxu0 %v334
      %v1009 = vpop.f32.mrf.mxu0
      %v1010 = vadd.f32 %v609, %v1009
      %1011 = vmatmul.f32.gmra.mxu0 %v336
      %v1012 = vpop.f32.mrf.mxu0
      %v1013 = vadd.f32 %v612, %v1012
      %1014 = vmatmul.f32.gmra.mxu0 %v338
      %v1015 = vpop.f32.mrf.mxu0
      %v1016 = vadd.f32 %v615, %v1015
      %1017 = vmatmul.f32.gmra.mxu0 %v340
      %v1018 = vpop.f32.mrf.mxu0
      %v1019 = vadd.f32 %v618, %v1018
      %1020 = vmatmul.f32.gmra.mxu0 %v342
      %v1021 = vpop.f32.mrf.mxu0
      %v1022 = vadd.f32 %v621, %v1021
      %1023 = vmatmul.f32.gmra.mxu0 %v344
      %v1024 = vpop.f32.mrf.mxu0
      %v1025 = vadd.f32 %v624, %v1024
      %1026 = vmatmul.f32.gmra.mxu0 %v346
      %v1027 = vpop.f32.mrf.mxu0
      %v1028 = vadd.f32 %v627, %v1027
      %1029 = vmatmul.f32.gmra.mxu0 %v348
      %v1030 = vpop.f32.mrf.mxu0
      %v1031 = vadd.f32 %v630, %v1030
      %1032 = vmatmul.f32.gmra.mxu0 %v350
      %v1033 = vpop.f32.mrf.mxu0
      %v1034 = vadd.f32 %v633, %v1033
      %1035 = vmatmul.f32.gmra.mxu0 %v352
      %v1036 = vpop.f32.mrf.mxu0
      %v1037 = vadd.f32 %v636, %v1036
      %1038 = vmatmul.f32.gmra.mxu0 %v354
      %v1039 = vpop.f32.mrf.mxu0
      %v1040 = vadd.f32 %v639, %v1039
      %1041 = vmatmul.f32.gmra.mxu0 %v356
      %v1042 = vpop.f32.mrf.mxu0
      %v1043 = vadd.f32 %v642, %v1042
      %1044 = vmatmul.f32.gmra.mxu0 %v358
      %v1045 = vpop.f32.mrf.mxu0
      %v1046 = vadd.f32 %v645, %v1045
      %1047 = vmatmul.f32.gmra.mxu0 %v360
      %v1048 = vpop.f32.mrf.mxu0
      %v1049 = vadd.f32 %v648, %v1048
      %1050 = vmatmul.f32.gmra.mxu0 %v362
      %v1051 = vpop.f32.mrf.mxu0
      %v1052 = vadd.f32 %v651, %v1051
      %1053 = vmatmul.f32.gmra.mxu0 %v364
      %v1054 = vpop.f32.mrf.mxu0
      %v1055 = vadd.f32 %v654, %v1054
      %1056 = vmatmul.f32.gmra.mxu0 %v366
      %v1057 = vpop.f32.mrf.mxu0
      %v1058 = vadd.f32 %v657, %v1057
      %1059 = vmatmul.f32.gmra.mxu0 %v368
      %v1060 = vpop.f32.mrf.mxu0
      %v1061 = vadd.f32 %v660, %v1060
      %1062 = vmatmul.f32.gmra.mxu0 %v370
      %v1063 = vpop.f32.mrf.mxu0
      %v1064 = vadd.f32 %v663, %v1063
      %1065 = vmatmul.f32.gmra.mxu0 %v372
      %v1066 = vpop.f32.mrf.mxu0
      %v1067 = vadd.f32 %v666, %v1066
      %1068 = vmatmul.f32.gmra.mxu0 %v374
      %v1069 = vpop.f32.mrf.mxu0
      %v1070 = vadd.f32 %v669, %v1069
      %1071 = vmatmul.f32.gmra.mxu0 %v376
      %v1072 = vpop.f32.mrf.mxu0
      %v1073 = vadd.f32 %v672, %v1072
      %1074 = vmatmul.f32.gmra.mxu0 %v378
      %v1075 = vpop.f32.mrf.mxu0
      %v1076 = vadd.f32 %v675, %v1075
      %1077 = vmatmul.f32.gmra.mxu0 %v380
      %v1078 = vpop.f32.mrf.mxu0
      %v1079 = vadd.f32 %v678, %v1078
      %1080 = vmatmul.f32.gmra.mxu0 %v382
      %v1081 = vpop.f32.mrf.mxu0
      %v1082 = vadd.f32 %v681, %v1081
      %1083 = vmatmul.f32.gmra.mxu0 %v384
      %v1084 = vpop.f32.mrf.mxu0
      %v1085 = vadd.f32 %v684, %v1084
      %1086 = vmatmul.f32.gmra.mxu0 %v386
      %v1087 = vpop.f32.mrf.mxu0
      %v1088 = vadd.f32 %v687, %v1087
      %1089 = vmatmul.f32.gmra.mxu0 %v388
      %v1090 = vpop.f32.mrf.mxu0
      %v1091 = vadd.f32 %v690, %v1090
      %1092 = vmatmul.f32.gmra.mxu0 %v390
      %v1093 = vpop.f32.mrf.mxu0
      %v1094 = vadd.f32 %v693, %v1093
      %1095 = vmatmul.f32.gmra.mxu0 %v392
      %v1096 = vpop.f32.mrf.mxu0
      %v1097 = vadd.f32 %v696, %v1096
      %1098 = vmatmul.f32.gmra.mxu0 %v394
      %v1099 = vpop.f32.mrf.mxu0
      %v1100 = vadd.f32 %v699, %v1099
      %1101 = vmatmul.f32.gmra.mxu0 %v396
      %v1102 = vpop.f32.mrf.mxu0
      %v1103 = vadd.f32 %v702, %v1102
      %1104 = vmatmul.f32.gmra.mxu0 %v398
      %v1105 = vpop.f32.mrf.mxu0
      %v1106 = vadd.f32 %v705, %v1105
      %1107 = vmatmul.f32.gmra.mxu0 %v400
      %v1108 = vpop.f32.mrf.mxu0
      %v1109 = vadd.f32 %v708, %v1108
      %1110 = vmatmul.f32.gmra.mxu0 %v402
      %v1111 = vpop.f32.mrf.mxu0
      %v1112 = vadd.f32 %v711, %v1111
      %1113 = vmatmul.f32.gmra.mxu0 %v404
      %v1114 = vpop.f32.mrf.mxu0
      %v1115 = vadd.f32 %v714, %v1114
      %1116 = vmatmul.f32.gmra.mxu0 %v406
      %v1117 = vpop.f32.mrf.mxu0
      %v1118 = vadd.f32 %v717, %v1117
      %1119 = vmatmul.f32.gmra.mxu0 %v408
      %v1120 = vpop.f32.mrf.mxu0
      %v1121 = vadd.f32 %v720, %v1120
      %1122 = vmatmul.f32.gmra.mxu0 %v410
      %v1123 = vpop.f32.mrf.mxu0
      %v1124 = vadd.f32 %v723, %v1123
      %1125 = vmatmul.f32.gmra.mxu0 %v412
      %v1126 = vpop.f32.mrf.mxu0
      %v1127 = vadd.f32 %v726, %v1126
      %1128 = vmatmul.f32.gmra.mxu0 %v414
      %v1129 = vpop.f32.mrf.mxu0
      %v1130 = vadd.f32 %v729, %v1129
      %1131 = vmatmul.f32.gmra.mxu0 %v416
      %v1132 = vpop.f32.mrf.mxu0
      %v1133 = vadd.f32 %v732, %v1132
      %1134 = vmatmul.f32.gmra.mxu0 %v418
      %v1135 = vpop.f32.mrf.mxu0
      %v1136 = vadd.f32 %v735, %v1135
      %1137 = vmatmul.f32.gmra.mxu0 %v420
      %v1138 = vpop.f32.mrf.mxu0
      %v1139 = vadd.f32 %v738, %v1138
      %1140 = vmatmul.f32.gmra.mxu0 %v422
      %v1141 = vpop.f32.mrf.mxu0
      %v1142 = vadd.f32 %v741, %v1141
      %1143 = vmatmul.f32.gmra.mxu0 %v424
      %v1144 = vpop.f32.mrf.mxu0
      %v1145 = vadd.f32 %v744, %v1144
      %1146 = vmatmul.f32.gmra.mxu0 %v426
      %v1147 = vpop.f32.mrf.mxu0
      %v1148 = vadd.f32 %v747, %v1147
      %1149 = vmatmul.f32.gmra.mxu0 %v428
      %v1150 = vpop.f32.mrf.mxu0
      %v1151 = vadd.f32 %v750, %v1150
      %1152 = vmatmul.f32.gmra.mxu0 %v430
      %v1153 = vpop.f32.mrf.mxu0
      %v1154 = vadd.f32 %v753, %v1153
      %1155 = vmatmul.f32.gmra.mxu0 %v432
      %v1156 = vpop.f32.mrf.mxu0
      %v1157 = vadd.f32 %v756, %v1156
      %1158 = vmatmul.f32.gmra.mxu0 %v434
      %v1159 = vpop.f32.mrf.mxu0
      %v1160 = vadd.f32 %v759, %v1159
      %1161 = vmatmul.f32.gmra.mxu0 %v436
      %v1162 = vpop.f32.mrf.mxu0
      %v1163 = vadd.f32 %v762, %v1162
      %1164 = vmatmul.f32.gmra.mxu0 %v438
      %v1165 = vpop.f32.mrf.mxu0
      %v1166 = vadd.f32 %v765, %v1165
      %1167 = vmatmul.f32.gmra.mxu0 %v440
      %v1168 = vpop.f32.mrf.mxu0
      %v1169 = vadd.f32 %v768, %v1168
      %1170 = vmatmul.f32.gmra.mxu0 %v442
      %v1171 = vpop.f32.mrf.mxu0
      %v1172 = vadd.f32 %v771, %v1171
      %1173 = vmatmul.f32.gmra.mxu0 %v444
      %v1174 = vpop.f32.mrf.mxu0
      %v1175 = vadd.f32 %v774, %v1174
      %1176 = vmatmul.f32.gmra.mxu0 %v446
      %v1177 = vpop.f32.mrf.mxu0
      %v1178 = vadd.f32 %v777, %v1177
      %1179 = vmatmul.f32.gmra.mxu0 %v448
      %v1180 = vpop.f32.mrf.mxu0
      %v1181 = vadd.f32 %v780, %v1180
      %1182 = vmatmul.f32.gmra.mxu0 %v450
      %v1183 = vpop.f32.mrf.mxu0
      %v1184 = vadd.f32 %v783, %v1183
      %1185 = vmatmul.f32.gmra.mxu0 %v452
      %v1186 = vpop.f32.mrf.mxu0
      %v1187 = vadd.f32 %v786, %v1186
      %1188 = vmatmul.f32.gmra.mxu0 %v454
      %v1189 = vpop.f32.mrf.mxu0
      %v1190 = vadd.f32 %v789, %v1189
      %1191 = vmatmul.f32.gmra.mxu0 %v456
      %v1192 = vpop.f32.mrf.mxu0
      %v1193 = vadd.f32 %v792, %v1192
      %1194 = vmatmul.f32.gmra.mxu0 %v458
      %v1195 = vpop.f32.mrf.mxu0
      %v1196 = vadd.f32 %v795, %v1195
      %1197 = vmatmul.f32.gmra.mxu0 %v460
      %v1198 = vpop.f32.mrf.mxu0
      %v1199 = vadd.f32 %v798, %v1198
      %1200 = vmatmul.f32.gmra.mxu0 %v462
      %v1201 = vpop.f32.mrf.mxu0
      %v1202 = vadd.f32 %v801, %v1201
      %1203 = vmatmul.f32.gmra.mxu0 %v464
      %v1204 = vpop.f32.mrf.mxu0
      %v1205 = vadd.f32 %v804, %v1204
      %1206 = vmatmul.f32.gmra.mxu0 %v466
      %v1207 = vpop.f32.mrf.mxu0
      %v1208 = vadd.f32 %v807, %v1207
      %1209 = vmatmul.f32.gmra.mxu0 %v468
      %v1210 = vpop.f32.mrf.mxu0
      %v1211 = vadd.f32 %v810, %v1210
      %1212 = vmatmul.f32.gmra.mxu0 %v470
      %v1213 = vpop.f32.mrf.mxu0
      %v1214 = vadd.f32 %v813, %v1213
      %1215 = vmatmul.f32.gmra.mxu0 %v472
      %v1216 = vpop.f32.mrf.mxu0
      %v1217 = vadd.f32 %v816, %v1216
      %1218 = vmatmul.f32.gmra.mxu0 %v474
      %v1219 = vpop.f32.mrf.mxu0
      %v1220 = vadd.f32 %v819, %v1219
      %1221 = vmatmul.f32.gmra.mxu0 %v476
      %v1222 = vpop.f32.mrf.mxu0
      %v1223 = vadd.f32 %v822, %v1222
      %1224 = vmatmul.f32.gmra.mxu0 %v478
      %v1225 = vpop.f32.mrf.mxu0
      %v1226 = vadd.f32 %v825, %v1225
      %1227 = vmatmul.f32.gmra.mxu0 %v480
      %v1228 = vpop.f32.mrf.mxu0
      %v1229 = vadd.f32 %v828, %v1228
      %1230 = vmatmul.f32.gmra.mxu0 %v482
      %v1231 = vpop.f32.mrf.mxu0
      %v1232 = vadd.f32 %v831, %v1231
      %1233 = vmatmul.f32.gmra.mxu0 %v484
      %v1234 = vpop.f32.mrf.mxu0
      %v1235 = vadd.f32 %v834, %v1234
      %1236 = vmatmul.f32.gmra.mxu0 %v486
      %v1237 = vpop.f32.mrf.mxu0
      %v1238 = vadd.f32 %v837, %v1237
      %1239 = vmatmul.f32.gmra.mxu0 %v488
      %v1240 = vpop.f32.mrf.mxu0
      %v1241 = vadd.f32 %v840, %v1240
      %1242 = vmatmul.f32.gmra.mxu0 %v490
      %v1243 = vpop.f32.mrf.mxu0
      %v1244 = vadd.f32 %v843, %v1243
      %1245 = vmatmul.f32.gmra.mxu0 %v492
      %v1246 = vpop.f32.mrf.mxu0
      %v1247 = vadd.f32 %v846, %v1246
      %1248 = vmatmul.f32.gmra.mxu0 %v494
      %v1249 = vpop.f32.mrf.mxu0
      %v1250 = vadd.f32 %v849, %v1249
      %1251 = vmatmul.f32.gmra.mxu0 %v496
      %v1252 = vpop.f32.mrf.mxu0
      %v1253 = vadd.f32 %v852, %v1252
      %1254 = vmatmul.f32.gmra.mxu0 %v498
      %v1255 = vpop.f32.mrf.mxu0
      %v1256 = vadd.f32 %v855, %v1255
      %1257 = vmatmul.f32.gmra.mxu0 %v500
      %v1258 = vpop.f32.mrf.mxu0
      %v1259 = vadd.f32 %v858, %v1258
      %1260 = vmatmul.f32.gmra.mxu0 %v502
      %v1261 = vpop.f32.mrf.mxu0
      %v1262 = vadd.f32 %v861, %v1261
      %1263 = vmatmul.f32.gmra.mxu0 %v504
      %v1264 = vpop.f32.mrf.mxu0
      %v1265 = vadd.f32 %v864, %v1264
      %1266 = vmatmul.f32.gmra.mxu0 %v506
      %v1267 = vpop.f32.mrf.mxu0
      %v1268 = vadd.f32 %v867, %v1267
      %1269 = vmatmul.f32.gmra.mxu0 %v508
      %v1270 = vpop.f32.mrf.mxu0
      %v1271 = vadd.f32 %v870, %v1270
      %1272 = vmatmul.f32.gmra.mxu0 %v510
      %v1273 = vpop.f32.mrf.mxu0
      %v1274 = vadd.f32 %v873, %v1273
      %1275 = vmatmul.f32.gmra.mxu0 %v512
      %v1276 = vpop.f32.mrf.mxu0
      %v1277 = vadd.f32 %v876, %v1276
      %1278 = vmatmul.f32.gmra.mxu0 %v514
      %v1279 = vpop.f32.mrf.mxu0
      %v1280 = vadd.f32 %v879, %v1279
      %1281 = vmatmul.f32.gmra.mxu0 %v516
      %v1282 = vpop.f32.mrf.mxu0
      %v1283 = vadd.f32 %v882, %v1282
      %1284 = vmatmul.f32.gmra.mxu0 %v518
      %v1285 = vpop.f32.mrf.mxu0
      %v1286 = vadd.f32 %v885, %v1285
      %1287 = vmatmul.f32.gmra.mxu0 %v520
      %v1288 = vpop.f32.mrf.mxu0
      %v1289 = vadd.f32 %v888, %v1288
      %1290 = vmatmul.f32.gmra.mxu0 %v522
      %v1291 = vpop.f32.mrf.mxu0
      %v1292 = vadd.f32 %v891, %v1291
      %1293 = vmatmul.f32.gmra.mxu0 %v524
      %v1294 = vpop.f32.mrf.mxu0
      %v1295 = vadd.f32 %v894, %v1294
      %1296 = vmatmul.f32.gmra.mxu0 %v526
      %v1297 = vpop.f32.mrf.mxu0
      %v1298 = vadd.f32 %v897, %v1297
      %1299 = vmatmul.f32.gmra.mxu0 %v528
      %v1300 = vpop.f32.mrf.mxu0
      %v1301 = vadd.f32 %v900, %v1300
      %1302 = vmatmul.f32.gmra.mxu0 %v530
      %v1303 = vpop.f32.mrf.mxu0
      %v1304 = vadd.f32 %v903, %v1303
      %1305 = vmatmul.f32.gmra.mxu0 %v532
      %v1306 = vpop.f32.mrf.mxu0
      %v1307 = vadd.f32 %v906, %v1306
      %1308 = vmatmul.f32.gmra.mxu0 %v534
      %v1309 = vpop.f32.mrf.mxu0
      %v1310 = vadd.f32 %v909, %v1309
      %1311 = vmatmul.f32.gmra.mxu0 %v536
      %v1312 = vpop.f32.mrf.mxu0
      %v1313 = vadd.f32 %v912, %v1312
      %1314 = vmatmul.f32.gmra.mxu0 %v538
      %v1315 = vpop.f32.mrf.mxu0
      %v1316 = vadd.f32 %v915, %v1315
      %1317 = vmatmul.f32.gmra.mxu0 %v540
      %v1318 = vpop.f32.mrf.mxu0
      %v1319 = vadd.f32 %v918, %v1318
      %1320 = vmatmul.f32.gmra.mxu0 %v542
      %v1321 = vpop.f32.mrf.mxu0
      %v1322 = vadd.f32 %v921, %v1321
      %1323 = vmatmul.f32.gmra.mxu0 %v544
      %v1324 = vpop.f32.mrf.mxu0
      %v1325 = vadd.f32 %v924, %v1324
      %1326 = vmatmul.f32.gmra.mxu0 %v546
      %v1327 = vpop.f32.mrf.mxu0
      %v1328 = vadd.f32 %v927, %v1327
      %1329 = vmatmul.f32.gmra.mxu0 %v548
      %v1330 = vpop.f32.mrf.mxu0
      %v1331 = vadd.f32 %v930, %v1330
      %1332 = vmatmul.f32.gmra.mxu0 %v550
      %v1333 = vpop.f32.mrf.mxu0
      %v1334 = vadd.f32 %v933, %v1333
      %1335 = vmatmul.f32.gmra.mxu0 %v552
      %v1336 = vpop.f32.mrf.mxu0
      %v1337 = vadd.f32 %v936, %v1336
      %1338 = vmatmul.f32.gmra.mxu0 %v554
      %v1339 = vpop.f32.mrf.mxu0
      %v1340 = vadd.f32 %v939, %v1339
      %1341 = vmatmul.f32.gmra.mxu0 %v556
      %v1342 = vpop.f32.mrf.mxu0
      %v1343 = vadd.f32 %v942, %v1342
      %1344 = vmatmul.f32.gmra.mxu0 %v558
      %v1345 = vpop.f32.mrf.mxu0
      %v1346 = vadd.f32 %v945, %v1345
      %1347 = vmatmul.f32.gmra.mxu0 %v560
      %v1348 = vpop.f32.mrf.mxu0
      %v1349 = vadd.f32 %v948, %v1348
      %1350 = vmatmul.f32.gmra.mxu0 %v562
      %v1351 = vpop.f32.mrf.mxu0
      %v1352 = vadd.f32 %v951, %v1351
      %1353 = vmatmul.f32.gmra.mxu0 %v564
      %v1354 = vpop.f32.mrf.mxu0
      %v1355 = vadd.f32 %v954, %v1354
      %1356 = vmatmul.f32.gmra.mxu0 %v566
      %v1357 = vpop.f32.mrf.mxu0
      %v1358 = vadd.f32 %v957, %v1357
      %1359 = vmatmul.f32.gmra.mxu0 %v568
      %v1360 = vpop.f32.mrf.mxu0
      %v1361 = vadd.f32 %v960, %v1360
      %1362 = vmatmul.f32.gmra.mxu0 %v570
      %v1363 = vpop.f32.mrf.mxu0
      %v1364 = vadd.f32 %v963, %v1363
      %1365 = vmatmul.f32.gmra.mxu0 %v572
      %v1366 = vpop.f32.mrf.mxu0
      %v1367 = vadd.f32 %v966, %v1366
      %1368 = vmatmul.f32.gmra.mxu0 %v574
      %v1369 = vpop.f32.mrf.mxu0
      %v1370 = vadd.f32 %v969, %v1369
      %1371 = vmatmul.f32.gmra.mxu0 %v576
      %v1372 = vpop.f32.mrf.mxu0
      %v1373 = vadd.f32 %v972, %v1372
      %1374 = vmatmul.f32.gmra.mxu0 %v578
      %v1375 = vpop.f32.mrf.mxu0
      %v1376 = vadd.f32 %v975, %v1375
      %1377 = vmatmul.f32.gmra.mxu0 %v580
      %v1378 = vpop.f32.mrf.mxu0
      %v1379 = vadd.f32 %v978, %v1378
      %1380 = vmatmul.f32.gmra.mxu0 %v582
      %v1381 = vpop.f32.mrf.mxu0
      %v1382 = vadd.f32 %v981, %v1381
      %1383 = vmatmul.f32.gmra.mxu0 %v584
      %v1384 = vpop.f32.mrf.mxu0
      %v1385 = vadd.f32 %v984, %v1384
      %1386 = vdwg.mxu0
      %vm1387 = vcmp.ge.f32.partialorder %v1004, 0.0
      %vm1388 = vcmp.ge.f32.partialorder %v1007, 0.0
      %vm1389 = vcmp.ge.f32.partialorder %v1010, 0.0
      %vm1390 = vcmp.ge.f32.partialorder %v1013, 0.0
      %vm1391 = vcmp.ge.f32.partialorder %v1016, 0.0
      %vm1392 = vcmp.ge.f32.partialorder %v1019, 0.0
      %vm1393 = vcmp.ge.f32.partialorder %v1022, 0.0
      %vm1394 = vcmp.ge.f32.partialorder %v1025, 0.0
      %vm1395 = vcmp.ge.f32.partialorder %v1028, 0.0
      %vm1396 = vcmp.ge.f32.partialorder %v1031, 0.0
      %vm1397 = vcmp.ge.f32.partialorder %v1034, 0.0
      %vm1398 = vcmp.ge.f32.partialorder %v1037, 0.0
      %vm1399 = vcmp.ge.f32.partialorder %v1040, 0.0
      %vm1400 = vcmp.ge.f32.partialorder %v1043, 0.0
      %vm1401 = vcmp.ge.f32.partialorder %v1046, 0.0
      %vm1402 = vcmp.ge.f32.partialorder %v1049, 0.0
      %vm1403 = vcmp.ge.f32.partialorder %v1052, 0.0
      %vm1404 = vcmp.ge.f32.partialorder %v1055, 0.0
      %vm1405 = vcmp.ge.f32.partialorder %v1058, 0.0
      %vm1406 = vcmp.ge.f32.partialorder %v1061, 0.0
      %vm1407 = vcmp.ge.f32.partialorder %v1064, 0.0
      %vm1408 = vcmp.ge.f32.partialorder %v1067, 0.0
      %vm1409 = vcmp.ge.f32.partialorder %v1070, 0.0
      %vm1410 = vcmp.ge.f32.partialorder %v1073, 0.0
      %vm1411 = vcmp.ge.f32.partialorder %v1076, 0.0
      %vm1412 = vcmp.ge.f32.partialorder %v1079, 0.0
      %vm1413 = vcmp.ge.f32.partialorder %v1082, 0.0
      %vm1414 = vcmp.ge.f32.partialorder %v1085, 0.0
      %vm1415 = vcmp.ge.f32.partialorder %v1088, 0.0
      %vm1416 = vcmp.ge.f32.partialorder %v1091, 0.0
      %vm1417 = vcmp.ge.f32.partialorder %v1094, 0.0
      %vm1418 = vcmp.ge.f32.partialorder %v1097, 0.0
      %vm1419 = vcmp.ge.f32.partialorder %v1100, 0.0
      %vm1420 = vcmp.ge.f32.partialorder %v1103, 0.0
      %vm1421 = vcmp.ge.f32.partialorder %v1106, 0.0
      %vm1422 = vcmp.ge.f32.partialorder %v1109, 0.0
      %vm1423 = vcmp.ge.f32.partialorder %v1112, 0.0
      %vm1424 = vcmp.ge.f32.partialorder %v1115, 0.0
      %vm1425 = vcmp.ge.f32.partialorder %v1118, 0.0
      %vm1426 = vcmp.ge.f32.partialorder %v1121, 0.0
      %vm1427 = vcmp.ge.f32.partialorder %v1124, 0.0
      %vm1428 = vcmp.ge.f32.partialorder %v1127, 0.0
      %vm1429 = vcmp.ge.f32.partialorder %v1130, 0.0
      %vm1430 = vcmp.ge.f32.partialorder %v1133, 0.0
      %vm1431 = vcmp.ge.f32.partialorder %v1136, 0.0
      %vm1432 = vcmp.ge.f32.partialorder %v1139, 0.0
      %vm1433 = vcmp.ge.f32.partialorder %v1142, 0.0
      %vm1434 = vcmp.ge.f32.partialorder %v1145, 0.0
      %vm1435 = vcmp.ge.f32.partialorder %v1148, 0.0
      %vm1436 = vcmp.ge.f32.partialorder %v1151, 0.0
      %vm1437 = vcmp.ge.f32.partialorder %v1154, 0.0
      %vm1438 = vcmp.ge.f32.partialorder %v1157, 0.0
      %vm1439 = vcmp.ge.f32.partialorder %v1160, 0.0
      %vm1440 = vcmp.ge.f32.partialorder %v1163, 0.0
      %vm1441 = vcmp.ge.f32.partialorder %v1166, 0.0
      %vm1442 = vcmp.ge.f32.partialorder %v1169, 0.0
      %vm1443 = vcmp.ge.f32.partialorder %v1172, 0.0
      %vm1444 = vcmp.ge.f32.partialorder %v1175, 0.0
      %vm1445 = vcmp.ge.f32.partialorder %v1178, 0.0
      %vm1446 = vcmp.ge.f32.partialorder %v1181, 0.0
      %vm1447 = vcmp.ge.f32.partialorder %v1184, 0.0
      %vm1448 = vcmp.ge.f32.partialorder %v1187, 0.0
      %vm1449 = vcmp.ge.f32.partialorder %v1190, 0.0
      %vm1450 = vcmp.ge.f32.partialorder %v1193, 0.0
      %vm1451 = vcmp.ge.f32.partialorder %v1196, 0.0
      %vm1452 = vcmp.ge.f32.partialorder %v1199, 0.0
      %vm1453 = vcmp.ge.f32.partialorder %v1202, 0.0
      %vm1454 = vcmp.ge.f32.partialorder %v1205, 0.0
      %vm1455 = vcmp.ge.f32.partialorder %v1208, 0.0
      %vm1456 = vcmp.ge.f32.partialorder %v1211, 0.0
      %vm1457 = vcmp.ge.f32.partialorder %v1214, 0.0
      %vm1458 = vcmp.ge.f32.partialorder %v1217, 0.0
      %vm1459 = vcmp.ge.f32.partialorder %v1220, 0.0
      %vm1460 = vcmp.ge.f32.partialorder %v1223, 0.0
      %vm1461 = vcmp.ge.f32.partialorder %v1226, 0.0
      %vm1462 = vcmp.ge.f32.partialorder %v1229, 0.0
      %vm1463 = vcmp.ge.f32.partialorder %v1232, 0.0
      %vm1464 = vcmp.ge.f32.partialorder %v1235, 0.0
      %vm1465 = vcmp.ge.f32.partialorder %v1238, 0.0
      %vm1466 = vcmp.ge.f32.partialorder %v1241, 0.0
      %vm1467 = vcmp.ge.f32.partialorder %v1244, 0.0
      %vm1468 = vcmp.ge.f32.partialorder %v1247, 0.0
      %vm1469 = vcmp.ge.f32.partialorder %v1250, 0.0
      %vm1470 = vcmp.ge.f32.partialorder %v1253, 0.0
      %vm1471 = vcmp.ge.f32.partialorder %v1256, 0.0
      %vm1472 = vcmp.ge.f32.partialorder %v1259, 0.0
      %vm1473 = vcmp.ge.f32.partialorder %v1262, 0.0
      %vm1474 = vcmp.ge.f32.partialorder %v1265, 0.0
      %vm1475 = vcmp.ge.f32.partialorder %v1268, 0.0
      %vm1476 = vcmp.ge.f32.partialorder %v1271, 0.0
      %vm1477 = vcmp.ge.f32.partialorder %v1274, 0.0
      %vm1478 = vcmp.ge.f32.partialorder %v1277, 0.0
      %vm1479 = vcmp.ge.f32.partialorder %v1280, 0.0
      %vm1480 = vcmp.ge.f32.partialorder %v1283, 0.0
      %vm1481 = vcmp.ge.f32.partialorder %v1286, 0.0
      %vm1482 = vcmp.ge.f32.partialorder %v1289, 0.0
      %vm1483 = vcmp.ge.f32.partialorder %v1292, 0.0
      %vm1484 = vcmp.ge.f32.partialorder %v1295, 0.0
      %vm1485 = vcmp.ge.f32.partialorder %v1298, 0.0
      %vm1486 = vcmp.ge.f32.partialorder %v1301, 0.0
      %vm1487 = vcmp.ge.f32.partialorder %v1304, 0.0
      %vm1488 = vcmp.ge.f32.partialorder %v1307, 0.0
      %vm1489 = vcmp.ge.f32.partialorder %v1310, 0.0
      %vm1490 = vcmp.ge.f32.partialorder %v1313, 0.0
      %vm1491 = vcmp.ge.f32.partialorder %v1316, 0.0
      %vm1492 = vcmp.ge.f32.partialorder %v1319, 0.0
      %vm1493 = vcmp.ge.f32.partialorder %v1322, 0.0
      %vm1494 = vcmp.ge.f32.partialorder %v1325, 0.0
      %vm1495 = vcmp.ge.f32.partialorder %v1328, 0.0
      %vm1496 = vcmp.ge.f32.partialorder %v1331, 0.0
      %vm1497 = vcmp.ge.f32.partialorder %v1334, 0.0
      %vm1498 = vcmp.ge.f32.partialorder %v1337, 0.0
      %vm1499 = vcmp.ge.f32.partialorder %v1340, 0.0
      %vm1500 = vcmp.ge.f32.partialorder %v1343, 0.0
      %vm1501 = vcmp.ge.f32.partialorder %v1346, 0.0
      %vm1502 = vcmp.ge.f32.partialorder %v1349, 0.0
      %vm1503 = vcmp.ge.f32.partialorder %v1352, 0.0
      %vm1504 = vcmp.ge.f32.partialorder %v1355, 0.0
      %vm1505 = vcmp.ge.f32.partialorder %v1358, 0.0
      %vm1506 = vcmp.ge.f32.partialorder %v1361, 0.0
      %vm1507 = vcmp.ge.f32.partialorder %v1364, 0.0
      %vm1508 = vcmp.ge.f32.partialorder %v1367, 0.0
      %vm1509 = vcmp.ge.f32.partialorder %v1370, 0.0
      %vm1510 = vcmp.ge.f32.partialorder %v1373, 0.0
      %vm1511 = vcmp.ge.f32.partialorder %v1376, 0.0
      %vm1512 = vcmp.ge.f32.partialorder %v1379, 0.0
      %vm1513 = vcmp.ge.f32.partialorder %v1382, 0.0
      %vm1514 = vcmp.ge.f32.partialorder %v1385, 0.0
      %v1515 = vmul.f32 %v1004, 0.01
      %v1516 = vmul.f32 %v1007, 0.01
      %v1517 = vmul.f32 %v1010, 0.01
      %v1518 = vmul.f32 %v1013, 0.01
      %v1519 = vmul.f32 %v1016, 0.01
      %v1520 = vmul.f32 %v1019, 0.01
      %v1521 = vmul.f32 %v1022, 0.01
      %v1522 = vmul.f32 %v1025, 0.01
      %v1523 = vmul.f32 %v1028, 0.01
      %v1524 = vmul.f32 %v1031, 0.01
      %v1525 = vmul.f32 %v1034, 0.01
      %v1526 = vmul.f32 %v1037, 0.01
      %v1527 = vmul.f32 %v1040, 0.01
      %v1528 = vmul.f32 %v1043, 0.01
      %v1529 = vmul.f32 %v1046, 0.01
      %v1530 = vmul.f32 %v1049, 0.01
      %v1531 = vmul.f32 %v1052, 0.01
      %v1532 = vmul.f32 %v1055, 0.01
      %v1533 = vmul.f32 %v1058, 0.01
      %v1534 = vmul.f32 %v1061, 0.01
      %v1535 = vmul.f32 %v1064, 0.01
      %v1536 = vmul.f32 %v1067, 0.01
      %v1537 = vmul.f32 %v1070, 0.01
      %v1538 = vmul.f32 %v1073, 0.01
      %v1539 = vmul.f32 %v1076, 0.01
      %v1540 = vmul.f32 %v1079, 0.01
      %v1541 = vmul.f32 %v1082, 0.01
      %v1542 = vmul.f32 %v1085, 0.01
      %v1543 = vmul.f32 %v1088, 0.01
      %v1544 = vmul.f32 %v1091, 0.01
      %v1545 = vmul.f32 %v1094, 0.01
      %v1546 = vmul.f32 %v1097, 0.01
      %v1547 = vmul.f32 %v1100, 0.01
      %v1548 = vmul.f32 %v1103, 0.01
      %v1549 = vmul.f32 %v1106, 0.01
      %v1550 = vmul.f32 %v1109, 0.01
      %v1551 = vmul.f32 %v1112, 0.01
      %v1552 = vmul.f32 %v1115, 0.01
      %v1553 = vmul.f32 %v1118, 0.01
      %v1554 = vmul.f32 %v1121, 0.01
      %v1555 = vmul.f32 %v1124, 0.01
      %v1556 = vmul.f32 %v1127, 0.01
      %v1557 = vmul.f32 %v1130, 0.01
      %v1558 = vmul.f32 %v1133, 0.01
      %v1559 = vmul.f32 %v1136, 0.01
      %v1560 = vmul.f32 %v1139, 0.01
      %v1561 = vmul.f32 %v1142, 0.01
      %v1562 = vmul.f32 %v1145, 0.01
      %v1563 = vmul.f32 %v1148, 0.01
      %v1564 = vmul.f32 %v1151, 0.01
      %v1565 = vmul.f32 %v1154, 0.01
      %v1566 = vmul.f32 %v1157, 0.01
      %v1567 = vmul.f32 %v1160, 0.01
      %v1568 = vmul.f32 %v1163, 0.01
      %v1569 = vmul.f32 %v1166, 0.01
      %v1570 = vmul.f32 %v1169, 0.01
      %v1571 = vmul.f32 %v1172, 0.01
      %v1572 = vmul.f32 %v1175, 0.01
      %v1573 = vmul.f32 %v1178, 0.01
      %v1574 = vmul.f32 %v1181, 0.01
      %v1575 = vmul.f32 %v1184, 0.01
      %v1576 = vmul.f32 %v1187, 0.01
      %v1577 = vmul.f32 %v1190, 0.01
      %v1578 = vmul.f32 %v1193, 0.01
      %v1579 = vmul.f32 %v1196, 0.01
      %v1580 = vmul.f32 %v1199, 0.01
      %v1581 = vmul.f32 %v1202, 0.01
      %v1582 = vmul.f32 %v1205, 0.01
      %v1583 = vmul.f32 %v1208, 0.01
      %v1584 = vmul.f32 %v1211, 0.01
      %v1585 = vmul.f32 %v1214, 0.01
      %v1586 = vmul.f32 %v1217, 0.01
      %v1587 = vmul.f32 %v1220, 0.01
      %v1588 = vmul.f32 %v1223, 0.01
      %v1589 = vmul.f32 %v1226, 0.01
      %v1590 = vmul.f32 %v1229, 0.01
      %v1591 = vmul.f32 %v1232, 0.01
      %v1592 = vmul.f32 %v1235, 0.01
      %v1593 = vmul.f32 %v1238, 0.01
      %v1594 = vmul.f32 %v1241, 0.01
      %v1595 = vmul.f32 %v1244, 0.01
      %v1596 = vmul.f32 %v1247, 0.01
      %v1597 = vmul.f32 %v1250, 0.01
      %v1598 = vmul.f32 %v1253, 0.01
      %v1599 = vmul.f32 %v1256, 0.01
      %v1600 = vmul.f32 %v1259, 0.01
      %v1601 = vmul.f32 %v1262, 0.01
      %v1602 = vmul.f32 %v1265, 0.01
      %v1603 = vmul.f32 %v1268, 0.01
      %v1604 = vmul.f32 %v1271, 0.01
      %v1605 = vmul.f32 %v1274, 0.01
      %v1606 = vmul.f32 %v1277, 0.01
      %v1607 = vmul.f32 %v1280, 0.01
      %v1608 = vmul.f32 %v1283, 0.01
      %v1609 = vmul.f32 %v1286, 0.01
      %v1610 = vmul.f32 %v1289, 0.01
      %v1611 = vmul.f32 %v1292, 0.01
      %v1612 = vmul.f32 %v1295, 0.01
      %v1613 = vmul.f32 %v1298, 0.01
      %v1614 = vmul.f32 %v1301, 0.01
      %v1615 = vmul.f32 %v1304, 0.01
      %v1616 = vmul.f32 %v1307, 0.01
      %v1617 = vmul.f32 %v1310, 0.01
      %v1618 = vmul.f32 %v1313, 0.01
      %v1619 = vmul.f32 %v1316, 0.01
      %v1620 = vmul.f32 %v1319, 0.01
      %v1621 = vmul.f32 %v1322, 0.01
      %v1622 = vmul.f32 %v1325, 0.01
      %v1623 = vmul.f32 %v1328, 0.01
      %v1624 = vmul.f32 %v1331, 0.01
      %v1625 = vmul.f32 %v1334, 0.01
      %v1626 = vmul.f32 %v1337, 0.01
      %v1627 = vmul.f32 %v1340, 0.01
      %v1628 = vmul.f32 %v1343, 0.01
      %v1629 = vmul.f32 %v1346, 0.01
      %v1630 = vmul.f32 %v1349, 0.01
      %v1631 = vmul.f32 %v1352, 0.01
      %v1632 = vmul.f32 %v1355, 0.01
      %v1633 = vmul.f32 %v1358, 0.01
      %v1634 = vmul.f32 %v1361, 0.01
      %v1635 = vmul.f32 %v1364, 0.01
      %v1636 = vmul.f32 %v1367, 0.01
      %v1637 = vmul.f32 %v1370, 0.01
      %v1638 = vmul.f32 %v1373, 0.01
      %v1639 = vmul.f32 %v1376, 0.01
      %v1640 = vmul.f32 %v1379, 0.01
      %v1641 = vmul.f32 %v1382, 0.01
      %v1642 = vmul.f32 %v1385, 0.01
      %v1643 = vsel %vm1387, %v1004, %v1515
      %v1644 = vsel %vm1388, %v1007, %v1516
      %v1645 = vsel %vm1389, %v1010, %v1517
      %v1646 = vsel %vm1390, %v1013, %v1518
      %v1647 = vsel %vm1391, %v1016, %v1519
      %v1648 = vsel %vm1392, %v1019, %v1520
      %v1649 = vsel %vm1393, %v1022, %v1521
      %v1650 = vsel %vm1394, %v1025, %v1522
      %v1651 = vsel %vm1395, %v1028, %v1523
      %v1652 = vsel %vm1396, %v1031, %v1524
      %v1653 = vsel %vm1397, %v1034, %v1525
      %v1654 = vsel %vm1398, %v1037, %v1526
      %v1655 = vsel %vm1399, %v1040, %v1527
      %v1656 = vsel %vm1400, %v1043, %v1528
      %v1657 = vsel %vm1401, %v1046, %v1529
      %v1658 = vsel %vm1402, %v1049, %v1530
      %v1659 = vsel %vm1403, %v1052, %v1531
      %v1660 = vsel %vm1404, %v1055, %v1532
      %v1661 = vsel %vm1405, %v1058, %v1533
      %v1662 = vsel %vm1406, %v1061, %v1534
      %v1663 = vsel %vm1407, %v1064, %v1535
      %v1664 = vsel %vm1408, %v1067, %v1536
      %v1665 = vsel %vm1409, %v1070, %v1537
      %v1666 = vsel %vm1410, %v1073, %v1538
      %v1667 = vsel %vm1411, %v1076, %v1539
      %v1668 = vsel %vm1412, %v1079, %v1540
      %v1669 = vsel %vm1413, %v1082, %v1541
      %v1670 = vsel %vm1414, %v1085, %v1542
      %v1671 = vsel %vm1415, %v1088, %v1543
      %v1672 = vsel %vm1416, %v1091, %v1544
      %v1673 = vsel %vm1417, %v1094, %v1545
      %v1674 = vsel %vm1418, %v1097, %v1546
      %v1675 = vsel %vm1419, %v1100, %v1547
      %v1676 = vsel %vm1420, %v1103, %v1548
      %v1677 = vsel %vm1421, %v1106, %v1549
      %v1678 = vsel %vm1422, %v1109, %v1550
      %v1679 = vsel %vm1423, %v1112, %v1551
      %v1680 = vsel %vm1424, %v1115, %v1552
      %v1681 = vsel %vm1425, %v1118, %v1553
      %v1682 = vsel %vm1426, %v1121, %v1554
      %v1683 = vsel %vm1427, %v1124, %v1555
      %v1684 = vsel %vm1428, %v1127, %v1556
      %v1685 = vsel %vm1429, %v1130, %v1557
      %v1686 = vsel %vm1430, %v1133, %v1558
      %v1687 = vsel %vm1431, %v1136, %v1559
      %v1688 = vsel %vm1432, %v1139, %v1560
      %v1689 = vsel %vm1433, %v1142, %v1561
      %v1690 = vsel %vm1434, %v1145, %v1562
      %v1691 = vsel %vm1435, %v1148, %v1563
      %v1692 = vsel %vm1436, %v1151, %v1564
      %v1693 = vsel %vm1437, %v1154, %v1565
      %v1694 = vsel %vm1438, %v1157, %v1566
      %v1695 = vsel %vm1439, %v1160, %v1567
      %v1696 = vsel %vm1440, %v1163, %v1568
      %v1697 = vsel %vm1441, %v1166, %v1569
      %v1698 = vsel %vm1442, %v1169, %v1570
      %v1699 = vsel %vm1443, %v1172, %v1571
      %v1700 = vsel %vm1444, %v1175, %v1572
      %v1701 = vsel %vm1445, %v1178, %v1573
      %v1702 = vsel %vm1446, %v1181, %v1574
      %v1703 = vsel %vm1447, %v1184, %v1575
      %v1704 = vsel %vm1448, %v1187, %v1576
      %v1705 = vsel %vm1449, %v1190, %v1577
      %v1706 = vsel %vm1450, %v1193, %v1578
      %v1707 = vsel %vm1451, %v1196, %v1579
      %v1708 = vsel %vm1452, %v1199, %v1580
      %v1709 = vsel %vm1453, %v1202, %v1581
      %v1710 = vsel %vm1454, %v1205, %v1582
      %v1711 = vsel %vm1455, %v1208, %v1583
      %v1712 = vsel %vm1456, %v1211, %v1584
      %v1713 = vsel %vm1457, %v1214, %v1585
      %v1714 = vsel %vm1458, %v1217, %v1586
      %v1715 = vsel %vm1459, %v1220, %v1587
      %v1716 = vsel %vm1460, %v1223, %v1588
      %v1717 = vsel %vm1461, %v1226, %v1589
      %v1718 = vsel %vm1462, %v1229, %v1590
      %v1719 = vsel %vm1463, %v1232, %v1591
      %v1720 = vsel %vm1464, %v1235, %v1592
      %v1721 = vsel %vm1465, %v1238, %v1593
      %v1722 = vsel %vm1466, %v1241, %v1594
      %v1723 = vsel %vm1467, %v1244, %v1595
      %v1724 = vsel %vm1468, %v1247, %v1596
      %v1725 = vsel %vm1469, %v1250, %v1597
      %v1726 = vsel %vm1470, %v1253, %v1598
      %v1727 = vsel %vm1471, %v1256, %v1599
      %v1728 = vsel %vm1472, %v1259, %v1600
      %v1729 = vsel %vm1473, %v1262, %v1601
      %v1730 = vsel %vm1474, %v1265, %v1602
      %v1731 = vsel %vm1475, %v1268, %v1603
      %v1732 = vsel %vm1476, %v1271, %v1604
      %v1733 = vsel %vm1477, %v1274, %v1605
      %v1734 = vsel %vm1478, %v1277, %v1606
      %v1735 = vsel %vm1479, %v1280, %v1607
      %v1736 = vsel %vm1480, %v1283, %v1608
      %v1737 = vsel %vm1481, %v1286, %v1609
      %v1738 = vsel %vm1482, %v1289, %v1610
      %v1739 = vsel %vm1483, %v1292, %v1611
      %v1740 = vsel %vm1484, %v1295, %v1612
      %v1741 = vsel %vm1485, %v1298, %v1613
      %v1742 = vsel %vm1486, %v1301, %v1614
      %v1743 = vsel %vm1487, %v1304, %v1615
      %v1744 = vsel %vm1488, %v1307, %v1616
      %v1745 = vsel %vm1489, %v1310, %v1617
      %v1746 = vsel %vm1490, %v1313, %v1618
      %v1747 = vsel %vm1491, %v1316, %v1619
      %v1748 = vsel %vm1492, %v1319, %v1620
      %v1749 = vsel %vm1493, %v1322, %v1621
      %v1750 = vsel %vm1494, %v1325, %v1622
      %v1751 = vsel %vm1495, %v1328, %v1623
      %v1752 = vsel %vm1496, %v1331, %v1624
      %v1753 = vsel %vm1497, %v1334, %v1625
      %v1754 = vsel %vm1498, %v1337, %v1626
      %v1755 = vsel %vm1499, %v1340, %v1627
      %v1756 = vsel %vm1500, %v1343, %v1628
      %v1757 = vsel %vm1501, %v1346, %v1629
      %v1758 = vsel %vm1502, %v1349, %v1630
      %v1759 = vsel %vm1503, %v1352, %v1631
      %v1760 = vsel %vm1504, %v1355, %v1632
      %v1761 = vsel %vm1505, %v1358, %v1633
      %v1762 = vsel %vm1506, %v1361, %v1634
      %v1763 = vsel %vm1507, %v1364, %v1635
      %v1764 = vsel %vm1508, %v1367, %v1636
      %v1765 = vsel %vm1509, %v1370, %v1637
      %v1766 = vsel %vm1510, %v1373, %v1638
      %v1767 = vsel %vm1511, %v1376, %v1639
      %v1768 = vsel %vm1512, %v1379, %v1640
      %v1769 = vsel %vm1513, %v1382, %v1641
      %v1770 = vsel %vm1514, %v1385, %v1642
      %v1771 = vld [vmem:[%s4] sm:$0xff]
      %v1772 = vld [vmem:[%s4 + $0x8] sm:$0xff]
      %v1773 = vld [vmem:[%s4 + $0x10] sm:$0xff]
      %v1774 = vld [vmem:[%s4 + $0x18] sm:$0xff]
      %v1775 = vld [vmem:[%s4 + $0x20] sm:$0xff]
      %v1776 = vld [vmem:[%s4 + $0x28] sm:$0xff]
      %v1777 = vld [vmem:[%s4 + $0x30] sm:$0xff]
      %v1778 = vld [vmem:[%s4 + $0x38] sm:$0xff]
      %v1779 = vld [vmem:[%s4 + $0x40] sm:$0xff]
      %v1780 = vld [vmem:[%s4 + $0x48] sm:$0xff]
      %v1781 = vld [vmem:[%s4 + $0x50] sm:$0xff]
      %v1782 = vld [vmem:[%s4 + $0x58] sm:$0xff]
      %v1783 = vld [vmem:[%s4 + $0x60] sm:$0xff]
      %v1784 = vld [vmem:[%s4 + $0x68] sm:$0xff]
      %v1785 = vld [vmem:[%s4 + $0x70] sm:$0xff]
      %v1786 = vld [vmem:[%s4 + $0x78] sm:$0xff]
      %v1787 = vld [vmem:[%s4 + $0x80] sm:$0xff]
      %v1788 = vld [vmem:[%s4 + $0x88] sm:$0xff]
      %v1789 = vld [vmem:[%s4 + $0x90] sm:$0xff]
      %v1790 = vld [vmem:[%s4 + $0x98] sm:$0xff]
      %v1791 = vld [vmem:[%s4 + $0xa0] sm:$0xff]
      %v1792 = vld [vmem:[%s4 + $0xa8] sm:$0xff]
      %v1793 = vld [vmem:[%s4 + $0xb0] sm:$0xff]
      %v1794 = vld [vmem:[%s4 + $0xb8] sm:$0xff]
      %v1795 = vld [vmem:[%s4 + $0xc0] sm:$0xff]
      %v1796 = vld [vmem:[%s4 + $0xc8] sm:$0xff]
      %v1797 = vld [vmem:[%s4 + $0xd0] sm:$0xff]
      %v1798 = vld [vmem:[%s4 + $0xd8] sm:$0xff]
      %v1799 = vld [vmem:[%s4 + $0xe0] sm:$0xff]
      %v1800 = vld [vmem:[%s4 + $0xe8] sm:$0xff]
      %v1801 = vld [vmem:[%s4 + $0xf0] sm:$0xff]
      %v1802 = vld [vmem:[%s4 + $0xf8] sm:$0xff]
      %v1803 = vld [vmem:[%s4 + $0x100] sm:$0xff]
      %v1804 = vld [vmem:[%s4 + $0x108] sm:$0xff]
      %v1805 = vld [vmem:[%s4 + $0x110] sm:$0xff]
      %v1806 = vld [vmem:[%s4 + $0x118] sm:$0xff]
      %v1807 = vld [vmem:[%s4 + $0x120] sm:$0xff]
      %v1808 = vld [vmem:[%s4 + $0x128] sm:$0xff]
      %v1809 = vld [vmem:[%s4 + $0x130] sm:$0xff]
      %v1810 = vld [vmem:[%s4 + $0x138] sm:$0xff]
      %v1811 = vld [vmem:[%s4 + $0x140] sm:$0xff]
      %v1812 = vld [vmem:[%s4 + $0x148] sm:$0xff]
      %v1813 = vld [vmem:[%s4 + $0x150] sm:$0xff]
      %v1814 = vld [vmem:[%s4 + $0x158] sm:$0xff]
      %v1815 = vld [vmem:[%s4 + $0x160] sm:$0xff]
      %v1816 = vld [vmem:[%s4 + $0x168] sm:$0xff]
      %v1817 = vld [vmem:[%s4 + $0x170] sm:$0xff]
      %v1818 = vld [vmem:[%s4 + $0x178] sm:$0xff]
      %v1819 = vld [vmem:[%s4 + $0x180] sm:$0xff]
      %v1820 = vld [vmem:[%s4 + $0x188] sm:$0xff]
      %v1821 = vld [vmem:[%s4 + $0x190] sm:$0xff]
      %v1822 = vld [vmem:[%s4 + $0x198] sm:$0xff]
      %v1823 = vld [vmem:[%s4 + $0x1a0] sm:$0xff]
      %v1824 = vld [vmem:[%s4 + $0x1a8] sm:$0xff]
      %v1825 = vld [vmem:[%s4 + $0x1b0] sm:$0xff]
      %v1826 = vld [vmem:[%s4 + $0x1b8] sm:$0xff]
      %v1827 = vld [vmem:[%s4 + $0x1c0] sm:$0xff]
      %v1828 = vld [vmem:[%s4 + $0x1c8] sm:$0xff]
      %v1829 = vld [vmem:[%s4 + $0x1d0] sm:$0xff]
      %v1830 = vld [vmem:[%s4 + $0x1d8] sm:$0xff]
      %v1831 = vld [vmem:[%s4 + $0x1e0] sm:$0xff]
      %v1832 = vld [vmem:[%s4 + $0x1e8] sm:$0xff]
      %v1833 = vld [vmem:[%s4 + $0x1f0] sm:$0xff]
      %v1834 = vld [vmem:[%s4 + $0x1f8] sm:$0xff]
      %v1835 = vld [vmem:[%s4 + $0x200] sm:$0xff]
      %v1836 = vld [vmem:[%s4 + $0x208] sm:$0xff]
      %v1837 = vld [vmem:[%s4 + $0x210] sm:$0xff]
      %v1838 = vld [vmem:[%s4 + $0x218] sm:$0xff]
      %v1839 = vld [vmem:[%s4 + $0x220] sm:$0xff]
      %v1840 = vld [vmem:[%s4 + $0x228] sm:$0xff]
      %v1841 = vld [vmem:[%s4 + $0x230] sm:$0xff]
      %v1842 = vld [vmem:[%s4 + $0x238] sm:$0xff]
      %v1843 = vld [vmem:[%s4 + $0x240] sm:$0xff]
      %v1844 = vld [vmem:[%s4 + $0x248] sm:$0xff]
      %v1845 = vld [vmem:[%s4 + $0x250] sm:$0xff]
      %v1846 = vld [vmem:[%s4 + $0x258] sm:$0xff]
      %v1847 = vld [vmem:[%s4 + $0x260] sm:$0xff]
      %v1848 = vld [vmem:[%s4 + $0x268] sm:$0xff]
      %v1849 = vld [vmem:[%s4 + $0x270] sm:$0xff]
      %v1850 = vld [vmem:[%s4 + $0x278] sm:$0xff]
      %v1851 = vld [vmem:[%s4 + $0x280] sm:$0xff]
      %v1852 = vld [vmem:[%s4 + $0x288] sm:$0xff]
      %v1853 = vld [vmem:[%s4 + $0x290] sm:$0xff]
      %v1854 = vld [vmem:[%s4 + $0x298] sm:$0xff]
      %v1855 = vld [vmem:[%s4 + $0x2a0] sm:$0xff]
      %v1856 = vld [vmem:[%s4 + $0x2a8] sm:$0xff]
      %v1857 = vld [vmem:[%s4 + $0x2b0] sm:$0xff]
      %v1858 = vld [vmem:[%s4 + $0x2b8] sm:$0xff]
      %v1859 = vld [vmem:[%s4 + $0x2c0] sm:$0xff]
      %v1860 = vld [vmem:[%s4 + $0x2c8] sm:$0xff]
      %v1861 = vld [vmem:[%s4 + $0x2d0] sm:$0xff]
      %v1862 = vld [vmem:[%s4 + $0x2d8] sm:$0xff]
      %v1863 = vld [vmem:[%s4 + $0x2e0] sm:$0xff]
      %v1864 = vld [vmem:[%s4 + $0x2e8] sm:$0xff]
      %v1865 = vld [vmem:[%s4 + $0x2f0] sm:$0xff]
      %v1866 = vld [vmem:[%s4 + $0x2f8] sm:$0xff]
      %v1867 = vld [vmem:[%s4 + $0x300] sm:$0xff]
      %v1868 = vld [vmem:[%s4 + $0x308] sm:$0xff]
      %v1869 = vld [vmem:[%s4 + $0x310] sm:$0xff]
      %v1870 = vld [vmem:[%s4 + $0x318] sm:$0xff]
      %v1871 = vld [vmem:[%s4 + $0x320] sm:$0xff]
      %v1872 = vld [vmem:[%s4 + $0x328] sm:$0xff]
      %v1873 = vld [vmem:[%s4 + $0x330] sm:$0xff]
      %v1874 = vld [vmem:[%s4 + $0x338] sm:$0xff]
      %v1875 = vld [vmem:[%s4 + $0x340] sm:$0xff]
      %v1876 = vld [vmem:[%s4 + $0x348] sm:$0xff]
      %v1877 = vld [vmem:[%s4 + $0x350] sm:$0xff]
      %v1878 = vld [vmem:[%s4 + $0x358] sm:$0xff]
      %v1879 = vld [vmem:[%s4 + $0x360] sm:$0xff]
      %v1880 = vld [vmem:[%s4 + $0x368] sm:$0xff]
      %v1881 = vld [vmem:[%s4 + $0x370] sm:$0xff]
      %v1882 = vld [vmem:[%s4 + $0x378] sm:$0xff]
      %v1883 = vld [vmem:[%s4 + $0x380] sm:$0xff]
      %v1884 = vld [vmem:[%s4 + $0x388] sm:$0xff]
      %v1885 = vld [vmem:[%s4 + $0x390] sm:$0xff]
      %v1886 = vld [vmem:[%s4 + $0x398] sm:$0xff]
      %v1887 = vld [vmem:[%s4 + $0x3a0] sm:$0xff]
      %v1888 = vld [vmem:[%s4 + $0x3a8] sm:$0xff]
      %v1889 = vld [vmem:[%s4 + $0x3b0] sm:$0xff]
      %v1890 = vld [vmem:[%s4 + $0x3b8] sm:$0xff]
      %v1891 = vld [vmem:[%s4 + $0x3c0] sm:$0xff]
      %v1892 = vld [vmem:[%s4 + $0x3c8] sm:$0xff]
      %v1893 = vld [vmem:[%s4 + $0x3d0] sm:$0xff]
      %v1894 = vld [vmem:[%s4 + $0x3d8] sm:$0xff]
      %v1895 = vld [vmem:[%s4 + $0x3e0] sm:$0xff]
      %v1896 = vld [vmem:[%s4 + $0x3e8] sm:$0xff]
      %v1897 = vld [vmem:[%s4 + $0x3f0] sm:$0xff]
      %v1898 = vld [vmem:[%s4 + $0x3f8] sm:$0xff]
      %v1899 = vld [vmem:[%s4 + $0x400] sm:$0xff]
      %v1900 = vld [vmem:[%s4 + $0x408] sm:$0xff]
      %v1901 = vld [vmem:[%s4 + $0x410] sm:$0xff]
      %v1902 = vld [vmem:[%s4 + $0x418] sm:$0xff]
      %v1903 = vld [vmem:[%s4 + $0x420] sm:$0xff]
      %v1904 = vld [vmem:[%s4 + $0x428] sm:$0xff]
      %v1905 = vld [vmem:[%s4 + $0x430] sm:$0xff]
      %v1906 = vld [vmem:[%s4 + $0x438] sm:$0xff]
      %v1907 = vld [vmem:[%s4 + $0x440] sm:$0xff]
      %v1908 = vld [vmem:[%s4 + $0x448] sm:$0xff]
      %v1909 = vld [vmem:[%s4 + $0x450] sm:$0xff]
      %v1910 = vld [vmem:[%s4 + $0x458] sm:$0xff]
      %v1911 = vld [vmem:[%s4 + $0x460] sm:$0xff]
      %v1912 = vld [vmem:[%s4 + $0x468] sm:$0xff]
      %v1913 = vld [vmem:[%s4 + $0x470] sm:$0xff]
      %v1914 = vld [vmem:[%s4 + $0x478] sm:$0xff]
      %v1915 = vld [vmem:[%s4 + $0x480] sm:$0xff]
      %v1916 = vld [vmem:[%s4 + $0x488] sm:$0xff]
      %v1917 = vld [vmem:[%s4 + $0x490] sm:$0xff]
      %v1918 = vld [vmem:[%s4 + $0x498] sm:$0xff]
      %v1919 = vld [vmem:[%s4 + $0x4a0] sm:$0xff]
      %v1920 = vld [vmem:[%s4 + $0x4a8] sm:$0xff]
      %v1921 = vld [vmem:[%s4 + $0x4b0] sm:$0xff]
      %v1922 = vld [vmem:[%s4 + $0x4b8] sm:$0xff]
      %v1923 = vld [vmem:[%s4 + $0x4c0] sm:$0xff]
      %v1924 = vld [vmem:[%s4 + $0x4c8] sm:$0xff]
      %v1925 = vld [vmem:[%s4 + $0x4d0] sm:$0xff]
      %v1926 = vld [vmem:[%s4 + $0x4d8] sm:$0xff]
      %v1927 = vld [vmem:[%s4 + $0x4e0] sm:$0xff]
      %v1928 = vld [vmem:[%s4 + $0x4e8] sm:$0xff]
      %v1929 = vld [vmem:[%s4 + $0x4f0] sm:$0xff]
      %v1930 = vld [vmem:[%s4 + $0x4f8] sm:$0xff]
      %v1931 = vld [vmem:[%s4 + $0x500] sm:$0xff]
      %v1932 = vld [vmem:[%s4 + $0x508] sm:$0xff]
      %v1933 = vld [vmem:[%s4 + $0x510] sm:$0xff]
      %v1934 = vld [vmem:[%s4 + $0x518] sm:$0xff]
      %v1935 = vld [vmem:[%s4 + $0x520] sm:$0xff]
      %v1936 = vld [vmem:[%s4 + $0x528] sm:$0xff]
      %v1937 = vld [vmem:[%s4 + $0x530] sm:$0xff]
      %v1938 = vld [vmem:[%s4 + $0x538] sm:$0xff]
      %v1939 = vld [vmem:[%s4 + $0x540] sm:$0xff]
      %v1940 = vld [vmem:[%s4 + $0x548] sm:$0xff]
      %v1941 = vld [vmem:[%s4 + $0x550] sm:$0xff]
      %v1942 = vld [vmem:[%s4 + $0x558] sm:$0xff]
      %v1943 = vld [vmem:[%s4 + $0x560] sm:$0xff]
      %v1944 = vld [vmem:[%s4 + $0x568] sm:$0xff]
      %v1945 = vld [vmem:[%s4 + $0x570] sm:$0xff]
      %v1946 = vld [vmem:[%s4 + $0x578] sm:$0xff]
      %v1947 = vld [vmem:[%s4 + $0x580] sm:$0xff]
      %v1948 = vld [vmem:[%s4 + $0x588] sm:$0xff]
      %v1949 = vld [vmem:[%s4 + $0x590] sm:$0xff]
      %v1950 = vld [vmem:[%s4 + $0x598] sm:$0xff]
      %v1951 = vld [vmem:[%s4 + $0x5a0] sm:$0xff]
      %v1952 = vld [vmem:[%s4 + $0x5a8] sm:$0xff]
      %v1953 = vld [vmem:[%s4 + $0x5b0] sm:$0xff]
      %v1954 = vld [vmem:[%s4 + $0x5b8] sm:$0xff]
      %v1955 = vld [vmem:[%s4 + $0x5c0] sm:$0xff]
      %v1956 = vld [vmem:[%s4 + $0x5c8] sm:$0xff]
      %v1957 = vld [vmem:[%s4 + $0x5d0] sm:$0xff]
      %v1958 = vld [vmem:[%s4 + $0x5d8] sm:$0xff]
      %v1959 = vld [vmem:[%s4 + $0x5e0] sm:$0xff]
      %v1960 = vld [vmem:[%s4 + $0x5e8] sm:$0xff]
      %v1961 = vld [vmem:[%s4 + $0x5f0] sm:$0xff]
      %v1962 = vld [vmem:[%s4 + $0x5f8] sm:$0xff]
      %v1963 = vld [vmem:[%s4 + $0x600] sm:$0xff]
      %v1964 = vld [vmem:[%s4 + $0x608] sm:$0xff]
      %v1965 = vld [vmem:[%s4 + $0x610] sm:$0xff]
      %v1966 = vld [vmem:[%s4 + $0x618] sm:$0xff]
      %v1967 = vld [vmem:[%s4 + $0x620] sm:$0xff]
      %v1968 = vld [vmem:[%s4 + $0x628] sm:$0xff]
      %v1969 = vld [vmem:[%s4 + $0x630] sm:$0xff]
      %v1970 = vld [vmem:[%s4 + $0x638] sm:$0xff]
      %v1971 = vld [vmem:[%s4 + $0x640] sm:$0xff]
      %v1972 = vld [vmem:[%s4 + $0x648] sm:$0xff]
      %v1973 = vld [vmem:[%s4 + $0x650] sm:$0xff]
      %v1974 = vld [vmem:[%s4 + $0x658] sm:$0xff]
      %v1975 = vld [vmem:[%s4 + $0x660] sm:$0xff]
      %v1976 = vld [vmem:[%s4 + $0x668] sm:$0xff]
      %v1977 = vld [vmem:[%s4 + $0x670] sm:$0xff]
      %v1978 = vld [vmem:[%s4 + $0x678] sm:$0xff]
      %v1979 = vld [vmem:[%s4 + $0x680] sm:$0xff]
      %v1980 = vld [vmem:[%s4 + $0x688] sm:$0xff]
      %v1981 = vld [vmem:[%s4 + $0x690] sm:$0xff]
      %v1982 = vld [vmem:[%s4 + $0x698] sm:$0xff]
      %v1983 = vld [vmem:[%s4 + $0x6a0] sm:$0xff]
      %v1984 = vld [vmem:[%s4 + $0x6a8] sm:$0xff]
      %v1985 = vld [vmem:[%s4 + $0x6b0] sm:$0xff]
      %v1986 = vld [vmem:[%s4 + $0x6b8] sm:$0xff]
      %v1987 = vld [vmem:[%s4 + $0x6c0] sm:$0xff]
      %v1988 = vld [vmem:[%s4 + $0x6c8] sm:$0xff]
      %v1989 = vld [vmem:[%s4 + $0x6d0] sm:$0xff]
      %v1990 = vld [vmem:[%s4 + $0x6d8] sm:$0xff]
      %v1991 = vld [vmem:[%s4 + $0x6e0] sm:$0xff]
      %v1992 = vld [vmem:[%s4 + $0x6e8] sm:$0xff]
      %v1993 = vld [vmem:[%s4 + $0x6f0] sm:$0xff]
      %v1994 = vld [vmem:[%s4 + $0x6f8] sm:$0xff]
      %v1995 = vld [vmem:[%s4 + $0x700] sm:$0xff]
      %v1996 = vld [vmem:[%s4 + $0x708] sm:$0xff]
      %v1997 = vld [vmem:[%s4 + $0x710] sm:$0xff]
      %v1998 = vld [vmem:[%s4 + $0x718] sm:$0xff]
      %v1999 = vld [vmem:[%s4 + $0x720] sm:$0xff]
      %v2000 = vld [vmem:[%s4 + $0x728] sm:$0xff]
      %v2001 = vld [vmem:[%s4 + $0x730] sm:$0xff]
      %v2002 = vld [vmem:[%s4 + $0x738] sm:$0xff]
      %v2003 = vld [vmem:[%s4 + $0x740] sm:$0xff]
      %v2004 = vld [vmem:[%s4 + $0x748] sm:$0xff]
      %v2005 = vld [vmem:[%s4 + $0x750] sm:$0xff]
      %v2006 = vld [vmem:[%s4 + $0x758] sm:$0xff]
      %v2007 = vld [vmem:[%s4 + $0x760] sm:$0xff]
      %v2008 = vld [vmem:[%s4 + $0x768] sm:$0xff]
      %v2009 = vld [vmem:[%s4 + $0x770] sm:$0xff]
      %v2010 = vld [vmem:[%s4 + $0x778] sm:$0xff]
      %v2011 = vld [vmem:[%s4 + $0x780] sm:$0xff]
      %v2012 = vld [vmem:[%s4 + $0x788] sm:$0xff]
      %v2013 = vld [vmem:[%s4 + $0x790] sm:$0xff]
      %v2014 = vld [vmem:[%s4 + $0x798] sm:$0xff]
      %v2015 = vld [vmem:[%s4 + $0x7a0] sm:$0xff]
      %v2016 = vld [vmem:[%s4 + $0x7a8] sm:$0xff]
      %v2017 = vld [vmem:[%s4 + $0x7b0] sm:$0xff]
      %v2018 = vld [vmem:[%s4 + $0x7b8] sm:$0xff]
      %v2019 = vld [vmem:[%s4 + $0x7c0] sm:$0xff]
      %v2020 = vld [vmem:[%s4 + $0x7c8] sm:$0xff]
      %v2021 = vld [vmem:[%s4 + $0x7d0] sm:$0xff]
      %v2022 = vld [vmem:[%s4 + $0x7d8] sm:$0xff]
      %v2023 = vld [vmem:[%s4 + $0x7e0] sm:$0xff]
      %v2024 = vld [vmem:[%s4 + $0x7e8] sm:$0xff]
      %v2025 = vld [vmem:[%s4 + $0x7f0] sm:$0xff]
      %v2026 = vld [vmem:[%s4 + $0x7f8] sm:$0xff]
      %2027 = vmatpush.msra.mxu0 %v1658
      %2028 = vmatpush.msra.mxu0 %v1657
      %2029 = vmatpush.msra.mxu0 %v1656
      %2030 = vmatpush.msra.mxu0 %v1655
      %2031 = vmatpush.msra.mxu0 %v1654
      %2032 = vmatpush.msra.mxu0 %v1653
      %2033 = vmatpush.msra.mxu0 %v1652
      %2034 = vmatpush.msra.mxu0 %v1651
      %2035 = vmatpush.msra.mxu0 %v1650
      %2036 = vmatpush.msra.mxu0 %v1649
      %2037 = vmatpush.msra.mxu0 %v1648
      %2038 = vmatpush.msra.mxu0 %v1647
      %2039 = vmatpush.msra.mxu0 %v1646
      %2040 = vmatpush.msra.mxu0 %v1645
      %2041 = vmatpush.msra.mxu0 %v1644
      %2042 = vmatpush.msra.mxu0 %v1643
      %2043 = vmatmul.f32.gmra.mxu0 %v1771
      %v2044 = vpop.f32.mrf.mxu0
      %v2045 = vadd.f32 0.0, %v2044
      %2046 = vmatmul.f32.gmra.mxu0 %v1779
      %v2047 = vpop.f32.mrf.mxu0
      %v2048 = vadd.f32 0.0, %v2047
      %2049 = vmatmul.f32.gmra.mxu0 %v1787
      %v2050 = vpop.f32.mrf.mxu0
      %v2051 = vadd.f32 0.0, %v2050
      %2052 = vmatmul.f32.gmra.mxu0 %v1795
      %v2053 = vpop.f32.mrf.mxu0
      %v2054 = vadd.f32 0.0, %v2053
      %2055 = vmatmul.f32.gmra.mxu0 %v1803
      %v2056 = vpop.f32.mrf.mxu0
      %v2057 = vadd.f32 0.0, %v2056
      %2058 = vmatmul.f32.gmra.mxu0 %v1811
      %v2059 = vpop.f32.mrf.mxu0
      %v2060 = vadd.f32 0.0, %v2059
      %2061 = vmatmul.f32.gmra.mxu0 %v1819
      %v2062 = vpop.f32.mrf.mxu0
      %v2063 = vadd.f32 0.0, %v2062
      %2064 = vmatmul.f32.gmra.mxu0 %v1827
      %v2065 = vpop.f32.mrf.mxu0
      %v2066 = vadd.f32 0.0, %v2065
      %2067 = vmatmul.f32.gmra.mxu0 %v1835
      %v2068 = vpop.f32.mrf.mxu0
      %v2069 = vadd.f32 0.0, %v2068
      %2070 = vmatmul.f32.gmra.mxu0 %v1843
      %v2071 = vpop.f32.mrf.mxu0
      %v2072 = vadd.f32 0.0, %v2071
      %2073 = vmatmul.f32.gmra.mxu0 %v1851
      %v2074 = vpop.f32.mrf.mxu0
      %v2075 = vadd.f32 0.0, %v2074
      %2076 = vmatmul.f32.gmra.mxu0 %v1859
      %v2077 = vpop.f32.mrf.mxu0
      %v2078 = vadd.f32 0.0, %v2077
      %2079 = vmatmul.f32.gmra.mxu0 %v1867
      %v2080 = vpop.f32.mrf.mxu0
      %v2081 = vadd.f32 0.0, %v2080
      %2082 = vmatmul.f32.gmra.mxu0 %v1875
      %v2083 = vpop.f32.mrf.mxu0
      %v2084 = vadd.f32 0.0, %v2083
      %2085 = vmatmul.f32.gmra.mxu0 %v1883
      %v2086 = vpop.f32.mrf.mxu0
      %v2087 = vadd.f32 0.0, %v2086
      %2088 = vmatmul.f32.gmra.mxu0 %v1891
      %v2089 = vpop.f32.mrf.mxu0
      %v2090 = vadd.f32 0.0, %v2089
      %2091 = vmatmul.f32.gmra.mxu0 %v1899
      %v2092 = vpop.f32.mrf.mxu0
      %v2093 = vadd.f32 0.0, %v2092
      %2094 = vmatmul.f32.gmra.mxu0 %v1907
      %v2095 = vpop.f32.mrf.mxu0
      %v2096 = vadd.f32 0.0, %v2095
      %2097 = vmatmul.f32.gmra.mxu0 %v1915
      %v2098 = vpop.f32.mrf.mxu0
      %v2099 = vadd.f32 0.0, %v2098
      %2100 = vmatmul.f32.gmra.mxu0 %v1923
      %v2101 = vpop.f32.mrf.mxu0
      %v2102 = vadd.f32 0.0, %v2101
      %2103 = vmatmul.f32.gmra.mxu0 %v1931
      %v2104 = vpop.f32.mrf.mxu0
      %v2105 = vadd.f32 0.0, %v2104
      %2106 = vmatmul.f32.gmra.mxu0 %v1939
      %v2107 = vpop.f32.mrf.mxu0
      %v2108 = vadd.f32 0.0, %v2107
      %2109 = vmatmul.f32.gmra.mxu0 %v1947
      %v2110 = vpop.f32.mrf.mxu0
      %v2111 = vadd.f32 0.0, %v2110
      %2112 = vmatmul.f32.gmra.mxu0 %v1955
      %v2113 = vpop.f32.mrf.mxu0
      %v2114 = vadd.f32 0.0, %v2113
      %2115 = vmatmul.f32.gmra.mxu0 %v1963
      %v2116 = vpop.f32.mrf.mxu0
      %v2117 = vadd.f32 0.0, %v2116
      %2118 = vmatmul.f32.gmra.mxu0 %v1971
      %v2119 = vpop.f32.mrf.mxu0
      %v2120 = vadd.f32 0.0, %v2119
      %2121 = vmatmul.f32.gmra.mxu0 %v1979
      %v2122 = vpop.f32.mrf.mxu0
      %v2123 = vadd.f32 0.0, %v2122
      %2124 = vmatmul.f32.gmra.mxu0 %v1987
      %v2125 = vpop.f32.mrf.mxu0
      %v2126 = vadd.f32 0.0, %v2125
      %2127 = vmatmul.f32.gmra.mxu0 %v1995
      %v2128 = vpop.f32.mrf.mxu0
      %v2129 = vadd.f32 0.0, %v2128
      %2130 = vmatmul.f32.gmra.mxu0 %v2003
      %v2131 = vpop.f32.mrf.mxu0
      %v2132 = vadd.f32 0.0, %v2131
      %2133 = vmatmul.f32.gmra.mxu0 %v2011
      %v2134 = vpop.f32.mrf.mxu0
      %v2135 = vadd.f32 0.0, %v2134
      %2136 = vmatmul.f32.gmra.mxu0 %v2019
      %v2137 = vpop.f32.mrf.mxu0
      %v2138 = vadd.f32 0.0, %v2137
      %2139 = vdwg.mxu0
      %2140 = vmatpush.msra.mxu0 %v1674
      %2141 = vmatpush.msra.mxu0 %v1673
      %2142 = vmatpush.msra.mxu0 %v1672
      %2143 = vmatpush.msra.mxu0 %v1671
      %2144 = vmatpush.msra.mxu0 %v1670
      %2145 = vmatpush.msra.mxu0 %v1669
      %2146 = vmatpush.msra.mxu0 %v1668
      %2147 = vmatpush.msra.mxu0 %v1667
      %2148 = vmatpush.msra.mxu0 %v1666
      %2149 = vmatpush.msra.mxu0 %v1665
      %2150 = vmatpush.msra.mxu0 %v1664
      %2151 = vmatpush.msra.mxu0 %v1663
      %2152 = vmatpush.msra.mxu0 %v1662
      %2153 = vmatpush.msra.mxu0 %v1661
      %2154 = vmatpush.msra.mxu0 %v1660
      %2155 = vmatpush.msra.mxu0 %v1659
      %2156 = vmatmul.f32.gmra.mxu0 %v1772
      %v2157 = vpop.f32.mrf.mxu0
      %v2158 = vadd.f32 %v2045, %v2157
      %2159 = vmatmul.f32.gmra.mxu0 %v1780
      %v2160 = vpop.f32.mrf.mxu0
      %v2161 = vadd.f32 %v2048, %v2160
      %2162 = vmatmul.f32.gmra.mxu0 %v1788
      %v2163 = vpop.f32.mrf.mxu0
      %v2164 = vadd.f32 %v2051, %v2163
      %2165 = vmatmul.f32.gmra.mxu0 %v1796
      %v2166 = vpop.f32.mrf.mxu0
      %v2167 = vadd.f32 %v2054, %v2166
      %2168 = vmatmul.f32.gmra.mxu0 %v1804
      %v2169 = vpop.f32.mrf.mxu0
      %v2170 = vadd.f32 %v2057, %v2169
      %2171 = vmatmul.f32.gmra.mxu0 %v1812
      %v2172 = vpop.f32.mrf.mxu0
      %v2173 = vadd.f32 %v2060, %v2172
      %2174 = vmatmul.f32.gmra.mxu0 %v1820
      %v2175 = vpop.f32.mrf.mxu0
      %v2176 = vadd.f32 %v2063, %v2175
      %2177 = vmatmul.f32.gmra.mxu0 %v1828
      %v2178 = vpop.f32.mrf.mxu0
      %v2179 = vadd.f32 %v2066, %v2178
      %2180 = vmatmul.f32.gmra.mxu0 %v1836
      %v2181 = vpop.f32.mrf.mxu0
      %v2182 = vadd.f32 %v2069, %v2181
      %2183 = vmatmul.f32.gmra.mxu0 %v1844
      %v2184 = vpop.f32.mrf.mxu0
      %v2185 = vadd.f32 %v2072, %v2184
      %2186 = vmatmul.f32.gmra.mxu0 %v1852
      %v2187 = vpop.f32.mrf.mxu0
      %v2188 = vadd.f32 %v2075, %v2187
      %2189 = vmatmul.f32.gmra.mxu0 %v1860
      %v2190 = vpop.f32.mrf.mxu0
      %v2191 = vadd.f32 %v2078, %v2190
      %2192 = vmatmul.f32.gmra.mxu0 %v1868
      %v2193 = vpop.f32.mrf.mxu0
      %v2194 = vadd.f32 %v2081, %v2193
      %2195 = vmatmul.f32.gmra.mxu0 %v1876
      %v2196 = vpop.f32.mrf.mxu0
      %v2197 = vadd.f32 %v2084, %v2196
      %2198 = vmatmul.f32.gmra.mxu0 %v1884
      %v2199 = vpop.f32.mrf.mxu0
      %v2200 = vadd.f32 %v2087, %v2199
      %2201 = vmatmul.f32.gmra.mxu0 %v1892
      %v2202 = vpop.f32.mrf.mxu0
      %v2203 = vadd.f32 %v2090, %v2202
      %2204 = vmatmul.f32.gmra.mxu0 %v1900
      %v2205 = vpop.f32.mrf.mxu0
      %v2206 = vadd.f32 %v2093, %v2205
      %2207 = vmatmul.f32.gmra.mxu0 %v1908
      %v2208 = vpop.f32.mrf.mxu0
      %v2209 = vadd.f32 %v2096, %v2208
      %2210 = vmatmul.f32.gmra.mxu0 %v1916
      %v2211 = vpop.f32.mrf.mxu0
      %v2212 = vadd.f32 %v2099, %v2211
      %2213 = vmatmul.f32.gmra.mxu0 %v1924
      %v2214 = vpop.f32.mrf.mxu0
      %v2215 = vadd.f32 %v2102, %v2214
      %2216 = vmatmul.f32.gmra.mxu0 %v1932
      %v2217 = vpop.f32.mrf.mxu0
      %v2218 = vadd.f32 %v2105, %v2217
      %2219 = vmatmul.f32.gmra.mxu0 %v1940
      %v2220 = vpop.f32.mrf.mxu0
      %v2221 = vadd.f32 %v2108, %v2220
      %2222 = vmatmul.f32.gmra.mxu0 %v1948
      %v2223 = vpop.f32.mrf.mxu0
      %v2224 = vadd.f32 %v2111, %v2223
      %2225 = vmatmul.f32.gmra.mxu0 %v1956
      %v2226 = vpop.f32.mrf.mxu0
      %v2227 = vadd.f32 %v2114, %v2226
      %2228 = vmatmul.f32.gmra.mxu0 %v1964
      %v2229 = vpop.f32.mrf.mxu0
      %v2230 = vadd.f32 %v2117, %v2229
      %2231 = vmatmul.f32.gmra.mxu0 %v1972
      %v2232 = vpop.f32.mrf.mxu0
      %v2233 = vadd.f32 %v2120, %v2232
      %2234 = vmatmul.f32.gmra.mxu0 %v1980
      %v2235 = vpop.f32.mrf.mxu0
      %v2236 = vadd.f32 %v2123, %v2235
      %2237 = vmatmul.f32.gmra.mxu0 %v1988
      %v2238 = vpop.f32.mrf.mxu0
      %v2239 = vadd.f32 %v2126, %v2238
      %2240 = vmatmul.f32.gmra.mxu0 %v1996
      %v2241 = vpop.f32.mrf.mxu0
      %v2242 = vadd.f32 %v2129, %v2241
      %2243 = vmatmul.f32.gmra.mxu0 %v2004
      %v2244 = vpop.f32.mrf.mxu0
      %v2245 = vadd.f32 %v2132, %v2244
      %2246 = vmatmul.f32.gmra.mxu0 %v2012
      %v2247 = vpop.f32.mrf.mxu0
      %v2248 = vadd.f32 %v2135, %v2247
      %2249 = vmatmul.f32.gmra.mxu0 %v2020
      %v2250 = vpop.f32.mrf.mxu0
      %v2251 = vadd.f32 %v2138, %v2250
      %2252 = vdwg.mxu0
      %2253 = vmatpush.msra.mxu0 %v1690
      %2254 = vmatpush.msra.mxu0 %v1689
      %2255 = vmatpush.msra.mxu0 %v1688
      %2256 = vmatpush.msra.mxu0 %v1687
      %2257 = vmatpush.msra.mxu0 %v1686
      %2258 = vmatpush.msra.mxu0 %v1685
      %2259 = vmatpush.msra.mxu0 %v1684
      %2260 = vmatpush.msra.mxu0 %v1683
      %2261 = vmatpush.msra.mxu0 %v1682
      %2262 = vmatpush.msra.mxu0 %v1681
      %2263 = vmatpush.msra.mxu0 %v1680
      %2264 = vmatpush.msra.mxu0 %v1679
      %2265 = vmatpush.msra.mxu0 %v1678
      %2266 = vmatpush.msra.mxu0 %v1677
      %2267 = vmatpush.msra.mxu0 %v1676
      %2268 = vmatpush.msra.mxu0 %v1675
      %2269 = vmatmul.f32.gmra.mxu0 %v1773
      %v2270 = vpop.f32.mrf.mxu0
      %v2271 = vadd.f32 %v2158, %v2270
      %2272 = vmatmul.f32.gmra.mxu0 %v1781
      %v2273 = vpop.f32.mrf.mxu0
      %v2274 = vadd.f32 %v2161, %v2273
      %2275 = vmatmul.f32.gmra.mxu0 %v1789
      %v2276 = vpop.f32.mrf.mxu0
      %v2277 = vadd.f32 %v2164, %v2276
      %2278 = vmatmul.f32.gmra.mxu0 %v1797
      %v2279 = vpop.f32.mrf.mxu0
      %v2280 = vadd.f32 %v2167, %v2279
      %2281 = vmatmul.f32.gmra.mxu0 %v1805
      %v2282 = vpop.f32.mrf.mxu0
      %v2283 = vadd.f32 %v2170, %v2282
      %2284 = vmatmul.f32.gmra.mxu0 %v1813
      %v2285 = vpop.f32.mrf.mxu0
      %v2286 = vadd.f32 %v2173, %v2285
      %2287 = vmatmul.f32.gmra.mxu0 %v1821
      %v2288 = vpop.f32.mrf.mxu0
      %v2289 = vadd.f32 %v2176, %v2288
      %2290 = vmatmul.f32.gmra.mxu0 %v1829
      %v2291 = vpop.f32.mrf.mxu0
      %v2292 = vadd.f32 %v2179, %v2291
      %2293 = vmatmul.f32.gmra.mxu0 %v1837
      %v2294 = vpop.f32.mrf.mxu0
      %v2295 = vadd.f32 %v2182, %v2294
      %2296 = vmatmul.f32.gmra.mxu0 %v1845
      %v2297 = vpop.f32.mrf.mxu0
      %v2298 = vadd.f32 %v2185, %v2297
      %2299 = vmatmul.f32.gmra.mxu0 %v1853
      %v2300 = vpop.f32.mrf.mxu0
      %v2301 = vadd.f32 %v2188, %v2300
      %2302 = vmatmul.f32.gmra.mxu0 %v1861
      %v2303 = vpop.f32.mrf.mxu0
      %v2304 = vadd.f32 %v2191, %v2303
      %2305 = vmatmul.f32.gmra.mxu0 %v1869
      %v2306 = vpop.f32.mrf.mxu0
      %v2307 = vadd.f32 %v2194, %v2306
      %2308 = vmatmul.f32.gmra.mxu0 %v1877
      %v2309 = vpop.f32.mrf.mxu0
      %v2310 = vadd.f32 %v2197, %v2309
      %2311 = vmatmul.f32.gmra.mxu0 %v1885
      %v2312 = vpop.f32.mrf.mxu0
      %v2313 = vadd.f32 %v2200, %v2312
      %2314 = vmatmul.f32.gmra.mxu0 %v1893
      %v2315 = vpop.f32.mrf.mxu0
      %v2316 = vadd.f32 %v2203, %v2315
      %2317 = vmatmul.f32.gmra.mxu0 %v1901
      %v2318 = vpop.f32.mrf.mxu0
      %v2319 = vadd.f32 %v2206, %v2318
      %2320 = vmatmul.f32.gmra.mxu0 %v1909
      %v2321 = vpop.f32.mrf.mxu0
      %v2322 = vadd.f32 %v2209, %v2321
      %2323 = vmatmul.f32.gmra.mxu0 %v1917
      %v2324 = vpop.f32.mrf.mxu0
      %v2325 = vadd.f32 %v2212, %v2324
      %2326 = vmatmul.f32.gmra.mxu0 %v1925
      %v2327 = vpop.f32.mrf.mxu0
      %v2328 = vadd.f32 %v2215, %v2327
      %2329 = vmatmul.f32.gmra.mxu0 %v1933
      %v2330 = vpop.f32.mrf.mxu0
      %v2331 = vadd.f32 %v2218, %v2330
      %2332 = vmatmul.f32.gmra.mxu0 %v1941
      %v2333 = vpop.f32.mrf.mxu0
      %v2334 = vadd.f32 %v2221, %v2333
      %2335 = vmatmul.f32.gmra.mxu0 %v1949
      %v2336 = vpop.f32.mrf.mxu0
      %v2337 = vadd.f32 %v2224, %v2336
      %2338 = vmatmul.f32.gmra.mxu0 %v1957
      %v2339 = vpop.f32.mrf.mxu0
      %v2340 = vadd.f32 %v2227, %v2339
      %2341 = vmatmul.f32.gmra.mxu0 %v1965
      %v2342 = vpop.f32.mrf.mxu0
      %v2343 = vadd.f32 %v2230, %v2342
      %2344 = vmatmul.f32.gmra.mxu0 %v1973
      %v2345 = vpop.f32.mrf.mxu0
      %v2346 = vadd.f32 %v2233, %v2345
      %2347 = vmatmul.f32.gmra.mxu0 %v1981
      %v2348 = vpop.f32.mrf.mxu0
      %v2349 = vadd.f32 %v2236, %v2348
      %2350 = vmatmul.f32.gmra.mxu0 %v1989
      %v2351 = vpop.f32.mrf.mxu0
      %v2352 = vadd.f32 %v2239, %v2351
      %2353 = vmatmul.f32.gmra.mxu0 %v1997
      %v2354 = vpop.f32.mrf.mxu0
      %v2355 = vadd.f32 %v2242, %v2354
      %2356 = vmatmul.f32.gmra.mxu0 %v2005
      %v2357 = vpop.f32.mrf.mxu0
      %v2358 = vadd.f32 %v2245, %v2357
      %2359 = vmatmul.f32.gmra.mxu0 %v2013
      %v2360 = vpop.f32.mrf.mxu0
      %v2361 = vadd.f32 %v2248, %v2360
      %2362 = vmatmul.f32.gmra.mxu0 %v2021
      %v2363 = vpop.f32.mrf.mxu0
      %v2364 = vadd.f32 %v2251, %v2363
      %2365 = vdwg.mxu0
      %2366 = vmatpush.msra.mxu0 %v1706
      %2367 = vmatpush.msra.mxu0 %v1705
      %2368 = vmatpush.msra.mxu0 %v1704
      %2369 = vmatpush.msra.mxu0 %v1703
      %2370 = vmatpush.msra.mxu0 %v1702
      %2371 = vmatpush.msra.mxu0 %v1701
      %2372 = vmatpush.msra.mxu0 %v1700
      %2373 = vmatpush.msra.mxu0 %v1699
      %2374 = vmatpush.msra.mxu0 %v1698
      %2375 = vmatpush.msra.mxu0 %v1697
      %2376 = vmatpush.msra.mxu0 %v1696
      %2377 = vmatpush.msra.mxu0 %v1695
      %2378 = vmatpush.msra.mxu0 %v1694
      %2379 = vmatpush.msra.mxu0 %v1693
      %2380 = vmatpush.msra.mxu0 %v1692
      %2381 = vmatpush.msra.mxu0 %v1691
      %2382 = vmatmul.f32.gmra.mxu0 %v1774
      %v2383 = vpop.f32.mrf.mxu0
      %v2384 = vadd.f32 %v2271, %v2383
      %2385 = vmatmul.f32.gmra.mxu0 %v1782
      %v2386 = vpop.f32.mrf.mxu0
      %v2387 = vadd.f32 %v2274, %v2386
      %2388 = vmatmul.f32.gmra.mxu0 %v1790
      %v2389 = vpop.f32.mrf.mxu0
      %v2390 = vadd.f32 %v2277, %v2389
      %2391 = vmatmul.f32.gmra.mxu0 %v1798
      %v2392 = vpop.f32.mrf.mxu0
      %v2393 = vadd.f32 %v2280, %v2392
      %2394 = vmatmul.f32.gmra.mxu0 %v1806
      %v2395 = vpop.f32.mrf.mxu0
      %v2396 = vadd.f32 %v2283, %v2395
      %2397 = vmatmul.f32.gmra.mxu0 %v1814
      %v2398 = vpop.f32.mrf.mxu0
      %v2399 = vadd.f32 %v2286, %v2398
      %2400 = vmatmul.f32.gmra.mxu0 %v1822
      %v2401 = vpop.f32.mrf.mxu0
      %v2402 = vadd.f32 %v2289, %v2401
      %2403 = vmatmul.f32.gmra.mxu0 %v1830
      %v2404 = vpop.f32.mrf.mxu0
      %v2405 = vadd.f32 %v2292, %v2404
      %2406 = vmatmul.f32.gmra.mxu0 %v1838
      %v2407 = vpop.f32.mrf.mxu0
      %v2408 = vadd.f32 %v2295, %v2407
      %2409 = vmatmul.f32.gmra.mxu0 %v1846
      %v2410 = vpop.f32.mrf.mxu0
      %v2411 = vadd.f32 %v2298, %v2410
      %2412 = vmatmul.f32.gmra.mxu0 %v1854
      %v2413 = vpop.f32.mrf.mxu0
      %v2414 = vadd.f32 %v2301, %v2413
      %2415 = vmatmul.f32.gmra.mxu0 %v1862
      %v2416 = vpop.f32.mrf.mxu0
      %v2417 = vadd.f32 %v2304, %v2416
      %2418 = vmatmul.f32.gmra.mxu0 %v1870
      %v2419 = vpop.f32.mrf.mxu0
      %v2420 = vadd.f32 %v2307, %v2419
      %2421 = vmatmul.f32.gmra.mxu0 %v1878
      %v2422 = vpop.f32.mrf.mxu0
      %v2423 = vadd.f32 %v2310, %v2422
      %2424 = vmatmul.f32.gmra.mxu0 %v1886
      %v2425 = vpop.f32.mrf.mxu0
      %v2426 = vadd.f32 %v2313, %v2425
      %2427 = vmatmul.f32.gmra.mxu0 %v1894
      %v2428 = vpop.f32.mrf.mxu0
      %v2429 = vadd.f32 %v2316, %v2428
      %2430 = vmatmul.f32.gmra.mxu0 %v1902
      %v2431 = vpop.f32.mrf.mxu0
      %v2432 = vadd.f32 %v2319, %v2431
      %2433 = vmatmul.f32.gmra.mxu0 %v1910
      %v2434 = vpop.f32.mrf.mxu0
      %v2435 = vadd.f32 %v2322, %v2434
      %2436 = vmatmul.f32.gmra.mxu0 %v1918
      %v2437 = vpop.f32.mrf.mxu0
      %v2438 = vadd.f32 %v2325, %v2437
      %2439 = vmatmul.f32.gmra.mxu0 %v1926
      %v2440 = vpop.f32.mrf.mxu0
      %v2441 = vadd.f32 %v2328, %v2440
      %2442 = vmatmul.f32.gmra.mxu0 %v1934
      %v2443 = vpop.f32.mrf.mxu0
      %v2444 = vadd.f32 %v2331, %v2443
      %2445 = vmatmul.f32.gmra.mxu0 %v1942
      %v2446 = vpop.f32.mrf.mxu0
      %v2447 = vadd.f32 %v2334, %v2446
      %2448 = vmatmul.f32.gmra.mxu0 %v1950
      %v2449 = vpop.f32.mrf.mxu0
      %v2450 = vadd.f32 %v2337, %v2449
      %2451 = vmatmul.f32.gmra.mxu0 %v1958
      %v2452 = vpop.f32.mrf.mxu0
      %v2453 = vadd.f32 %v2340, %v2452
      %2454 = vmatmul.f32.gmra.mxu0 %v1966
      %v2455 = vpop.f32.mrf.mxu0
      %v2456 = vadd.f32 %v2343, %v2455
      %2457 = vmatmul.f32.gmra.mxu0 %v1974
      %v2458 = vpop.f32.mrf.mxu0
      %v2459 = vadd.f32 %v2346, %v2458
      %2460 = vmatmul.f32.gmra.mxu0 %v1982
      %v2461 = vpop.f32.mrf.mxu0
      %v2462 = vadd.f32 %v2349, %v2461
      %2463 = vmatmul.f32.gmra.mxu0 %v1990
      %v2464 = vpop.f32.mrf.mxu0
      %v2465 = vadd.f32 %v2352, %v2464
      %2466 = vmatmul.f32.gmra.mxu0 %v1998
      %v2467 = vpop.f32.mrf.mxu0
      %v2468 = vadd.f32 %v2355, %v2467
      %2469 = vmatmul.f32.gmra.mxu0 %v2006
      %v2470 = vpop.f32.mrf.mxu0
      %v2471 = vadd.f32 %v2358, %v2470
      %2472 = vmatmul.f32.gmra.mxu0 %v2014
      %v2473 = vpop.f32.mrf.mxu0
      %v2474 = vadd.f32 %v2361, %v2473
      %2475 = vmatmul.f32.gmra.mxu0 %v2022
      %v2476 = vpop.f32.mrf.mxu0
      %v2477 = vadd.f32 %v2364, %v2476
      %2478 = vdwg.mxu0
      %2479 = vmatpush.msra.mxu0 %v1722
      %2480 = vmatpush.msra.mxu0 %v1721
      %2481 = vmatpush.msra.mxu0 %v1720
      %2482 = vmatpush.msra.mxu0 %v1719
      %2483 = vmatpush.msra.mxu0 %v1718
      %2484 = vmatpush.msra.mxu0 %v1717
      %2485 = vmatpush.msra.mxu0 %v1716
      %2486 = vmatpush.msra.mxu0 %v1715
      %2487 = vmatpush.msra.mxu0 %v1714
      %2488 = vmatpush.msra.mxu0 %v1713
      %2489 = vmatpush.msra.mxu0 %v1712
      %2490 = vmatpush.msra.mxu0 %v1711
      %2491 = vmatpush.msra.mxu0 %v1710
      %2492 = vmatpush.msra.mxu0 %v1709
      %2493 = vmatpush.msra.mxu0 %v1708
      %2494 = vmatpush.msra.mxu0 %v1707
      %2495 = vmatmul.f32.gmra.mxu0 %v1775
      %v2496 = vpop.f32.mrf.mxu0
      %v2497 = vadd.f32 %v2384, %v2496
      %2498 = vmatmul.f32.gmra.mxu0 %v1783
      %v2499 = vpop.f32.mrf.mxu0
      %v2500 = vadd.f32 %v2387, %v2499
      %2501 = vmatmul.f32.gmra.mxu0 %v1791
      %v2502 = vpop.f32.mrf.mxu0
      %v2503 = vadd.f32 %v2390, %v2502
      %2504 = vmatmul.f32.gmra.mxu0 %v1799
      %v2505 = vpop.f32.mrf.mxu0
      %v2506 = vadd.f32 %v2393, %v2505
      %2507 = vmatmul.f32.gmra.mxu0 %v1807
      %v2508 = vpop.f32.mrf.mxu0
      %v2509 = vadd.f32 %v2396, %v2508
      %2510 = vmatmul.f32.gmra.mxu0 %v1815
      %v2511 = vpop.f32.mrf.mxu0
      %v2512 = vadd.f32 %v2399, %v2511
      %2513 = vmatmul.f32.gmra.mxu0 %v1823
      %v2514 = vpop.f32.mrf.mxu0
      %v2515 = vadd.f32 %v2402, %v2514
      %2516 = vmatmul.f32.gmra.mxu0 %v1831
      %v2517 = vpop.f32.mrf.mxu0
      %v2518 = vadd.f32 %v2405, %v2517
      %2519 = vmatmul.f32.gmra.mxu0 %v1839
      %v2520 = vpop.f32.mrf.mxu0
      %v2521 = vadd.f32 %v2408, %v2520
      %2522 = vmatmul.f32.gmra.mxu0 %v1847
      %v2523 = vpop.f32.mrf.mxu0
      %v2524 = vadd.f32 %v2411, %v2523
      %2525 = vmatmul.f32.gmra.mxu0 %v1855
      %v2526 = vpop.f32.mrf.mxu0
      %v2527 = vadd.f32 %v2414, %v2526
      %2528 = vmatmul.f32.gmra.mxu0 %v1863
      %v2529 = vpop.f32.mrf.mxu0
      %v2530 = vadd.f32 %v2417, %v2529
      %2531 = vmatmul.f32.gmra.mxu0 %v1871
      %v2532 = vpop.f32.mrf.mxu0
      %v2533 = vadd.f32 %v2420, %v2532
      %2534 = vmatmul.f32.gmra.mxu0 %v1879
      %v2535 = vpop.f32.mrf.mxu0
      %v2536 = vadd.f32 %v2423, %v2535
      %2537 = vmatmul.f32.gmra.mxu0 %v1887
      %v2538 = vpop.f32.mrf.mxu0
      %v2539 = vadd.f32 %v2426, %v2538
      %2540 = vmatmul.f32.gmra.mxu0 %v1895
      %v2541 = vpop.f32.mrf.mxu0
      %v2542 = vadd.f32 %v2429, %v2541
      %2543 = vmatmul.f32.gmra.mxu0 %v1903
      %v2544 = vpop.f32.mrf.mxu0
      %v2545 = vadd.f32 %v2432, %v2544
      %2546 = vmatmul.f32.gmra.mxu0 %v1911
      %v2547 = vpop.f32.mrf.mxu0
      %v2548 = vadd.f32 %v2435, %v2547
      %2549 = vmatmul.f32.gmra.mxu0 %v1919
      %v2550 = vpop.f32.mrf.mxu0
      %v2551 = vadd.f32 %v2438, %v2550
      %2552 = vmatmul.f32.gmra.mxu0 %v1927
      %v2553 = vpop.f32.mrf.mxu0
      %v2554 = vadd.f32 %v2441, %v2553
      %2555 = vmatmul.f32.gmra.mxu0 %v1935
      %v2556 = vpop.f32.mrf.mxu0
      %v2557 = vadd.f32 %v2444, %v2556
      %2558 = vmatmul.f32.gmra.mxu0 %v1943
      %v2559 = vpop.f32.mrf.mxu0
      %v2560 = vadd.f32 %v2447, %v2559
      %2561 = vmatmul.f32.gmra.mxu0 %v1951
      %v2562 = vpop.f32.mrf.mxu0
      %v2563 = vadd.f32 %v2450, %v2562
      %2564 = vmatmul.f32.gmra.mxu0 %v1959
      %v2565 = vpop.f32.mrf.mxu0
      %v2566 = vadd.f32 %v2453, %v2565
      %2567 = vmatmul.f32.gmra.mxu0 %v1967
      %v2568 = vpop.f32.mrf.mxu0
      %v2569 = vadd.f32 %v2456, %v2568
      %2570 = vmatmul.f32.gmra.mxu0 %v1975
      %v2571 = vpop.f32.mrf.mxu0
      %v2572 = vadd.f32 %v2459, %v2571
      %2573 = vmatmul.f32.gmra.mxu0 %v1983
      %v2574 = vpop.f32.mrf.mxu0
      %v2575 = vadd.f32 %v2462, %v2574
      %2576 = vmatmul.f32.gmra.mxu0 %v1991
      %v2577 = vpop.f32.mrf.mxu0
      %v2578 = vadd.f32 %v2465, %v2577
      %2579 = vmatmul.f32.gmra.mxu0 %v1999
      %v2580 = vpop.f32.mrf.mxu0
      %v2581 = vadd.f32 %v2468, %v2580
      %2582 = vmatmul.f32.gmra.mxu0 %v2007
      %v2583 = vpop.f32.mrf.mxu0
      %v2584 = vadd.f32 %v2471, %v2583
      %2585 = vmatmul.f32.gmra.mxu0 %v2015
      %v2586 = vpop.f32.mrf.mxu0
      %v2587 = vadd.f32 %v2474, %v2586
      %2588 = vmatmul.f32.gmra.mxu0 %v2023
      %v2589 = vpop.f32.mrf.mxu0
      %v2590 = vadd.f32 %v2477, %v2589
      %2591 = vdwg.mxu0
      %2592 = vmatpush.msra.mxu0 %v1738
      %2593 = vmatpush.msra.mxu0 %v1737
      %2594 = vmatpush.msra.mxu0 %v1736
      %2595 = vmatpush.msra.mxu0 %v1735
      %2596 = vmatpush.msra.mxu0 %v1734
      %2597 = vmatpush.msra.mxu0 %v1733
      %2598 = vmatpush.msra.mxu0 %v1732
      %2599 = vmatpush.msra.mxu0 %v1731
      %2600 = vmatpush.msra.mxu0 %v1730
      %2601 = vmatpush.msra.mxu0 %v1729
      %2602 = vmatpush.msra.mxu0 %v1728
      %2603 = vmatpush.msra.mxu0 %v1727
      %2604 = vmatpush.msra.mxu0 %v1726
      %2605 = vmatpush.msra.mxu0 %v1725
      %2606 = vmatpush.msra.mxu0 %v1724
      %2607 = vmatpush.msra.mxu0 %v1723
      %2608 = vmatmul.f32.gmra.mxu0 %v1776
      %v2609 = vpop.f32.mrf.mxu0
      %v2610 = vadd.f32 %v2497, %v2609
      %2611 = vmatmul.f32.gmra.mxu0 %v1784
      %v2612 = vpop.f32.mrf.mxu0
      %v2613 = vadd.f32 %v2500, %v2612
      %2614 = vmatmul.f32.gmra.mxu0 %v1792
      %v2615 = vpop.f32.mrf.mxu0
      %v2616 = vadd.f32 %v2503, %v2615
      %2617 = vmatmul.f32.gmra.mxu0 %v1800
      %v2618 = vpop.f32.mrf.mxu0
      %v2619 = vadd.f32 %v2506, %v2618
      %2620 = vmatmul.f32.gmra.mxu0 %v1808
      %v2621 = vpop.f32.mrf.mxu0
      %v2622 = vadd.f32 %v2509, %v2621
      %2623 = vmatmul.f32.gmra.mxu0 %v1816
      %v2624 = vpop.f32.mrf.mxu0
      %v2625 = vadd.f32 %v2512, %v2624
      %2626 = vmatmul.f32.gmra.mxu0 %v1824
      %v2627 = vpop.f32.mrf.mxu0
      %v2628 = vadd.f32 %v2515, %v2627
      %2629 = vmatmul.f32.gmra.mxu0 %v1832
      %v2630 = vpop.f32.mrf.mxu0
      %v2631 = vadd.f32 %v2518, %v2630
      %2632 = vmatmul.f32.gmra.mxu0 %v1840
      %v2633 = vpop.f32.mrf.mxu0
      %v2634 = vadd.f32 %v2521, %v2633
      %2635 = vmatmul.f32.gmra.mxu0 %v1848
      %v2636 = vpop.f32.mrf.mxu0
      %v2637 = vadd.f32 %v2524, %v2636
      %2638 = vmatmul.f32.gmra.mxu0 %v1856
      %v2639 = vpop.f32.mrf.mxu0
      %v2640 = vadd.f32 %v2527, %v2639
      %2641 = vmatmul.f32.gmra.mxu0 %v1864
      %v2642 = vpop.f32.mrf.mxu0
      %v2643 = vadd.f32 %v2530, %v2642
      %2644 = vmatmul.f32.gmra.mxu0 %v1872
      %v2645 = vpop.f32.mrf.mxu0
      %v2646 = vadd.f32 %v2533, %v2645
      %2647 = vmatmul.f32.gmra.mxu0 %v1880
      %v2648 = vpop.f32.mrf.mxu0
      %v2649 = vadd.f32 %v2536, %v2648
      %2650 = vmatmul.f32.gmra.mxu0 %v1888
      %v2651 = vpop.f32.mrf.mxu0
      %v2652 = vadd.f32 %v2539, %v2651
      %2653 = vmatmul.f32.gmra.mxu0 %v1896
      %v2654 = vpop.f32.mrf.mxu0
      %v2655 = vadd.f32 %v2542, %v2654
      %2656 = vmatmul.f32.gmra.mxu0 %v1904
      %v2657 = vpop.f32.mrf.mxu0
      %v2658 = vadd.f32 %v2545, %v2657
      %2659 = vmatmul.f32.gmra.mxu0 %v1912
      %v2660 = vpop.f32.mrf.mxu0
      %v2661 = vadd.f32 %v2548, %v2660
      %2662 = vmatmul.f32.gmra.mxu0 %v1920
      %v2663 = vpop.f32.mrf.mxu0
      %v2664 = vadd.f32 %v2551, %v2663
      %2665 = vmatmul.f32.gmra.mxu0 %v1928
      %v2666 = vpop.f32.mrf.mxu0
      %v2667 = vadd.f32 %v2554, %v2666
      %2668 = vmatmul.f32.gmra.mxu0 %v1936
      %v2669 = vpop.f32.mrf.mxu0
      %v2670 = vadd.f32 %v2557, %v2669
      %2671 = vmatmul.f32.gmra.mxu0 %v1944
      %v2672 = vpop.f32.mrf.mxu0
      %v2673 = vadd.f32 %v2560, %v2672
      %2674 = vmatmul.f32.gmra.mxu0 %v1952
      %v2675 = vpop.f32.mrf.mxu0
      %v2676 = vadd.f32 %v2563, %v2675
      %2677 = vmatmul.f32.gmra.mxu0 %v1960
      %v2678 = vpop.f32.mrf.mxu0
      %v2679 = vadd.f32 %v2566, %v2678
      %2680 = vmatmul.f32.gmra.mxu0 %v1968
      %v2681 = vpop.f32.mrf.mxu0
      %v2682 = vadd.f32 %v2569, %v2681
      %2683 = vmatmul.f32.gmra.mxu0 %v1976
      %v2684 = vpop.f32.mrf.mxu0
      %v2685 = vadd.f32 %v2572, %v2684
      %2686 = vmatmul.f32.gmra.mxu0 %v1984
      %v2687 = vpop.f32.mrf.mxu0
      %v2688 = vadd.f32 %v2575, %v2687
      %2689 = vmatmul.f32.gmra.mxu0 %v1992
      %v2690 = vpop.f32.mrf.mxu0
      %v2691 = vadd.f32 %v2578, %v2690
      %2692 = vmatmul.f32.gmra.mxu0 %v2000
      %v2693 = vpop.f32.mrf.mxu0
      %v2694 = vadd.f32 %v2581, %v2693
      %2695 = vmatmul.f32.gmra.mxu0 %v2008
      %v2696 = vpop.f32.mrf.mxu0
      %v2697 = vadd.f32 %v2584, %v2696
      %2698 = vmatmul.f32.gmra.mxu0 %v2016
      %v2699 = vpop.f32.mrf.mxu0
      %v2700 = vadd.f32 %v2587, %v2699
      %2701 = vmatmul.f32.gmra.mxu0 %v2024
      %v2702 = vpop.f32.mrf.mxu0
      %v2703 = vadd.f32 %v2590, %v2702
      %2704 = vdwg.mxu0
      %2705 = vmatpush.msra.mxu0 %v1754
      %2706 = vmatpush.msra.mxu0 %v1753
      %2707 = vmatpush.msra.mxu0 %v1752
      %2708 = vmatpush.msra.mxu0 %v1751
      %2709 = vmatpush.msra.mxu0 %v1750
      %2710 = vmatpush.msra.mxu0 %v1749
      %2711 = vmatpush.msra.mxu0 %v1748
      %2712 = vmatpush.msra.mxu0 %v1747
      %2713 = vmatpush.msra.mxu0 %v1746
      %2714 = vmatpush.msra.mxu0 %v1745
      %2715 = vmatpush.msra.mxu0 %v1744
      %2716 = vmatpush.msra.mxu0 %v1743
      %2717 = vmatpush.msra.mxu0 %v1742
      %2718 = vmatpush.msra.mxu0 %v1741
      %2719 = vmatpush.msra.mxu0 %v1740
      %2720 = vmatpush.msra.mxu0 %v1739
      %2721 = vmatmul.f32.gmra.mxu0 %v1777
      %v2722 = vpop.f32.mrf.mxu0
      %v2723 = vadd.f32 %v2610, %v2722
      %2724 = vmatmul.f32.gmra.mxu0 %v1785
      %v2725 = vpop.f32.mrf.mxu0
      %v2726 = vadd.f32 %v2613, %v2725
      %2727 = vmatmul.f32.gmra.mxu0 %v1793
      %v2728 = vpop.f32.mrf.mxu0
      %v2729 = vadd.f32 %v2616, %v2728
      %2730 = vmatmul.f32.gmra.mxu0 %v1801
      %v2731 = vpop.f32.mrf.mxu0
      %v2732 = vadd.f32 %v2619, %v2731
      %2733 = vmatmul.f32.gmra.mxu0 %v1809
      %v2734 = vpop.f32.mrf.mxu0
      %v2735 = vadd.f32 %v2622, %v2734
      %2736 = vmatmul.f32.gmra.mxu0 %v1817
      %v2737 = vpop.f32.mrf.mxu0
      %v2738 = vadd.f32 %v2625, %v2737
      %2739 = vmatmul.f32.gmra.mxu0 %v1825
      %v2740 = vpop.f32.mrf.mxu0
      %v2741 = vadd.f32 %v2628, %v2740
      %2742 = vmatmul.f32.gmra.mxu0 %v1833
      %v2743 = vpop.f32.mrf.mxu0
      %v2744 = vadd.f32 %v2631, %v2743
      %2745 = vmatmul.f32.gmra.mxu0 %v1841
      %v2746 = vpop.f32.mrf.mxu0
      %v2747 = vadd.f32 %v2634, %v2746
      %2748 = vmatmul.f32.gmra.mxu0 %v1849
      %v2749 = vpop.f32.mrf.mxu0
      %v2750 = vadd.f32 %v2637, %v2749
      %2751 = vmatmul.f32.gmra.mxu0 %v1857
      %v2752 = vpop.f32.mrf.mxu0
      %v2753 = vadd.f32 %v2640, %v2752
      %2754 = vmatmul.f32.gmra.mxu0 %v1865
      %v2755 = vpop.f32.mrf.mxu0
      %v2756 = vadd.f32 %v2643, %v2755
      %2757 = vmatmul.f32.gmra.mxu0 %v1873
      %v2758 = vpop.f32.mrf.mxu0
      %v2759 = vadd.f32 %v2646, %v2758
      %2760 = vmatmul.f32.gmra.mxu0 %v1881
      %v2761 = vpop.f32.mrf.mxu0
      %v2762 = vadd.f32 %v2649, %v2761
      %2763 = vmatmul.f32.gmra.mxu0 %v1889
      %v2764 = vpop.f32.mrf.mxu0
      %v2765 = vadd.f32 %v2652, %v2764
      %2766 = vmatmul.f32.gmra.mxu0 %v1897
      %v2767 = vpop.f32.mrf.mxu0
      %v2768 = vadd.f32 %v2655, %v2767
      %2769 = vmatmul.f32.gmra.mxu0 %v1905
      %v2770 = vpop.f32.mrf.mxu0
      %v2771 = vadd.f32 %v2658, %v2770
      %2772 = vmatmul.f32.gmra.mxu0 %v1913
      %v2773 = vpop.f32.mrf.mxu0
      %v2774 = vadd.f32 %v2661, %v2773
      %2775 = vmatmul.f32.gmra.mxu0 %v1921
      %v2776 = vpop.f32.mrf.mxu0
      %v2777 = vadd.f32 %v2664, %v2776
      %2778 = vmatmul.f32.gmra.mxu0 %v1929
      %v2779 = vpop.f32.mrf.mxu0
      %v2780 = vadd.f32 %v2667, %v2779
      %2781 = vmatmul.f32.gmra.mxu0 %v1937
      %v2782 = vpop.f32.mrf.mxu0
      %v2783 = vadd.f32 %v2670, %v2782
      %2784 = vmatmul.f32.gmra.mxu0 %v1945
      %v2785 = vpop.f32.mrf.mxu0
      %v2786 = vadd.f32 %v2673, %v2785
      %2787 = vmatmul.f32.gmra.mxu0 %v1953
      %v2788 = vpop.f32.mrf.mxu0
      %v2789 = vadd.f32 %v2676, %v2788
      %2790 = vmatmul.f32.gmra.mxu0 %v1961
      %v2791 = vpop.f32.mrf.mxu0
      %v2792 = vadd.f32 %v2679, %v2791
      %2793 = vmatmul.f32.gmra.mxu0 %v1969
      %v2794 = vpop.f32.mrf.mxu0
      %v2795 = vadd.f32 %v2682, %v2794
      %2796 = vmatmul.f32.gmra.mxu0 %v1977
      %v2797 = vpop.f32.mrf.mxu0
      %v2798 = vadd.f32 %v2685, %v2797
      %2799 = vmatmul.f32.gmra.mxu0 %v1985
      %v2800 = vpop.f32.mrf.mxu0
      %v2801 = vadd.f32 %v2688, %v2800
      %2802 = vmatmul.f32.gmra.mxu0 %v1993
      %v2803 = vpop.f32.mrf.mxu0
      %v2804 = vadd.f32 %v2691, %v2803
      %2805 = vmatmul.f32.gmra.mxu0 %v2001
      %v2806 = vpop.f32.mrf.mxu0
      %v2807 = vadd.f32 %v2694, %v2806
      %2808 = vmatmul.f32.gmra.mxu0 %v2009
      %v2809 = vpop.f32.mrf.mxu0
      %v2810 = vadd.f32 %v2697, %v2809
      %2811 = vmatmul.f32.gmra.mxu0 %v2017
      %v2812 = vpop.f32.mrf.mxu0
      %v2813 = vadd.f32 %v2700, %v2812
      %2814 = vmatmul.f32.gmra.mxu0 %v2025
      %v2815 = vpop.f32.mrf.mxu0
      %v2816 = vadd.f32 %v2703, %v2815
      %2817 = vdwg.mxu0
      %2818 = vmatpush.msra.mxu0 %v1770
      %2819 = vmatpush.msra.mxu0 %v1769
      %2820 = vmatpush.msra.mxu0 %v1768
      %2821 = vmatpush.msra.mxu0 %v1767
      %2822 = vmatpush.msra.mxu0 %v1766
      %2823 = vmatpush.msra.mxu0 %v1765
      %2824 = vmatpush.msra.mxu0 %v1764
      %2825 = vmatpush.msra.mxu0 %v1763
      %2826 = vmatpush.msra.mxu0 %v1762
      %2827 = vmatpush.msra.mxu0 %v1761
      %2828 = vmatpush.msra.mxu0 %v1760
      %2829 = vmatpush.msra.mxu0 %v1759
      %2830 = vmatpush.msra.mxu0 %v1758
      %2831 = vmatpush.msra.mxu0 %v1757
      %2832 = vmatpush.msra.mxu0 %v1756
      %2833 = vmatpush.msra.mxu0 %v1755
      %2834 = vmatmul.f32.gmra.mxu0 %v1778
      %v2835 = vpop.f32.mrf.mxu0
      %v2836 = vadd.f32 %v2723, %v2835
      %2837 = vmatmul.f32.gmra.mxu0 %v1786
      %v2838 = vpop.f32.mrf.mxu0
      %v2839 = vadd.f32 %v2726, %v2838
      %2840 = vmatmul.f32.gmra.mxu0 %v1794
      %v2841 = vpop.f32.mrf.mxu0
      %v2842 = vadd.f32 %v2729, %v2841
      %2843 = vmatmul.f32.gmra.mxu0 %v1802
      %v2844 = vpop.f32.mrf.mxu0
      %v2845 = vadd.f32 %v2732, %v2844
      %2846 = vmatmul.f32.gmra.mxu0 %v1810
      %v2847 = vpop.f32.mrf.mxu0
      %v2848 = vadd.f32 %v2735, %v2847
      %2849 = vmatmul.f32.gmra.mxu0 %v1818
      %v2850 = vpop.f32.mrf.mxu0
      %v2851 = vadd.f32 %v2738, %v2850
      %2852 = vmatmul.f32.gmra.mxu0 %v1826
      %v2853 = vpop.f32.mrf.mxu0
      %v2854 = vadd.f32 %v2741, %v2853
      %2855 = vmatmul.f32.gmra.mxu0 %v1834
      %v2856 = vpop.f32.mrf.mxu0
      %v2857 = vadd.f32 %v2744, %v2856
      %2858 = vmatmul.f32.gmra.mxu0 %v1842
      %v2859 = vpop.f32.mrf.mxu0
      %v2860 = vadd.f32 %v2747, %v2859
      %2861 = vmatmul.f32.gmra.mxu0 %v1850
      %v2862 = vpop.f32.mrf.mxu0
      %v2863 = vadd.f32 %v2750, %v2862
      %2864 = vmatmul.f32.gmra.mxu0 %v1858
      %v2865 = vpop.f32.mrf.mxu0
      %v2866 = vadd.f32 %v2753, %v2865
      %2867 = vmatmul.f32.gmra.mxu0 %v1866
      %v2868 = vpop.f32.mrf.mxu0
      %v2869 = vadd.f32 %v2756, %v2868
      %2870 = vmatmul.f32.gmra.mxu0 %v1874
      %v2871 = vpop.f32.mrf.mxu0
      %v2872 = vadd.f32 %v2759, %v2871
      %2873 = vmatmul.f32.gmra.mxu0 %v1882
      %v2874 = vpop.f32.mrf.mxu0
      %v2875 = vadd.f32 %v2762, %v2874
      %2876 = vmatmul.f32.gmra.mxu0 %v1890
      %v2877 = vpop.f32.mrf.mxu0
      %v2878 = vadd.f32 %v2765, %v2877
      %2879 = vmatmul.f32.gmra.mxu0 %v1898
      %v2880 = vpop.f32.mrf.mxu0
      %v2881 = vadd.f32 %v2768, %v2880
      %2882 = vmatmul.f32.gmra.mxu0 %v1906
      %v2883 = vpop.f32.mrf.mxu0
      %v2884 = vadd.f32 %v2771, %v2883
      %2885 = vmatmul.f32.gmra.mxu0 %v1914
      %v2886 = vpop.f32.mrf.mxu0
      %v2887 = vadd.f32 %v2774, %v2886
      %2888 = vmatmul.f32.gmra.mxu0 %v1922
      %v2889 = vpop.f32.mrf.mxu0
      %v2890 = vadd.f32 %v2777, %v2889
      %2891 = vmatmul.f32.gmra.mxu0 %v1930
      %v2892 = vpop.f32.mrf.mxu0
      %v2893 = vadd.f32 %v2780, %v2892
      %2894 = vmatmul.f32.gmra.mxu0 %v1938
      %v2895 = vpop.f32.mrf.mxu0
      %v2896 = vadd.f32 %v2783, %v2895
      %2897 = vmatmul.f32.gmra.mxu0 %v1946
      %v2898 = vpop.f32.mrf.mxu0
      %v2899 = vadd.f32 %v2786, %v2898
      %2900 = vmatmul.f32.gmra.mxu0 %v1954
      %v2901 = vpop.f32.mrf.mxu0
      %v2902 = vadd.f32 %v2789, %v2901
      %2903 = vmatmul.f32.gmra.mxu0 %v1962
      %v2904 = vpop.f32.mrf.mxu0
      %v2905 = vadd.f32 %v2792, %v2904
      %2906 = vmatmul.f32.gmra.mxu0 %v1970
      %v2907 = vpop.f32.mrf.mxu0
      %v2908 = vadd.f32 %v2795, %v2907
      %2909 = vmatmul.f32.gmra.mxu0 %v1978
      %v2910 = vpop.f32.mrf.mxu0
      %v2911 = vadd.f32 %v2798, %v2910
      %2912 = vmatmul.f32.gmra.mxu0 %v1986
      %v2913 = vpop.f32.mrf.mxu0
      %v2914 = vadd.f32 %v2801, %v2913
      %2915 = vmatmul.f32.gmra.mxu0 %v1994
      %v2916 = vpop.f32.mrf.mxu0
      %v2917 = vadd.f32 %v2804, %v2916
      %2918 = vmatmul.f32.gmra.mxu0 %v2002
      %v2919 = vpop.f32.mrf.mxu0
      %v2920 = vadd.f32 %v2807, %v2919
      %2921 = vmatmul.f32.gmra.mxu0 %v2010
      %v2922 = vpop.f32.mrf.mxu0
      %v2923 = vadd.f32 %v2810, %v2922
      %2924 = vmatmul.f32.gmra.mxu0 %v2018
      %v2925 = vpop.f32.mrf.mxu0
      %v2926 = vadd.f32 %v2813, %v2925
      %2927 = vmatmul.f32.gmra.mxu0 %v2026
      %v2928 = vpop.f32.mrf.mxu0
      %v2929 = vadd.f32 %v2816, %v2928
      %2930 = vdwg.mxu0
      %2931 = vst [vmem:[%s224] sm:$0xff] %v2836
      %2932 = vst [vmem:[%s224 + $0x8] sm:$0xff] %v2839
      %2933 = vst [vmem:[%s224 + $0x10] sm:$0xff] %v2842
      %2934 = vst [vmem:[%s224 + $0x18] sm:$0xff] %v2845
      %2935 = vst [vmem:[%s224 + $0x20] sm:$0xff] %v2848
      %2936 = vst [vmem:[%s224 + $0x28] sm:$0xff] %v2851
      %2937 = vst [vmem:[%s224 + $0x30] sm:$0xff] %v2854
      %2938 = vst [vmem:[%s224 + $0x38] sm:$0xff] %v2857
      %2939 = vst [vmem:[%s224 + $0x40] sm:$0xff] %v2860
      %2940 = vst [vmem:[%s224 + $0x48] sm:$0xff] %v2863
      %2941 = vst [vmem:[%s224 + $0x50] sm:$0xff] %v2866
      %2942 = vst [vmem:[%s224 + $0x58] sm:$0xff] %v2869
      %2943 = vst [vmem:[%s224 + $0x60] sm:$0xff] %v2872
      %2944 = vst [vmem:[%s224 + $0x68] sm:$0xff] %v2875
      %2945 = vst [vmem:[%s224 + $0x70] sm:$0xff] %v2878
      %2946 = vst [vmem:[%s224 + $0x78] sm:$0xff] %v2881
      %2947 = vst [vmem:[%s224 + $0x80] sm:$0xff] %v2884
      %2948 = vst [vmem:[%s224 + $0x88] sm:$0xff] %v2887
      %2949 = vst [vmem:[%s224 + $0x90] sm:$0xff] %v2890
      %2950 = vst [vmem:[%s224 + $0x98] sm:$0xff] %v2893
      %2951 = vst [vmem:[%s224 + $0xa0] sm:$0xff] %v2896
      %2952 = vst [vmem:[%s224 + $0xa8] sm:$0xff] %v2899
      %2953 = vst [vmem:[%s224 + $0xb0] sm:$0xff] %v2902
      %2954 = vst [vmem:[%s224 + $0xb8] sm:$0xff] %v2905
      %2955 = vst [vmem:[%s224 + $0xc0] sm:$0xff] %v2908
      %2956 = vst [vmem:[%s224 + $0xc8] sm:$0xff] %v2911
      %2957 = vst [vmem:[%s224 + $0xd0] sm:$0xff] %v2914
      %2958 = vst [vmem:[%s224 + $0xd8] sm:$0xff] %v2917
      %2959 = vst [vmem:[%s224 + $0xe0] sm:$0xff] %v2920
      %2960 = vst [vmem:[%s224 + $0xe8] sm:$0xff] %v2923
      %2961 = vst [vmem:[%s224 + $0xf0] sm:$0xff] %v2926
      %2962 = vst [vmem:[%s224 + $0xf8] sm:$0xff] %v2929
      %p2963 = scmp.lt.s32.totalorder %s16, 1
      %s2964 = scalar_select %p2963, %s16, 1
      %s2965 = smul.addr %s2964, 32
      %s2966 = smul.addr %s2965, 8
      %s2967 = scalar_lea.vmem %s5, %s2966
      // Predicated region
      $region41: #{resnet_forward.7} parent=39 // pred_check
        %p2968 = pneg %p144
      $region42: #{resnet_forward.7} parent=39 // pred_check_branch
        %2970 = sbr.rel (%p2968) target = $region44
      $region43: #{resnet_forward.7} parent=39 // pred_region
        _
      $region44: #{resnet_forward.7} parent=39 // pred_fallthru
        _
    $region40: #{resnet_forward.7} parent=5 // pred_fallthru
      _
    %p2971 = scmp.le.s32.totalorder 2, %s11
    // Predicated region
    $region45: #{resnet_forward.7} parent=5 // pred_check
      %p2972 = pneg %p2971
    $region46: #{resnet_forward.7} parent=5 // pred_check_branch
      %2974 = sbr.rel (%p2972) target = $region48
    $region47: #{resnet_forward.7} parent=5 // pred_region
      %s2975 = ssub.s32 %s11, 2
      // Predicated region
      $region49: #{resnet_forward.7} parent=47 // pred_check
        %p2976 = pneg %p150
      $region50: #{resnet_forward.7} parent=47 // pred_check_branch
        %2978 = sbr.rel (%p2976) target = $region52
      $region51: #{resnet_forward.7} parent=47 // pred_region
        %p2979 = scmp.lt.s32.totalorder %s17, 1
        %s2980 = scalar_select %p2979, %s17, 1
        %s2981 = smul.addr %s2980, 32
        %s2982 = smul.addr %s2981, 8
        %s2983 = scalar_lea.vmem %s5, %s2982
      $region52: #{resnet_forward.7} parent=47 // pred_fallthru
        _
    $region48: #{resnet_forward.7} parent=5 // pred_fallthru
      _
  $region6: #{resnet_forward.7} parent=0 // loop_footer
    %s15 = sadd.s32 1, %s11
  $region7: #{resnet_forward.7} parent=0 // loop_footer_branch
    %10 = sbr.rel target = $region3
  $region8: #{resnet_forward.7} parent=0 // loop_exit
    _

</llo_original>
